<compile_context>
chip_gen: v7x
topology: tpu7x:2x2x1
jax: 0.10.0
libtpu: 0.0.40
codegen_flags: <defaults>
</compile_context>

<pallas_src>
import jax
import jax.numpy as jnp
from jax.experimental import pallas as pl
from jax.experimental.pallas import tpu as pltpu

_C = 64  # real per-image channel width inside the network


def _upnet_fused_kernel(x_ref, w_ref, scale_ref, bias_ref, o_ref, buf, shift):
    """Single invocation covering all layers.

    x_ref:     (H, W, NC)       bf16 input, images packed along lanes (NC=N*64)
    w_ref:     (L*3, 3*NC, NC)  bf16 per-(layer,dy) weights, rows = [dx,image,cin],
                                block-diagonal over images
    scale_ref: (L, 1, NC)       f32 folded BatchRenorm scale (tiled per image)
    bias_ref:  (L, 1, NC)       f32 folded conv-bias + BatchRenorm shift
    o_ref:     (H, W, NC)       f32 last-layer output (lane n*64 = channel 0)
    buf:       (H+2, W, NC)     bf16 H-padded activation, overwritten per layer
    shift:     (H+2, W, 3*NC)   bf16 dx-folded snapshot of the layer's input
    """
    H, W, NC = x_ref.shape
    M = H * W
    K = 3 * NC
    n_layers = scale_ref.shape[0]

    # ---- one-time init: zero the halos (H halo rows of `buf`, dx halo columns
    #      of `shift`) and drop the packed input into the interior rows.
    buf[...] = jnp.zeros(buf.shape, buf.dtype)
    shift[...] = jnp.zeros(shift.shape, shift.dtype)
    buf[pl.ds(1, H)] = x_ref[...]

    def build_shift():
        # dx = 1 (center): lane-aligned full copy into lanes [NC, 2*NC).
        shift[:, :, pl.ds(NC, NC)] = buf[...]
        # dx = 0 (left neighbour): column w reads input column w-1; col 0 stays 0.
        shift[:, pl.ds(1, W - 1), pl.ds(0, NC)] = buf[:, pl.ds(0, W - 1), :]
        # dx = 2 (right neighbour): column w reads input column w+1; col W-1 stays 0.
        shift[:, pl.ds(0, W - 1), pl.ds(2 * NC, NC)] = buf[:, pl.ds(1, W - 1), :]

    def conv(layer):
        # 3x3 conv as 3 bf16 MXU matmuls (one per dy), K = 3*NC, M = H*W,
        # with f32 accumulation; dy slices of `shift` are free leading-dim views.
        acc = jnp.zeros((M, NC), jnp.float32)
        for dy in range(3):
            lhs = shift[pl.ds(dy, H)].reshape(M, K)
            acc = acc + jnp.dot(lhs, w_ref[layer * 3 + dy],
                                preferred_element_type=jnp.float32)
        return acc * scale_ref[layer] + bias_ref[layer]  # f32 epilogue

    def hidden_layer(layer, carry):
        build_shift()
        y = conv(layer)
        buf[pl.ds(1, H)] = jnp.maximum(y, 0.0).reshape(H, W, NC).astype(buf.dtype)
        return carry

    # Layers 0 .. L-2: conv + folded BatchRenorm + ReLU, activation stays in VMEM.
    jax.lax.fori_loop(0, n_layers - 1, hidden_layer, 0)

    # Last layer: conv + bias only (no BatchRenorm, no ReLU), lane-dense f32 store.
    build_shift()
    o_ref[...] = conv(n_layers - 1).reshape(H, W, NC).astype(o_ref.dtype)


def upnet_forward(x_nchw, packed):
    """Full UpNet forward.  Input/output NCHW (PyTorch convention)."""
    w_all, scale_all, bias_all = packed
    NC = scale_all.shape[-1]
    N, cin, H, W = x_nchw.shape
    C = NC // N

    # NCHW -> NHWC, zero-pad channels to C, fold the N images into the lane dim.
    x = jnp.transpose(x_nchw, (0, 2, 3, 1)).astype(jnp.float32)
    x = jnp.pad(x, ((0, 0), (0, 0), (0, 0), (0, C - cin)))
    x = jnp.transpose(x, (1, 2, 0, 3)).reshape(H, W, NC).astype(jnp.bfloat16)

    out = pl.pallas_call(
        _upnet_fused_kernel,
        out_shape=jax.ShapeDtypeStruct((H, W, NC), jnp.float32),
        in_specs=[
            pl.BlockSpec(memory_space=pltpu.MemorySpace.VMEM),  # packed input
            pl.BlockSpec(memory_space=pltpu.MemorySpace.VMEM),  # all-layer weights
            pl.BlockSpec(memory_space=pltpu.MemorySpace.VMEM),  # folded scales
            pl.BlockSpec(memory_space=pltpu.MemorySpace.VMEM),  # folded biases
        ],
        out_specs=pl.BlockSpec(memory_space=pltpu.MemorySpace.VMEM),
        scratch_shapes=[
            pltpu.VMEM((H + 2, W, NC), jnp.bfloat16),       # activation (H-padded)
            pltpu.VMEM((H + 2, W, 3 * NC), jnp.bfloat16),   # dx-folded snapshot
        ],
    )(x, w_all, scale_all, bias_all)

    # Channel 0 of image n lives at lane n*C.
    out = out.reshape(H, W, N, C)[:, :, :, 0]          # (H, W, N)
    return jnp.transpose(out, (2, 0, 1))[:, None]      # (N, 1, H, W)


def init_params(key):
    """Deterministic parameters matching UpNet.__init__ shapes.

    Conv weights are (3, 3, Cin, Cout) (= PyTorch (Cout,Cin,3,3) in HWIO).
    BatchRenorm (inference) + conv bias are pre-folded into scale/bias.
    """
    layer_dims = [(3, 64)] + [(64, 64)] * 15 + [(64, 1)]
    params = []
    for i, (cin, cout) in enumerate(layer_dims):
        key, kw, kb, kg, kbeta, km, kv = jax.random.split(key, 7)
        w = 0.05 * jax.random.normal(kw, (3, 3, cin, cout), jnp.float32)
        b = 0.01 * jax.random.normal(kb, (cout,), jnp.float32)
        has_bn = i < 16  # last conv has no BatchRenorm / ReLU
        if has_bn:
            gamma = 1.0 + 0.1 * jax.random.normal(kg, (cout,), jnp.float32)
            beta = 0.1 * jax.random.normal(kbeta, (cout,), jnp.float32)
            r_mean = 0.1 * jax.random.normal(km, (cout,), jnp.float32)
            r_var = 1.0 + 0.1 * jax.random.uniform(kv, (cout,), jnp.float32)
            eps = 1e-5
            scale = gamma * jax.lax.rsqrt(r_var + eps)
            bias = beta + (b - r_mean) * scale
        else:
            scale = jnp.ones((cout,), jnp.float32)
            bias = b
        params.append(dict(w=w, scale=scale, bias=bias))
    return params


def pack_params(params, n_images, channels=_C):
    """Pack all layers for the fused kernel.

    Weights become (L*3, 3*NC, NC): per (layer, dy) a [dx, image, cin] x
    [image, cout] matrix, block-diagonal over the lane-packed images (both
    images share the same conv weights but occupy disjoint lane ranges).
    """
    C = channels
    NC = n_images * C
    w_list, s_list, b_list = [], [], []
    for p in params:
        w = p["w"]                                       # (3, 3, cin, cout)
        cin, cout = w.shape[2], w.shape[3]
        w = jnp.pad(w, ((0, 0), (0, 0), (0, C - cin), (0, C - cout)))  # (3,3,C,C)
        rhs = jnp.zeros((3, 3 * NC, NC), jnp.float32)
        for dy in range(3):
            for dx in range(3):
                for n in range(n_images):
                    r0 = dx * NC + n * C
                    c0 = n * C
                    rhs = rhs.at[dy, r0:r0 + C, c0:c0 + C].set(w[dy, dx])
        w_list.append(rhs)
        s = jnp.pad(p["scale"], (0, C - cout), constant_values=1.0)
        b = jnp.pad(p["bias"], (0, C - cout))
        s_list.append(jnp.tile(s, n_images))
        b_list.append(jnp.tile(b, n_images))
    L = len(params)
    w_all = jnp.stack(w_list).reshape(L * 3, 3 * NC, NC).astype(jnp.bfloat16)
    scale_all = jnp.stack(s_list)[:, None, :].astype(jnp.float32)   # (L, 1, NC)
    bias_all = jnp.stack(b_list)[:, None, :].astype(jnp.float32)    # (L, 1, NC)
    return w_all, scale_all, bias_all


if __name__ == "__main__":
    key = jax.random.PRNGKey(0)
    k_x, k_p = jax.random.split(key)
    x = jax.random.normal(k_x, (2, 3, 16, 16), jnp.float32)  # NCHW like PyTorch
    params = init_params(k_p)
    packed = pack_params(params, n_images=x.shape[0])

    fwd = jax.jit(lambda inp: upnet_forward(inp, packed))
    out = fwd(x)
    jax.block_until_ready(out)

    assert out.shape == (2, 1, 16, 16), out.shape
    assert bool(jnp.all(jnp.isfinite(out)))
    print("KERNEL_OK")
</pallas_src>

<mosaic_0001>
module attributes {stable_mosaic.version = 11 : i64} {
  func.func @_upnet_fused_kernel(%arg0: memref<16x16x128xbf16, #tpu.memory_space<vmem>>, %arg1: memref<51x384x128xbf16, #tpu.memory_space<vmem>>, %arg2: memref<17x1x128xf32, #tpu.memory_space<vmem>>, %arg3: memref<17x1x128xf32, #tpu.memory_space<vmem>>, %arg4: memref<16x16x128xf32, #tpu.memory_space<vmem>>, %arg5: memref<18x16x128xbf16, #tpu.memory_space<vmem>>, %arg6: memref<18x16x384xbf16, #tpu.memory_space<vmem>>) attributes {dimension_semantics = [], scalar_prefetch = 0 : i64, scratch_operands = 2 : i64, tpu.core_type = #tpu.core_type<tc>} {
    %cst = arith.constant 0.000000e+00 : bf16
    %0 = vector.broadcast %cst : bf16 to vector<18x16x128xbf16>
    %c0 = arith.constant 0 : index
    %c0_0 = arith.constant 0 : index
    %c0_1 = arith.constant 0 : index
    %1 = vector.load %arg5[%c0, %c0_0, %c0_1] : memref<18x16x128xbf16, #tpu.memory_space<vmem>>, vector<18x16x128xbf16>
    tpu.vector_store %arg5[%c0, %c0_0, %c0_1], %0 {strides = array<i32>} : memref<18x16x128xbf16, #tpu.memory_space<vmem>>, vector<18x16x128xbf16>,
    %cst_2 = arith.constant 0.000000e+00 : bf16
    %2 = vector.broadcast %cst_2 : bf16 to vector<18x16x384xbf16>
    %c0_3 = arith.constant 0 : index
    %c0_4 = arith.constant 0 : index
    %c0_5 = arith.constant 0 : index
    %3 = vector.load %arg6[%c0_3, %c0_4, %c0_5] : memref<18x16x384xbf16, #tpu.memory_space<vmem>>, vector<18x16x384xbf16>
    tpu.vector_store %arg6[%c0_3, %c0_4, %c0_5], %2 {strides = array<i32>} : memref<18x16x384xbf16, #tpu.memory_space<vmem>>, vector<18x16x384xbf16>,
    %c0_6 = arith.constant 0 : index
    %c0_7 = arith.constant 0 : index
    %c0_8 = arith.constant 0 : index
    %4 = vector.load %arg0[%c0_6, %c0_7, %c0_8] : memref<16x16x128xbf16, #tpu.memory_space<vmem>>, vector<16x16x128xbf16>
    %c1 = arith.constant 1 : index
    %c0_9 = arith.constant 0 : index
    %c0_10 = arith.constant 0 : index
    %5 = vector.load %arg5[%c1, %c0_9, %c0_10] : memref<18x16x128xbf16, #tpu.memory_space<vmem>>, vector<16x16x128xbf16>
    tpu.vector_store %arg5[%c1, %c0_9, %c0_10], %4 {strides = array<i32>} : memref<18x16x128xbf16, #tpu.memory_space<vmem>>, vector<16x16x128xbf16>,
    %c0_i32 = arith.constant 0 : i32
    %c16_i32 = arith.constant 16 : i32
    %6 = arith.addi %c0_i32, %c16_i32 : i32
    %c1_i32 = arith.constant 1 : i32
    scf.for %arg7 = %c0_i32 to %6 step %c1_i32  : i32 {
      %c0_54 = arith.constant 0 : index
      %c0_55 = arith.constant 0 : index
      %c0_56 = arith.constant 0 : index
      %42 = vector.load %arg5[%c0_54, %c0_55, %c0_56] : memref<18x16x128xbf16, #tpu.memory_space<vmem>>, vector<18x16x128xbf16>
      %c0_57 = arith.constant 0 : index
      %c0_58 = arith.constant 0 : index
      %c128_59 = arith.constant 128 : index
      %43 = vector.load %arg6[%c0_57, %c0_58, %c128_59] : memref<18x16x384xbf16, #tpu.memory_space<vmem>>, vector<18x16x128xbf16>
      tpu.vector_store %arg6[%c0_57, %c0_58, %c128_59], %42 {strides = array<i32>} : memref<18x16x384xbf16, #tpu.memory_space<vmem>>, vector<18x16x128xbf16>,
      %c0_60 = arith.constant 0 : index
      %c0_61 = arith.constant 0 : index
      %c0_62 = arith.constant 0 : index
      %44 = vector.load %arg5[%c0_60, %c0_61, %c0_62] : memref<18x16x128xbf16, #tpu.memory_space<vmem>>, vector<18x15x128xbf16>
      %c0_63 = arith.constant 0 : index
      %c1_64 = arith.constant 1 : index
      %c0_65 = arith.constant 0 : index
      %45 = vector.load %arg6[%c0_63, %c1_64, %c0_65] : memref<18x16x384xbf16, #tpu.memory_space<vmem>>, vector<18x15x128xbf16>
      tpu.vector_store %arg6[%c0_63, %c1_64, %c0_65], %44 {strides = array<i32>} : memref<18x16x384xbf16, #tpu.memory_space<vmem>>, vector<18x15x128xbf16>,
      %c0_66 = arith.constant 0 : index
      %c1_67 = arith.constant 1 : index
      %c0_68 = arith.constant 0 : index
      %46 = vector.load %arg5[%c0_66, %c1_67, %c0_68] : memref<18x16x128xbf16, #tpu.memory_space<vmem>>, vector<18x15x128xbf16>
      %c0_69 = arith.constant 0 : index
      %c0_70 = arith.constant 0 : index
      %c256_71 = arith.constant 256 : index
      %47 = vector.load %arg6[%c0_69, %c0_70, %c256_71] : memref<18x16x384xbf16, #tpu.memory_space<vmem>>, vector<18x15x128xbf16>
      tpu.vector_store %arg6[%c0_69, %c0_70, %c256_71], %46 {strides = array<i32>} : memref<18x16x384xbf16, #tpu.memory_space<vmem>>, vector<18x15x128xbf16>,
      %cst_72 = arith.constant 0.000000e+00 : f32
      %48 = vector.broadcast %cst_72 : f32 to vector<256x128xf32>
      %c0_73 = arith.constant 0 : index
      %c0_74 = arith.constant 0 : index
      %c0_75 = arith.constant 0 : index
      %49 = vector.load %arg6[%c0_73, %c0_74, %c0_75] : memref<18x16x384xbf16, #tpu.memory_space<vmem>>, vector<16x16x384xbf16>
      %50 = vector.shape_cast %49 : vector<16x16x384xbf16> to vector<256x384xbf16>
      %c3_i32 = arith.constant 3 : i32
      %51 = arith.muli %arg7, %c3_i32 : i32
      %c0_i32_76 = arith.constant 0 : i32
      %52 = arith.addi %51, %c0_i32_76 : i32
      %53 = arith.index_cast %52 : i32 to index
      %c0_77 = arith.constant 0 : index
      %c0_78 = arith.constant 0 : index
      %54 = vector.load %arg1[%53, %c0_77, %c0_78] : memref<51x384x128xbf16, #tpu.memory_space<vmem>>, vector<1x384x128xbf16>
      %55 = vector.shape_cast %54 : vector<1x384x128xbf16> to vector<384x128xbf16>
      %cst_79 = arith.constant dense<0.000000e+00> : vector<256x128xf32>
      %56 = tpu.matmul %50, %55, %cst_79 {dimension_numbers = #tpu.dot_dimension_numbers<[1], [0], [0], [1], [0, 0, 1, 1], [], []>} : vector<256x384xbf16>, vector<384x128xbf16>, vector<256x128xf32> -> vector<256x128xf32>
      %57 = arith.addf %48, %56 : vector<256x128xf32>
      %c1_80 = arith.constant 1 : index
      %c0_81 = arith.constant 0 : index
      %c0_82 = arith.constant 0 : index
      %58 = vector.load %arg6[%c1_80, %c0_81, %c0_82] : memref<18x16x384xbf16, #tpu.memory_space<vmem>>, vector<16x16x384xbf16>
      %59 = vector.shape_cast %58 : vector<16x16x384xbf16> to vector<256x384xbf16>
      %c3_i32_83 = arith.constant 3 : i32
      %60 = arith.muli %arg7, %c3_i32_83 : i32
      %c1_i32_84 = arith.constant 1 : i32
      %61 = arith.addi %60, %c1_i32_84 : i32
      %62 = arith.index_cast %61 : i32 to index
      %c0_85 = arith.constant 0 : index
      %c0_86 = arith.constant 0 : index
      %63 = vector.load %arg1[%62, %c0_85, %c0_86] : memref<51x384x128xbf16, #tpu.memory_space<vmem>>, vector<1x384x128xbf16>
      %64 = vector.shape_cast %63 : vector<1x384x128xbf16> to vector<384x128xbf16>
      %cst_87 = arith.constant dense<0.000000e+00> : vector<256x128xf32>
      %65 = tpu.matmul %59, %64, %cst_87 {dimension_numbers = #tpu.dot_dimension_numbers<[1], [0], [0], [1], [0, 0, 1, 1], [], []>} : vector<256x384xbf16>, vector<384x128xbf16>, vector<256x128xf32> -> vector<256x128xf32>
      %66 = arith.addf %57, %65 : vector<256x128xf32>
      %c2_88 = arith.constant 2 : index
      %c0_89 = arith.constant 0 : index
      %c0_90 = arith.constant 0 : index
      %67 = vector.load %arg6[%c2_88, %c0_89, %c0_90] : memref<18x16x384xbf16, #tpu.memory_space<vmem>>, vector<16x16x384xbf16>
      %68 = vector.shape_cast %67 : vector<16x16x384xbf16> to vector<256x384xbf16>
      %c3_i32_91 = arith.constant 3 : i32
      %69 = arith.muli %arg7, %c3_i32_91 : i32
      %c2_i32 = arith.constant 2 : i32
      %70 = arith.addi %69, %c2_i32 : i32
      %71 = arith.index_cast %70 : i32 to index
      %c0_92 = arith.constant 0 : index
      %c0_93 = arith.constant 0 : index
      %72 = vector.load %arg1[%71, %c0_92, %c0_93] : memref<51x384x128xbf16, #tpu.memory_space<vmem>>, vector<1x384x128xbf16>
      %73 = vector.shape_cast %72 : vector<1x384x128xbf16> to vector<384x128xbf16>
      %cst_94 = arith.constant dense<0.000000e+00> : vector<256x128xf32>
      %74 = tpu.matmul %68, %73, %cst_94 {dimension_numbers = #tpu.dot_dimension_numbers<[1], [0], [0], [1], [0, 0, 1, 1], [], []>} : vector<256x384xbf16>, vector<384x128xbf16>, vector<256x128xf32> -> vector<256x128xf32>
      %75 = arith.addf %66, %74 : vector<256x128xf32>
      %76 = arith.index_cast %arg7 : i32 to index
      %c0_95 = arith.constant 0 : index
      %c0_96 = arith.constant 0 : index
      %77 = vector.load %arg2[%76, %c0_95, %c0_96] : memref<17x1x128xf32, #tpu.memory_space<vmem>>, vector<1x1x128xf32>
      %78 = vector.shape_cast %77 : vector<1x1x128xf32> to vector<1x128xf32>
      %79 = vector.broadcast %78 : vector<1x128xf32> to vector<256x128xf32>
      %80 = arith.mulf %75, %79 : vector<256x128xf32>
      %81 = arith.index_cast %arg7 : i32 to index
      %c0_97 = arith.constant 0 : index
      %c0_98 = arith.constant 0 : index
      %82 = vector.load %arg3[%81, %c0_97, %c0_98] : memref<17x1x128xf32, #tpu.memory_space<vmem>>, vector<1x1x128xf32>
      %83 = vector.shape_cast %82 : vector<1x1x128xf32> to vector<1x128xf32>
      %84 = vector.broadcast %83 : vector<1x128xf32> to vector<256x128xf32>
      %85 = arith.addf %80, %84 : vector<256x128xf32>
      %cst_99 = arith.constant 0.000000e+00 : f32
      %86 = vector.broadcast %cst_99 : f32 to vector<256x128xf32>
      %87 = arith.maximumf %85, %86 : vector<256x128xf32>
      %88 = vector.shape_cast %87 : vector<256x128xf32> to vector<16x16x128xf32>
      %89 = arith.truncf %88 : vector<16x16x128xf32> to vector<16x16x128xbf16>
      %c1_100 = arith.constant 1 : index
      %c0_101 = arith.constant 0 : index
      %c0_102 = arith.constant 0 : index
      %90 = vector.load %arg5[%c1_100, %c0_101, %c0_102] : memref<18x16x128xbf16, #tpu.memory_space<vmem>>, vector<16x16x128xbf16>
      tpu.vector_store %arg5[%c1_100, %c0_101, %c0_102], %89 {strides = array<i32>} : memref<18x16x128xbf16, #tpu.memory_space<vmem>>, vector<16x16x128xbf16>,
    }
    %c16_i32_11 = arith.constant 16 : i32
    %c0_12 = arith.constant 0 : index
    %c0_13 = arith.constant 0 : index
    %c0_14 = arith.constant 0 : index
    %7 = vector.load %arg5[%c0_12, %c0_13, %c0_14] : memref<18x16x128xbf16, #tpu.memory_space<vmem>>, vector<18x16x128xbf16>
    %c0_15 = arith.constant 0 : index
    %c0_16 = arith.constant 0 : index
    %c128 = arith.constant 128 : index
    %8 = vector.load %arg6[%c0_15, %c0_16, %c128] : memref<18x16x384xbf16, #tpu.memory_space<vmem>>, vector<18x16x128xbf16>
    tpu.vector_store %arg6[%c0_15, %c0_16, %c128], %7 {strides = array<i32>} : memref<18x16x384xbf16, #tpu.memory_space<vmem>>, vector<18x16x128xbf16>,
    %c0_17 = arith.constant 0 : index
    %c0_18 = arith.constant 0 : index
    %c0_19 = arith.constant 0 : index
    %9 = vector.load %arg5[%c0_17, %c0_18, %c0_19] : memref<18x16x128xbf16, #tpu.memory_space<vmem>>, vector<18x15x128xbf16>
    %c0_20 = arith.constant 0 : index
    %c1_21 = arith.constant 1 : index
    %c0_22 = arith.constant 0 : index
    %10 = vector.load %arg6[%c0_20, %c1_21, %c0_22] : memref<18x16x384xbf16, #tpu.memory_space<vmem>>, vector<18x15x128xbf16>
    tpu.vector_store %arg6[%c0_20, %c1_21, %c0_22], %9 {strides = array<i32>} : memref<18x16x384xbf16, #tpu.memory_space<vmem>>, vector<18x15x128xbf16>,
    %c0_23 = arith.constant 0 : index
    %c1_24 = arith.constant 1 : index
    %c0_25 = arith.constant 0 : index
    %11 = vector.load %arg5[%c0_23, %c1_24, %c0_25] : memref<18x16x128xbf16, #tpu.memory_space<vmem>>, vector<18x15x128xbf16>
    %c0_26 = arith.constant 0 : index
    %c0_27 = arith.constant 0 : index
    %c256 = arith.constant 256 : index
    %12 = vector.load %arg6[%c0_26, %c0_27, %c256] : memref<18x16x384xbf16, #tpu.memory_space<vmem>>, vector<18x15x128xbf16>
    tpu.vector_store %arg6[%c0_26, %c0_27, %c256], %11 {strides = array<i32>} : memref<18x16x384xbf16, #tpu.memory_space<vmem>>, vector<18x15x128xbf16>,
    %cst_28 = arith.constant 0.000000e+00 : f32
    %13 = vector.broadcast %cst_28 : f32 to vector<256x128xf32>
    %c0_29 = arith.constant 0 : index
    %c0_30 = arith.constant 0 : index
    %c0_31 = arith.constant 0 : index
    %14 = vector.load %arg6[%c0_29, %c0_30, %c0_31] : memref<18x16x384xbf16, #tpu.memory_space<vmem>>, vector<16x16x384xbf16>
    %15 = vector.shape_cast %14 : vector<16x16x384xbf16> to vector<256x384xbf16>
    %c48 = arith.constant 48 : index
    %c0_32 = arith.constant 0 : index
    %c0_33 = arith.constant 0 : index
    %16 = vector.load %arg1[%c48, %c0_32, %c0_33] : memref<51x384x128xbf16, #tpu.memory_space<vmem>>, vector<1x384x128xbf16>
    %17 = vector.shape_cast %16 : vector<1x384x128xbf16> to vector<384x128xbf16>
    %cst_34 = arith.constant dense<0.000000e+00> : vector<256x128xf32>
    %18 = tpu.matmul %15, %17, %cst_34 {dimension_numbers = #tpu.dot_dimension_numbers<[1], [0], [0], [1], [0, 0, 1, 1], [], []>} : vector<256x384xbf16>, vector<384x128xbf16>, vector<256x128xf32> -> vector<256x128xf32>
    %19 = arith.addf %13, %18 : vector<256x128xf32>
    %c1_35 = arith.constant 1 : index
    %c0_36 = arith.constant 0 : index
    %c0_37 = arith.constant 0 : index
    %20 = vector.load %arg6[%c1_35, %c0_36, %c0_37] : memref<18x16x384xbf16, #tpu.memory_space<vmem>>, vector<16x16x384xbf16>
    %21 = vector.shape_cast %20 : vector<16x16x384xbf16> to vector<256x384xbf16>
    %c49 = arith.constant 49 : index
    %c0_38 = arith.constant 0 : index
    %c0_39 = arith.constant 0 : index
    %22 = vector.load %arg1[%c49, %c0_38, %c0_39] : memref<51x384x128xbf16, #tpu.memory_space<vmem>>, vector<1x384x128xbf16>
    %23 = vector.shape_cast %22 : vector<1x384x128xbf16> to vector<384x128xbf16>
    %cst_40 = arith.constant dense<0.000000e+00> : vector<256x128xf32>
    %24 = tpu.matmul %21, %23, %cst_40 {dimension_numbers = #tpu.dot_dimension_numbers<[1], [0], [0], [1], [0, 0, 1, 1], [], []>} : vector<256x384xbf16>, vector<384x128xbf16>, vector<256x128xf32> -> vector<256x128xf32>
    %25 = arith.addf %19, %24 : vector<256x128xf32>
    %c2 = arith.constant 2 : index
    %c0_41 = arith.constant 0 : index
    %c0_42 = arith.constant 0 : index
    %26 = vector.load %arg6[%c2, %c0_41, %c0_42] : memref<18x16x384xbf16, #tpu.memory_space<vmem>>, vector<16x16x384xbf16>
    %27 = vector.shape_cast %26 : vector<16x16x384xbf16> to vector<256x384xbf16>
    %c50 = arith.constant 50 : index
    %c0_43 = arith.constant 0 : index
    %c0_44 = arith.constant 0 : index
    %28 = vector.load %arg1[%c50, %c0_43, %c0_44] : memref<51x384x128xbf16, #tpu.memory_space<vmem>>, vector<1x384x128xbf16>
    %29 = vector.shape_cast %28 : vector<1x384x128xbf16> to vector<384x128xbf16>
    %cst_45 = arith.constant dense<0.000000e+00> : vector<256x128xf32>
    %30 = tpu.matmul %27, %29, %cst_45 {dimension_numbers = #tpu.dot_dimension_numbers<[1], [0], [0], [1], [0, 0, 1, 1], [], []>} : vector<256x384xbf16>, vector<384x128xbf16>, vector<256x128xf32> -> vector<256x128xf32>
    %31 = arith.addf %25, %30 : vector<256x128xf32>
    %c16 = arith.constant 16 : index
    %c0_46 = arith.constant 0 : index
    %c0_47 = arith.constant 0 : index
    %32 = vector.load %arg2[%c16, %c0_46, %c0_47] : memref<17x1x128xf32, #tpu.memory_space<vmem>>, vector<1x1x128xf32>
    %33 = vector.shape_cast %32 : vector<1x1x128xf32> to vector<1x128xf32>
    %34 = vector.broadcast %33 : vector<1x128xf32> to vector<256x128xf32>
    %35 = arith.mulf %31, %34 : vector<256x128xf32>
    %c16_48 = arith.constant 16 : index
    %c0_49 = arith.constant 0 : index
    %c0_50 = arith.constant 0 : index
    %36 = vector.load %arg3[%c16_48, %c0_49, %c0_50] : memref<17x1x128xf32, #tpu.memory_space<vmem>>, vector<1x1x128xf32>
    %37 = vector.shape_cast %36 : vector<1x1x128xf32> to vector<1x128xf32>
    %38 = vector.broadcast %37 : vector<1x128xf32> to vector<256x128xf32>
    %39 = arith.addf %35, %38 : vector<256x128xf32>
    %40 = vector.shape_cast %39 : vector<256x128xf32> to vector<16x16x128xf32>
    %c0_51 = arith.constant 0 : index
    %c0_52 = arith.constant 0 : index
    %c0_53 = arith.constant 0 : index
    %41 = vector.load %arg4[%c0_51, %c0_52, %c0_53] : memref<16x16x128xf32, #tpu.memory_space<vmem>>, vector<16x16x128xf32>
    tpu.vector_store %arg4[%c0_51, %c0_52, %c0_53], %40 {strides = array<i32>} : memref<16x16x128xf32, #tpu.memory_space<vmem>>, vector<16x16x128xf32>,
    return
  }
}

</mosaic_0001>

<llo_original>
// kernel: _lambda_.1
$region0: #{_lambda_.1}
  #allocation0 [shape = 'u32[]', space=smem, size = 0x4, offset = 0x4, fixed_abs, tag = 'smem constant byte address 0x4 - core index']
  #allocation1 [shape = 'u32[144,128]{1,0:T(1,128)}', space=vmem, size = 0x12000, scoped, tag = 'internal scratch']
  #allocation2 [shape = 'bf16[18,16,128]{2,1,0:T(16,128)(2,1)}', space=vmem, size = 0x12000, scoped, tag = 'scratch operand']
  #allocation3 [shape = 'bf16[18,16,384]{2,1,0:T(16,128)(2,1)}', space=vmem, size = 0x36000, scoped, tag = 'scratch operand']
  %s0 = inlined_call_operand.vmem [shape: bf16[16,16,128], index: 0, kind: input, shape index: {}]
  %s1 = inlined_call_operand.hbm [shape: bf16[51,384,128], index: 1, kind: input, shape index: {}]
  %s2 = inlined_call_operand.hbm [shape: f32[17,1,128], index: 2, kind: input, shape index: {}]
  %s3 = inlined_call_operand.hbm [shape: f32[17,1,128], index: 3, kind: input, shape index: {}]
  %s4 = inlined_call_operand.vmem [shape: f32[16,16,128], index: 4, kind: output, shape index: {}]
  %s5 = sld [smem:[#allocation0]]
  $region45: #{_lambda_.1} parent=0
    _
  %s7 = ssub.s32 1, %s5
  %s8 = scalar_select 0, %s7, %s5
  $region1: #{_lambda_.1} parent=0
    #allocation4 [shape = 'u8[5013504]{0}', space=vmem, size = 0x4c8000, scoped, tag = 'input window, operand 1, single buffered']
    #allocation5 [shape = 's32[1]{0}', space=sflag, size = 0x4, scoped, tag = 'scoped memory for _lambda_.1']
    #allocation6 [shape = 'u8[8704]{0}', space=vmem, size = 0x2400, scoped, tag = 'input window, operand 2, single buffered']
    #allocation7 [shape = 's32[1]{0}', space=sflag, size = 0x4, scoped, tag = 'scoped memory for _lambda_.1']
    #allocation8 [shape = 'u8[8704]{0}', space=vmem, size = 0x2400, scoped, tag = 'input window, operand 3, single buffered']
    %9 = vsyncpa [#allocation5], 0
    %10 = vsyncpa [#allocation7], 0
    // Predicated region
    $region2: #{_lambda_.1} parent=1 // pred_check
      _
    $region3: #{_lambda_.1} parent=1 // pred_check_branch
      %12 = sbr.rel (0) target = $region5
    $region4: #{_lambda_.1} parent=1 // pred_region
      _
    $region5: #{_lambda_.1} parent=1 // pred_fallthru
      _
    // Predicated region
    $region6: #{_lambda_.1} parent=1 // pred_check
      _
    $region7: #{_lambda_.1} parent=1 // pred_check_branch
      %14 = sbr.rel (0) target = $region9
    $region8: #{_lambda_.1} parent=1 // pred_region
      %s16 = ssub.s32 156672, 156672
      %17 = vsyncadd [#allocation5], %s16
      %s18 = sshll.u32 [#allocation4], 4
      %s19 = int_to_ptr.vmem [resolvable:$true] %s18
      %24 = dma.hbm_to_vmem [thread:$0]  %s1, 156672, %s19, [#allocation5], 64, 64, 4
    $region9: #{_lambda_.1} parent=1 // pred_fallthru
      _
    // Predicated region
    $region10: #{_lambda_.1} parent=1 // pred_check
      _
    $region11: #{_lambda_.1} parent=1 // pred_check_branch
      %26 = sbr.rel (0) target = $region13
    $region12: #{_lambda_.1} parent=1 // pred_region
      %s28 = ssub.s32 272, 272
      %29 = vsyncadd [#allocation7], %s28
      %s30 = sshll.u32 [#allocation6], 4
      %s31 = int_to_ptr.vmem [resolvable:$true] %s30
      %36 = dma.hbm_to_vmem [thread:$0]  %s2, 272, %s31, [#allocation7], 16, 16, 1
    $region13: #{_lambda_.1} parent=1 // pred_fallthru
      _
    // Predicated region
    $region14: #{_lambda_.1} parent=1 // pred_check
      _
    $region15: #{_lambda_.1} parent=1 // pred_check_branch
      %38 = sbr.rel (0) target = $region17
    $region16: #{_lambda_.1} parent=1 // pred_region
      %s40 = ssub.s32 272, 272
      %41 = vsyncadd [#allocation7], %s40
      %s42 = sshll.u32 [#allocation8], 4
      %s43 = int_to_ptr.vmem [resolvable:$true] %s42
      %48 = dma.hbm_to_vmem [thread:$0]  %s3, 272, %s43, [#allocation7], 16, 16, 1
    $region17: #{_lambda_.1} parent=1 // pred_fallthru
      _
    // Predicated region
    $region18: #{_lambda_.1} parent=1 // pred_check
      _
    $region19: #{_lambda_.1} parent=1 // pred_check_branch
      %50 = sbr.rel (0) target = $region21
    $region20: #{_lambda_.1} parent=1 // pred_region
      %51 = dma.done [#allocation5], 156672
    $region21: #{_lambda_.1} parent=1 // pred_fallthru
      _
    // Predicated region
    $region22: #{_lambda_.1} parent=1 // pred_check
      _
    $region23: #{_lambda_.1} parent=1 // pred_check_branch
      %53 = sbr.rel (0) target = $region25
    $region24: #{_lambda_.1} parent=1 // pred_region
      %54 = dma.done [#allocation7], 272
    $region25: #{_lambda_.1} parent=1 // pred_fallthru
      _
    // Predicated region
    $region26: #{_lambda_.1} parent=1 // pred_check
      _
    $region27: #{_lambda_.1} parent=1 // pred_check_branch
      %56 = sbr.rel (0) target = $region29
    $region28: #{_lambda_.1} parent=1 // pred_region
      %57 = dma.done [#allocation7], 272
    $region29: #{_lambda_.1} parent=1 // pred_fallthru
      _
    %59 = vst [vmem:[#allocation2] sm:$0xff] 0
    %60 = vst [vmem:[#allocation2 + $0x8] sm:$0xff] 0
    %61 = vst [vmem:[#allocation2 + $0x10] sm:$0xff] 0
    %62 = vst [vmem:[#allocation2 + $0x18] sm:$0xff] 0
    %63 = vst [vmem:[#allocation2 + $0x20] sm:$0xff] 0
    %64 = vst [vmem:[#allocation2 + $0x28] sm:$0xff] 0
    %65 = vst [vmem:[#allocation2 + $0x30] sm:$0xff] 0
    %66 = vst [vmem:[#allocation2 + $0x38] sm:$0xff] 0
    %67 = vst [vmem:[#allocation2 + $0x40] sm:$0xff] 0
    %68 = vst [vmem:[#allocation2 + $0x48] sm:$0xff] 0
    %69 = vst [vmem:[#allocation2 + $0x50] sm:$0xff] 0
    %70 = vst [vmem:[#allocation2 + $0x58] sm:$0xff] 0
    %71 = vst [vmem:[#allocation2 + $0x60] sm:$0xff] 0
    %72 = vst [vmem:[#allocation2 + $0x68] sm:$0xff] 0
    %73 = vst [vmem:[#allocation2 + $0x70] sm:$0xff] 0
    %74 = vst [vmem:[#allocation2 + $0x78] sm:$0xff] 0
    %75 = vst [vmem:[#allocation2 + $0x80] sm:$0xff] 0
    %76 = vst [vmem:[#allocation2 + $0x88] sm:$0xff] 0
    %77 = vst [vmem:[#allocation3] sm:$0xff] 0
    %78 = vst [vmem:[#allocation3 + $0x8] sm:$0xff] 0
    %79 = vst [vmem:[#allocation3 + $0x10] sm:$0xff] 0
    %80 = vst [vmem:[#allocation3 + $0x18] sm:$0xff] 0
    %81 = vst [vmem:[#allocation3 + $0x20] sm:$0xff] 0
    %82 = vst [vmem:[#allocation3 + $0x28] sm:$0xff] 0
    %83 = vst [vmem:[#allocation3 + $0x30] sm:$0xff] 0
    %84 = vst [vmem:[#allocation3 + $0x38] sm:$0xff] 0
    %85 = vst [vmem:[#allocation3 + $0x40] sm:$0xff] 0
    %86 = vst [vmem:[#allocation3 + $0x48] sm:$0xff] 0
    %87 = vst [vmem:[#allocation3 + $0x50] sm:$0xff] 0
    %88 = vst [vmem:[#allocation3 + $0x58] sm:$0xff] 0
    %89 = vst [vmem:[#allocation3 + $0x60] sm:$0xff] 0
    %90 = vst [vmem:[#allocation3 + $0x68] sm:$0xff] 0
    %91 = vst [vmem:[#allocation3 + $0x70] sm:$0xff] 0
    %92 = vst [vmem:[#allocation3 + $0x78] sm:$0xff] 0
    %93 = vst [vmem:[#allocation3 + $0x80] sm:$0xff] 0
    %94 = vst [vmem:[#allocation3 + $0x88] sm:$0xff] 0
    %95 = vst [vmem:[#allocation3 + $0x90] sm:$0xff] 0
    %96 = vst [vmem:[#allocation3 + $0x98] sm:$0xff] 0
    %97 = vst [vmem:[#allocation3 + $0xa0] sm:$0xff] 0
    %98 = vst [vmem:[#allocation3 + $0xa8] sm:$0xff] 0
    %99 = vst [vmem:[#allocation3 + $0xb0] sm:$0xff] 0
    %100 = vst [vmem:[#allocation3 + $0xb8] sm:$0xff] 0
    %101 = vst [vmem:[#allocation3 + $0xc0] sm:$0xff] 0
    %102 = vst [vmem:[#allocation3 + $0xc8] sm:$0xff] 0
    %103 = vst [vmem:[#allocation3 + $0xd0] sm:$0xff] 0
    %104 = vst [vmem:[#allocation3 + $0xd8] sm:$0xff] 0
    %105 = vst [vmem:[#allocation3 + $0xe0] sm:$0xff] 0
    %106 = vst [vmem:[#allocation3 + $0xe8] sm:$0xff] 0
    %107 = vst [vmem:[#allocation3 + $0xf0] sm:$0xff] 0
    %108 = vst [vmem:[#allocation3 + $0xf8] sm:$0xff] 0
    %109 = vst [vmem:[#allocation3 + $0x100] sm:$0xff] 0
    %110 = vst [vmem:[#allocation3 + $0x108] sm:$0xff] 0
    %111 = vst [vmem:[#allocation3 + $0x110] sm:$0xff] 0
    %112 = vst [vmem:[#allocation3 + $0x118] sm:$0xff] 0
    %113 = vst [vmem:[#allocation3 + $0x120] sm:$0xff] 0
    %114 = vst [vmem:[#allocation3 + $0x128] sm:$0xff] 0
    %115 = vst [vmem:[#allocation3 + $0x130] sm:$0xff] 0
    %116 = vst [vmem:[#allocation3 + $0x138] sm:$0xff] 0
    %117 = vst [vmem:[#allocation3 + $0x140] sm:$0xff] 0
    %118 = vst [vmem:[#allocation3 + $0x148] sm:$0xff] 0
    %119 = vst [vmem:[#allocation3 + $0x150] sm:$0xff] 0
    %120 = vst [vmem:[#allocation3 + $0x158] sm:$0xff] 0
    %121 = vst [vmem:[#allocation3 + $0x160] sm:$0xff] 0
    %122 = vst [vmem:[#allocation3 + $0x168] sm:$0xff] 0
    %123 = vst [vmem:[#allocation3 + $0x170] sm:$0xff] 0
    %124 = vst [vmem:[#allocation3 + $0x178] sm:$0xff] 0
    %125 = vst [vmem:[#allocation3 + $0x180] sm:$0xff] 0
    %126 = vst [vmem:[#allocation3 + $0x188] sm:$0xff] 0
    %127 = vst [vmem:[#allocation3 + $0x190] sm:$0xff] 0
    %128 = vst [vmem:[#allocation3 + $0x198] sm:$0xff] 0
    %129 = vst [vmem:[#allocation3 + $0x1a0] sm:$0xff] 0
    %130 = vst [vmem:[#allocation3 + $0x1a8] sm:$0xff] 0
    %v131 = vld [vmem:[%s0] sm:$0xf]
    %v132 = vld [vmem:[%s0 + $0x4] sm:$0xf]
    %v133 = vld [vmem:[%s0 + $0x8] sm:$0xf]
    %v134 = vld [vmem:[%s0 + $0xc] sm:$0xf]
    %v135 = vld [vmem:[%s0 + $0x10] sm:$0xf]
    %v136 = vld [vmem:[%s0 + $0x14] sm:$0xf]
    %v137 = vld [vmem:[%s0 + $0x18] sm:$0xf]
    %v138 = vld [vmem:[%s0 + $0x1c] sm:$0xf]
    %v139 = vld [vmem:[%s0 + $0x20] sm:$0xf]
    %v140 = vld [vmem:[%s0 + $0x24] sm:$0xf]
    %v141 = vld [vmem:[%s0 + $0x28] sm:$0xf]
    %v142 = vld [vmem:[%s0 + $0x2c] sm:$0xf]
    %v143 = vld [vmem:[%s0 + $0x30] sm:$0xf]
    %v144 = vld [vmem:[%s0 + $0x34] sm:$0xf]
    %v145 = vld [vmem:[%s0 + $0x38] sm:$0xf]
    %v146 = vld [vmem:[%s0 + $0x3c] sm:$0xf]
    %v147 = vld [vmem:[%s0 + $0x40] sm:$0xf]
    %v148 = vld [vmem:[%s0 + $0x44] sm:$0xf]
    %v149 = vld [vmem:[%s0 + $0x48] sm:$0xf]
    %v150 = vld [vmem:[%s0 + $0x4c] sm:$0xf]
    %v151 = vld [vmem:[%s0 + $0x50] sm:$0xf]
    %v152 = vld [vmem:[%s0 + $0x54] sm:$0xf]
    %v153 = vld [vmem:[%s0 + $0x58] sm:$0xf]
    %v154 = vld [vmem:[%s0 + $0x5c] sm:$0xf]
    %v155 = vld [vmem:[%s0 + $0x60] sm:$0xf]
    %v156 = vld [vmem:[%s0 + $0x64] sm:$0xf]
    %v157 = vld [vmem:[%s0 + $0x68] sm:$0xf]
    %v158 = vld [vmem:[%s0 + $0x6c] sm:$0xf]
    %v159 = vld [vmem:[%s0 + $0x70] sm:$0xf]
    %v160 = vld [vmem:[%s0 + $0x74] sm:$0xf]
    %v161 = vld [vmem:[%s0 + $0x78] sm:$0xf]
    %v162 = vld [vmem:[%s0 + $0x7c] sm:$0xf]
    %v195 = vunpack.c.l.b16 %v131
    %v196 = vunpack.c.l.b16 %v132
    %v197 = vunpack.c.l.b16 %v133
    %v198 = vunpack.c.l.b16 %v134
    %v199 = vunpack.c.l.b16 %v135
    %v200 = vunpack.c.l.b16 %v136
    %v201 = vunpack.c.l.b16 %v137
    %v202 = vunpack.c.l.b16 %v138
    %v203 = vunpack.c.l.b16 %v139
    %v204 = vunpack.c.l.b16 %v140
    %v205 = vunpack.c.l.b16 %v141
    %v206 = vunpack.c.l.b16 %v142
    %v207 = vunpack.c.l.b16 %v143
    %v208 = vunpack.c.l.b16 %v144
    %v209 = vunpack.c.l.b16 %v145
    %v210 = vunpack.c.l.b16 %v146
    %v211 = vunpack.c.l.b16 %v147
    %v212 = vunpack.c.l.b16 %v148
    %v213 = vunpack.c.l.b16 %v149
    %v214 = vunpack.c.l.b16 %v150
    %v215 = vunpack.c.l.b16 %v151
    %v216 = vunpack.c.l.b16 %v152
    %v217 = vunpack.c.l.b16 %v153
    %v218 = vunpack.c.l.b16 %v154
    %v219 = vunpack.c.l.b16 %v155
    %v220 = vunpack.c.l.b16 %v156
    %v221 = vunpack.c.l.b16 %v157
    %v222 = vunpack.c.l.b16 %v158
    %v223 = vunpack.c.l.b16 %v159
    %v224 = vunpack.c.l.b16 %v160
    %v225 = vunpack.c.l.b16 %v161
    %v226 = vunpack.c.l.b16 %v162
    %v227 = vpack.c.b16 %v196, %v195
    %v228 = vpack.c.b16 %v198, %v197
    %v229 = vpack.c.b16 %v200, %v199
    %v230 = vpack.c.b16 %v202, %v201
    %v231 = vpack.c.b16 %v204, %v203
    %v232 = vpack.c.b16 %v206, %v205
    %v233 = vpack.c.b16 %v208, %v207
    %v234 = vpack.c.b16 %v210, %v209
    %v235 = vpack.c.b16 %v212, %v211
    %v236 = vpack.c.b16 %v214, %v213
    %v237 = vpack.c.b16 %v216, %v215
    %v238 = vpack.c.b16 %v218, %v217
    %v239 = vpack.c.b16 %v220, %v219
    %v240 = vpack.c.b16 %v222, %v221
    %v241 = vpack.c.b16 %v224, %v223
    %v242 = vpack.c.b16 %v226, %v225
    %s259 = scalar_lea.vmem [#allocation2], 8
    %260 = vst [vmem:[%s259] sm:$0xff] %v227
    %261 = vst [vmem:[%s259 + $0x8] sm:$0xff] %v228
    %262 = vst [vmem:[%s259 + $0x10] sm:$0xff] %v229
    %263 = vst [vmem:[%s259 + $0x18] sm:$0xff] %v230
    %264 = vst [vmem:[%s259 + $0x20] sm:$0xff] %v231
    %265 = vst [vmem:[%s259 + $0x28] sm:$0xff] %v232
    %266 = vst [vmem:[%s259 + $0x30] sm:$0xff] %v233
    %267 = vst [vmem:[%s259 + $0x38] sm:$0xff] %v234
    %268 = vst [vmem:[%s259 + $0x40] sm:$0xff] %v235
    %269 = vst [vmem:[%s259 + $0x48] sm:$0xff] %v236
    %270 = vst [vmem:[%s259 + $0x50] sm:$0xff] %v237
    %271 = vst [vmem:[%s259 + $0x58] sm:$0xff] %v238
    %272 = vst [vmem:[%s259 + $0x60] sm:$0xff] %v239
    %273 = vst [vmem:[%s259 + $0x68] sm:$0xff] %v240
    %274 = vst [vmem:[%s259 + $0x70] sm:$0xff] %v241
    %275 = vst [vmem:[%s259 + $0x78] sm:$0xff] %v242
    loop: start=0, step=1, limit=16
    $region30: #{_lambda_.1} parent=1 // loop_pre_header
      _
    $region31: #{_lambda_.1} parent=1 // loop_header
      %s277 = sphi 0, %s281
      %p278 = scmp.ge.s32.totalorder %s277, 16
    $region32: #{_lambda_.1} parent=1 // loop_header_branch
      %280 = sbr.rel (%p278) target = $region36
    $region33: #{_lambda_.1} parent=1 // loop_body
      %v282 = vld [vmem:[#allocation2] sm:$0xff]
      %v283 = vld [vmem:[#allocation2 + $0x8] sm:$0xff]
      %v284 = vld [vmem:[#allocation2 + $0x10] sm:$0xff]
      %v285 = vld [vmem:[#allocation2 + $0x18] sm:$0xff]
      %v286 = vld [vmem:[#allocation2 + $0x20] sm:$0xff]
      %v287 = vld [vmem:[#allocation2 + $0x28] sm:$0xff]
      %v288 = vld [vmem:[#allocation2 + $0x30] sm:$0xff]
      %v289 = vld [vmem:[#allocation2 + $0x38] sm:$0xff]
      %v290 = vld [vmem:[#allocation2 + $0x40] sm:$0xff]
      %v291 = vld [vmem:[#allocation2 + $0x48] sm:$0xff]
      %v292 = vld [vmem:[#allocation2 + $0x50] sm:$0xff]
      %v293 = vld [vmem:[#allocation2 + $0x58] sm:$0xff]
      %v294 = vld [vmem:[#allocation2 + $0x60] sm:$0xff]
      %v295 = vld [vmem:[#allocation2 + $0x68] sm:$0xff]
      %v296 = vld [vmem:[#allocation2 + $0x70] sm:$0xff]
      %v297 = vld [vmem:[#allocation2 + $0x78] sm:$0xff]
      %v298 = vld [vmem:[#allocation2 + $0x80] sm:$0xff]
      %v299 = vld [vmem:[#allocation2 + $0x88] sm:$0xff]
      %300 = vst [vmem:[#allocation3 + $0x8] sm:$0xff] %v282
      %301 = vst [vmem:[#allocation3 + $0x20] sm:$0xff] %v283
      %302 = vst [vmem:[#allocation3 + $0x38] sm:$0xff] %v284
      %303 = vst [vmem:[#allocation3 + $0x50] sm:$0xff] %v285
      %304 = vst [vmem:[#allocation3 + $0x68] sm:$0xff] %v286
      %305 = vst [vmem:[#allocation3 + $0x80] sm:$0xff] %v287
      %306 = vst [vmem:[#allocation3 + $0x98] sm:$0xff] %v288
      %307 = vst [vmem:[#allocation3 + $0xb0] sm:$0xff] %v289
      %308 = vst [vmem:[#allocation3 + $0xc8] sm:$0xff] %v290
      %309 = vst [vmem:[#allocation3 + $0xe0] sm:$0xff] %v291
      %310 = vst [vmem:[#allocation3 + $0xf8] sm:$0xff] %v292
      %311 = vst [vmem:[#allocation3 + $0x110] sm:$0xff] %v293
      %312 = vst [vmem:[#allocation3 + $0x128] sm:$0xff] %v294
      %313 = vst [vmem:[#allocation3 + $0x140] sm:$0xff] %v295
      %314 = vst [vmem:[#allocation3 + $0x158] sm:$0xff] %v296
      %315 = vst [vmem:[#allocation3 + $0x170] sm:$0xff] %v297
      %316 = vst [vmem:[#allocation3 + $0x188] sm:$0xff] %v298
      %317 = vst [vmem:[#allocation3 + $0x1a0] sm:$0xff] %v299
      %v318 = vld [vmem:[#allocation2] sm:$0xff]
      %v319 = vld [vmem:[#allocation2 + $0x8] sm:$0xff]
      %v320 = vld [vmem:[#allocation2 + $0x10] sm:$0xff]
      %v321 = vld [vmem:[#allocation2 + $0x18] sm:$0xff]
      %v322 = vld [vmem:[#allocation2 + $0x20] sm:$0xff]
      %v323 = vld [vmem:[#allocation2 + $0x28] sm:$0xff]
      %v324 = vld [vmem:[#allocation2 + $0x30] sm:$0xff]
      %v325 = vld [vmem:[#allocation2 + $0x38] sm:$0xff]
      %v326 = vld [vmem:[#allocation2 + $0x40] sm:$0xff]
      %v327 = vld [vmem:[#allocation2 + $0x48] sm:$0xff]
      %v328 = vld [vmem:[#allocation2 + $0x50] sm:$0xff]
      %v329 = vld [vmem:[#allocation2 + $0x58] sm:$0xff]
      %v330 = vld [vmem:[#allocation2 + $0x60] sm:$0xff]
      %v331 = vld [vmem:[#allocation2 + $0x68] sm:$0xff]
      %v332 = vld [vmem:[#allocation2 + $0x70] sm:$0xff]
      %v333 = vld [vmem:[#allocation2 + $0x78] sm:$0xff]
      %v334 = vld [vmem:[#allocation2 + $0x80] sm:$0xff]
      %v335 = vld [vmem:[#allocation2 + $0x88] sm:$0xff]
      %v337 = vshrl.u32 %v318, 16
      %v339 = vrot.slane %v337, 7
      %v340 = vshll.u32 %v318, 16
      %v342 = vor.u32 %v339, %v340
      %v344 = vshrl.u32 %v319, 16
      %v346 = vrot.slane %v344, 7
      %v347 = vshll.u32 %v319, 16
      %v349 = vor.u32 %v346, %v347
      %v351 = vshrl.u32 %v320, 16
      %v353 = vrot.slane %v351, 7
      %v354 = vshll.u32 %v320, 16
      %v356 = vor.u32 %v353, %v354
      %v358 = vshrl.u32 %v321, 16
      %v360 = vrot.slane %v358, 7
      %v361 = vshll.u32 %v321, 16
      %v363 = vor.u32 %v360, %v361
      %v365 = vshrl.u32 %v322, 16
      %v367 = vrot.slane %v365, 7
      %v368 = vshll.u32 %v322, 16
      %v370 = vor.u32 %v367, %v368
      %v372 = vshrl.u32 %v323, 16
      %v374 = vrot.slane %v372, 7
      %v375 = vshll.u32 %v323, 16
      %v377 = vor.u32 %v374, %v375
      %v379 = vshrl.u32 %v324, 16
      %v381 = vrot.slane %v379, 7
      %v382 = vshll.u32 %v324, 16
      %v384 = vor.u32 %v381, %v382
      %v386 = vshrl.u32 %v325, 16
      %v388 = vrot.slane %v386, 7
      %v389 = vshll.u32 %v325, 16
      %v391 = vor.u32 %v388, %v389
      %v393 = vshrl.u32 %v326, 16
      %v395 = vrot.slane %v393, 7
      %v396 = vshll.u32 %v326, 16
      %v398 = vor.u32 %v395, %v396
      %v400 = vshrl.u32 %v327, 16
      %v402 = vrot.slane %v400, 7
      %v403 = vshll.u32 %v327, 16
      %v405 = vor.u32 %v402, %v403
      %v407 = vshrl.u32 %v328, 16
      %v409 = vrot.slane %v407, 7
      %v410 = vshll.u32 %v328, 16
      %v412 = vor.u32 %v409, %v410
      %v414 = vshrl.u32 %v329, 16
      %v416 = vrot.slane %v414, 7
      %v417 = vshll.u32 %v329, 16
      %v419 = vor.u32 %v416, %v417
      %v421 = vshrl.u32 %v330, 16
      %v423 = vrot.slane %v421, 7
      %v424 = vshll.u32 %v330, 16
      %v426 = vor.u32 %v423, %v424
      %v428 = vshrl.u32 %v331, 16
      %v430 = vrot.slane %v428, 7
      %v431 = vshll.u32 %v331, 16
      %v433 = vor.u32 %v430, %v431
      %v435 = vshrl.u32 %v332, 16
      %v437 = vrot.slane %v435, 7
      %v438 = vshll.u32 %v332, 16
      %v440 = vor.u32 %v437, %v438
      %v442 = vshrl.u32 %v333, 16
      %v444 = vrot.slane %v442, 7
      %v445 = vshll.u32 %v333, 16
      %v447 = vor.u32 %v444, %v445
      %v449 = vshrl.u32 %v334, 16
      %v451 = vrot.slane %v449, 7
      %v452 = vshll.u32 %v334, 16
      %v454 = vor.u32 %v451, %v452
      %v456 = vshrl.u32 %v335, 16
      %v458 = vrot.slane %v456, 7
      %v459 = vshll.u32 %v335, 16
      %v461 = vor.u32 %v458, %v459
      %vm480 = vcmask 1047552
      %vm481 = vsmask.f32 7938
      %vm482 = vmand %vm480, %vm481
      %v483 = vld [vmem:[#allocation3] sm:$0xff]
      %v484 = vsel %vm482, %v342, %v483
      %485 = vst [vmem:[#allocation3] sm:$0xff] %v484
      %v486 = vld [vmem:[#allocation3 + $0x18] sm:$0xff]
      %v487 = vsel %vm482, %v349, %v486
      %488 = vst [vmem:[#allocation3 + $0x18] sm:$0xff] %v487
      %v489 = vld [vmem:[#allocation3 + $0x30] sm:$0xff]
      %v490 = vsel %vm482, %v356, %v489
      %491 = vst [vmem:[#allocation3 + $0x30] sm:$0xff] %v490
      %v492 = vld [vmem:[#allocation3 + $0x48] sm:$0xff]
      %v493 = vsel %vm482, %v363, %v492
      %494 = vst [vmem:[#allocation3 + $0x48] sm:$0xff] %v493
      %v495 = vld [vmem:[#allocation3 + $0x60] sm:$0xff]
      %v496 = vsel %vm482, %v370, %v495
      %497 = vst [vmem:[#allocation3 + $0x60] sm:$0xff] %v496
      %v498 = vld [vmem:[#allocation3 + $0x78] sm:$0xff]
      %v499 = vsel %vm482, %v377, %v498
      %500 = vst [vmem:[#allocation3 + $0x78] sm:$0xff] %v499
      %v501 = vld [vmem:[#allocation3 + $0x90] sm:$0xff]
      %v502 = vsel %vm482, %v384, %v501
      %503 = vst [vmem:[#allocation3 + $0x90] sm:$0xff] %v502
      %v504 = vld [vmem:[#allocation3 + $0xa8] sm:$0xff]
      %v505 = vsel %vm482, %v391, %v504
      %506 = vst [vmem:[#allocation3 + $0xa8] sm:$0xff] %v505
      %v507 = vld [vmem:[#allocation3 + $0xc0] sm:$0xff]
      %v508 = vsel %vm482, %v398, %v507
      %509 = vst [vmem:[#allocation3 + $0xc0] sm:$0xff] %v508
      %v510 = vld [vmem:[#allocation3 + $0xd8] sm:$0xff]
      %v511 = vsel %vm482, %v405, %v510
      %512 = vst [vmem:[#allocation3 + $0xd8] sm:$0xff] %v511
      %v513 = vld [vmem:[#allocation3 + $0xf0] sm:$0xff]
      %v514 = vsel %vm482, %v412, %v513
      %515 = vst [vmem:[#allocation3 + $0xf0] sm:$0xff] %v514
      %v516 = vld [vmem:[#allocation3 + $0x108] sm:$0xff]
      %v517 = vsel %vm482, %v419, %v516
      %518 = vst [vmem:[#allocation3 + $0x108] sm:$0xff] %v517
      %v519 = vld [vmem:[#allocation3 + $0x120] sm:$0xff]
      %v520 = vsel %vm482, %v426, %v519
      %521 = vst [vmem:[#allocation3 + $0x120] sm:$0xff] %v520
      %v522 = vld [vmem:[#allocation3 + $0x138] sm:$0xff]
      %v523 = vsel %vm482, %v433, %v522
      %524 = vst [vmem:[#allocation3 + $0x138] sm:$0xff] %v523
      %v525 = vld [vmem:[#allocation3 + $0x150] sm:$0xff]
      %v526 = vsel %vm482, %v440, %v525
      %527 = vst [vmem:[#allocation3 + $0x150] sm:$0xff] %v526
      %v528 = vld [vmem:[#allocation3 + $0x168] sm:$0xff]
      %v529 = vsel %vm482, %v447, %v528
      %530 = vst [vmem:[#allocation3 + $0x168] sm:$0xff] %v529
      %v531 = vld [vmem:[#allocation3 + $0x180] sm:$0xff]
      %v532 = vsel %vm482, %v454, %v531
      %533 = vst [vmem:[#allocation3 + $0x180] sm:$0xff] %v532
      %v534 = vld [vmem:[#allocation3 + $0x198] sm:$0xff]
      %v535 = vsel %vm482, %v461, %v534
      %536 = vst [vmem:[#allocation3 + $0x198] sm:$0xff] %v535
      %v537 = vld [vmem:[#allocation2] sm:$0xff]
      %v538 = vld [vmem:[#allocation2 + $0x8] sm:$0xff]
      %v539 = vld [vmem:[#allocation2 + $0x10] sm:$0xff]
      %v540 = vld [vmem:[#allocation2 + $0x18] sm:$0xff]
      %v541 = vld [vmem:[#allocation2 + $0x20] sm:$0xff]
      %v542 = vld [vmem:[#allocation2 + $0x28] sm:$0xff]
      %v543 = vld [vmem:[#allocation2 + $0x30] sm:$0xff]
      %v544 = vld [vmem:[#allocation2 + $0x38] sm:$0xff]
      %v545 = vld [vmem:[#allocation2 + $0x40] sm:$0xff]
      %v546 = vld [vmem:[#allocation2 + $0x48] sm:$0xff]
      %v547 = vld [vmem:[#allocation2 + $0x50] sm:$0xff]
      %v548 = vld [vmem:[#allocation2 + $0x58] sm:$0xff]
      %v549 = vld [vmem:[#allocation2 + $0x60] sm:$0xff]
      %v550 = vld [vmem:[#allocation2 + $0x68] sm:$0xff]
      %v551 = vld [vmem:[#allocation2 + $0x70] sm:$0xff]
      %v552 = vld [vmem:[#allocation2 + $0x78] sm:$0xff]
      %v553 = vld [vmem:[#allocation2 + $0x80] sm:$0xff]
      %v554 = vld [vmem:[#allocation2 + $0x88] sm:$0xff]
      %v556 = vshrl.u32 %v537, 16
      %v558 = vshll.u32 %v537, 16
      %v560 = vrot.slane %v558, 1
      %v561 = vor.u32 %v556, %v560
      %v563 = vshrl.u32 %v538, 16
      %v565 = vshll.u32 %v538, 16
      %v567 = vrot.slane %v565, 1
      %v568 = vor.u32 %v563, %v567
      %v570 = vshrl.u32 %v539, 16
      %v572 = vshll.u32 %v539, 16
      %v574 = vrot.slane %v572, 1
      %v575 = vor.u32 %v570, %v574
      %v577 = vshrl.u32 %v540, 16
      %v579 = vshll.u32 %v540, 16
      %v581 = vrot.slane %v579, 1
      %v582 = vor.u32 %v577, %v581
      %v584 = vshrl.u32 %v541, 16
      %v586 = vshll.u32 %v541, 16
      %v588 = vrot.slane %v586, 1
      %v589 = vor.u32 %v584, %v588
      %v591 = vshrl.u32 %v542, 16
      %v593 = vshll.u32 %v542, 16
      %v595 = vrot.slane %v593, 1
      %v596 = vor.u32 %v591, %v595
      %v598 = vshrl.u32 %v543, 16
      %v600 = vshll.u32 %v543, 16
      %v602 = vrot.slane %v600, 1
      %v603 = vor.u32 %v598, %v602
      %v605 = vshrl.u32 %v544, 16
      %v607 = vshll.u32 %v544, 16
      %v609 = vrot.slane %v607, 1
      %v610 = vor.u32 %v605, %v609
      %v612 = vshrl.u32 %v545, 16
      %v614 = vshll.u32 %v545, 16
      %v616 = vrot.slane %v614, 1
      %v617 = vor.u32 %v612, %v616
      %v619 = vshrl.u32 %v546, 16
      %v621 = vshll.u32 %v546, 16
      %v623 = vrot.slane %v621, 1
      %v624 = vor.u32 %v619, %v623
      %v626 = vshrl.u32 %v547, 16
      %v628 = vshll.u32 %v547, 16
      %v630 = vrot.slane %v628, 1
      %v631 = vor.u32 %v626, %v630
      %v633 = vshrl.u32 %v548, 16
      %v635 = vshll.u32 %v548, 16
      %v637 = vrot.slane %v635, 1
      %v638 = vor.u32 %v633, %v637
      %v640 = vshrl.u32 %v549, 16
      %v642 = vshll.u32 %v549, 16
      %v644 = vrot.slane %v642, 1
      %v645 = vor.u32 %v640, %v644
      %v647 = vshrl.u32 %v550, 16
      %v649 = vshll.u32 %v550, 16
      %v651 = vrot.slane %v649, 1
      %v652 = vor.u32 %v647, %v651
      %v654 = vshrl.u32 %v551, 16
      %v656 = vshll.u32 %v551, 16
      %v658 = vrot.slane %v656, 1
      %v659 = vor.u32 %v654, %v658
      %v661 = vshrl.u32 %v552, 16
      %v663 = vshll.u32 %v552, 16
      %v665 = vrot.slane %v663, 1
      %v666 = vor.u32 %v661, %v665
      %v668 = vshrl.u32 %v553, 16
      %v670 = vshll.u32 %v553, 16
      %v672 = vrot.slane %v670, 1
      %v673 = vor.u32 %v668, %v672
      %v675 = vshrl.u32 %v554, 16
      %v677 = vshll.u32 %v554, 16
      %v679 = vrot.slane %v677, 1
      %v680 = vor.u32 %v675, %v679
      %vm699 = vsmask.f32 7424
      %vm700 = vmand %vm480, %vm699
      %v701 = vld [vmem:[#allocation3 + $0x10] sm:$0xff]
      %v702 = vsel %vm700, %v561, %v701
      %703 = vst [vmem:[#allocation3 + $0x10] sm:$0xff] %v702
      %v704 = vld [vmem:[#allocation3 + $0x28] sm:$0xff]
      %v705 = vsel %vm700, %v568, %v704
      %706 = vst [vmem:[#allocation3 + $0x28] sm:$0xff] %v705
      %v707 = vld [vmem:[#allocation3 + $0x40] sm:$0xff]
      %v708 = vsel %vm700, %v575, %v707
      %709 = vst [vmem:[#allocation3 + $0x40] sm:$0xff] %v708
      %v710 = vld [vmem:[#allocation3 + $0x58] sm:$0xff]
      %v711 = vsel %vm700, %v582, %v710
      %712 = vst [vmem:[#allocation3 + $0x58] sm:$0xff] %v711
      %v713 = vld [vmem:[#allocation3 + $0x70] sm:$0xff]
      %v714 = vsel %vm700, %v589, %v713
      %715 = vst [vmem:[#allocation3 + $0x70] sm:$0xff] %v714
      %v716 = vld [vmem:[#allocation3 + $0x88] sm:$0xff]
      %v717 = vsel %vm700, %v596, %v716
      %718 = vst [vmem:[#allocation3 + $0x88] sm:$0xff] %v717
      %v719 = vld [vmem:[#allocation3 + $0xa0] sm:$0xff]
      %v720 = vsel %vm700, %v603, %v719
      %721 = vst [vmem:[#allocation3 + $0xa0] sm:$0xff] %v720
      %v722 = vld [vmem:[#allocation3 + $0xb8] sm:$0xff]
      %v723 = vsel %vm700, %v610, %v722
      %724 = vst [vmem:[#allocation3 + $0xb8] sm:$0xff] %v723
      %v725 = vld [vmem:[#allocation3 + $0xd0] sm:$0xff]
      %v726 = vsel %vm700, %v617, %v725
      %727 = vst [vmem:[#allocation3 + $0xd0] sm:$0xff] %v726
      %v728 = vld [vmem:[#allocation3 + $0xe8] sm:$0xff]
      %v729 = vsel %vm700, %v624, %v728
      %730 = vst [vmem:[#allocation3 + $0xe8] sm:$0xff] %v729
      %v731 = vld [vmem:[#allocation3 + $0x100] sm:$0xff]
      %v732 = vsel %vm700, %v631, %v731
      %733 = vst [vmem:[#allocation3 + $0x100] sm:$0xff] %v732
      %v734 = vld [vmem:[#allocation3 + $0x118] sm:$0xff]
      %v735 = vsel %vm700, %v638, %v734
      %736 = vst [vmem:[#allocation3 + $0x118] sm:$0xff] %v735
      %v737 = vld [vmem:[#allocation3 + $0x130] sm:$0xff]
      %v738 = vsel %vm700, %v645, %v737
      %739 = vst [vmem:[#allocation3 + $0x130] sm:$0xff] %v738
      %v740 = vld [vmem:[#allocation3 + $0x148] sm:$0xff]
      %v741 = vsel %vm700, %v652, %v740
      %742 = vst [vmem:[#allocation3 + $0x148] sm:$0xff] %v741
      %v743 = vld [vmem:[#allocation3 + $0x160] sm:$0xff]
      %v744 = vsel %vm700, %v659, %v743
      %745 = vst [vmem:[#allocation3 + $0x160] sm:$0xff] %v744
      %v746 = vld [vmem:[#allocation3 + $0x178] sm:$0xff]
      %v747 = vsel %vm700, %v666, %v746
      %748 = vst [vmem:[#allocation3 + $0x178] sm:$0xff] %v747
      %v749 = vld [vmem:[#allocation3 + $0x190] sm:$0xff]
      %v750 = vsel %vm700, %v673, %v749
      %751 = vst [vmem:[#allocation3 + $0x190] sm:$0xff] %v750
      %v752 = vld [vmem:[#allocation3 + $0x1a8] sm:$0xff]
      %v753 = vsel %vm700, %v680, %v752
      %754 = vst [vmem:[#allocation3 + $0x1a8] sm:$0xff] %v753
      %v755 = vld [vmem:[#allocation3] sm:$0xff]
      %v756 = vld [vmem:[#allocation3 + $0x8] sm:$0xff]
      %v757 = vld [vmem:[#allocation3 + $0x10] sm:$0xff]
      %v758 = vld [vmem:[#allocation3 + $0x18] sm:$0xff]
      %v759 = vld [vmem:[#allocation3 + $0x20] sm:$0xff]
      %v760 = vld [vmem:[#allocation3 + $0x28] sm:$0xff]
      %v761 = vld [vmem:[#allocation3 + $0x30] sm:$0xff]
      %v762 = vld [vmem:[#allocation3 + $0x38] sm:$0xff]
      %v763 = vld [vmem:[#allocation3 + $0x40] sm:$0xff]
      %v764 = vld [vmem:[#allocation3 + $0x48] sm:$0xff]
      %v765 = vld [vmem:[#allocation3 + $0x50] sm:$0xff]
      %v766 = vld [vmem:[#allocation3 + $0x58] sm:$0xff]
      %v767 = vld [vmem:[#allocation3 + $0x60] sm:$0xff]
      %v768 = vld [vmem:[#allocation3 + $0x68] sm:$0xff]
      %v769 = vld [vmem:[#allocation3 + $0x70] sm:$0xff]
      %v770 = vld [vmem:[#allocation3 + $0x78] sm:$0xff]
      %v771 = vld [vmem:[#allocation3 + $0x80] sm:$0xff]
      %v772 = vld [vmem:[#allocation3 + $0x88] sm:$0xff]
      %v773 = vld [vmem:[#allocation3 + $0x90] sm:$0xff]
      %v774 = vld [vmem:[#allocation3 + $0x98] sm:$0xff]
      %v775 = vld [vmem:[#allocation3 + $0xa0] sm:$0xff]
      %v776 = vld [vmem:[#allocation3 + $0xa8] sm:$0xff]
      %v777 = vld [vmem:[#allocation3 + $0xb0] sm:$0xff]
      %v778 = vld [vmem:[#allocation3 + $0xb8] sm:$0xff]
      %v779 = vld [vmem:[#allocation3 + $0xc0] sm:$0xff]
      %v780 = vld [vmem:[#allocation3 + $0xc8] sm:$0xff]
      %v781 = vld [vmem:[#allocation3 + $0xd0] sm:$0xff]
      %v782 = vld [vmem:[#allocation3 + $0xd8] sm:$0xff]
      %v783 = vld [vmem:[#allocation3 + $0xe0] sm:$0xff]
      %v784 = vld [vmem:[#allocation3 + $0xe8] sm:$0xff]
      %v785 = vld [vmem:[#allocation3 + $0xf0] sm:$0xff]
      %v786 = vld [vmem:[#allocation3 + $0xf8] sm:$0xff]
      %v787 = vld [vmem:[#allocation3 + $0x100] sm:$0xff]
      %v788 = vld [vmem:[#allocation3 + $0x108] sm:$0xff]
      %v789 = vld [vmem:[#allocation3 + $0x110] sm:$0xff]
      %v790 = vld [vmem:[#allocation3 + $0x118] sm:$0xff]
      %v791 = vld [vmem:[#allocation3 + $0x120] sm:$0xff]
      %v792 = vld [vmem:[#allocation3 + $0x128] sm:$0xff]
      %v793 = vld [vmem:[#allocation3 + $0x130] sm:$0xff]
      %v794 = vld [vmem:[#allocation3 + $0x138] sm:$0xff]
      %v795 = vld [vmem:[#allocation3 + $0x140] sm:$0xff]
      %v796 = vld [vmem:[#allocation3 + $0x148] sm:$0xff]
      %v797 = vld [vmem:[#allocation3 + $0x150] sm:$0xff]
      %v798 = vld [vmem:[#allocation3 + $0x158] sm:$0xff]
      %v799 = vld [vmem:[#allocation3 + $0x160] sm:$0xff]
      %v800 = vld [vmem:[#allocation3 + $0x168] sm:$0xff]
      %v801 = vld [vmem:[#allocation3 + $0x170] sm:$0xff]
      %v802 = vld [vmem:[#allocation3 + $0x178] sm:$0xff]
      %s803 = smul.u32 %s277, 3
      %s804 = smul.u32 %s803, 48
      %s805 = smul.addr %s804, 4
      %s806 = scalar_lea.vmem [#allocation4], %s805
      %v807 = vld [vmem:[%s806] sm:$0xf]
      %v808 = vld [vmem:[%s806 + $0x4] sm:$0xf]
      %v809 = vld [vmem:[%s806 + $0x8] sm:$0xf]
      %v810 = vld [vmem:[%s806 + $0xc] sm:$0xf]
      %v811 = vld [vmem:[%s806 + $0x10] sm:$0xf]
      %v812 = vld [vmem:[%s806 + $0x14] sm:$0xf]
      %v813 = vld [vmem:[%s806 + $0x18] sm:$0xf]
      %v814 = vld [vmem:[%s806 + $0x1c] sm:$0xf]
      %v815 = vld [vmem:[%s806 + $0x20] sm:$0xf]
      %v816 = vld [vmem:[%s806 + $0x24] sm:$0xf]
      %v817 = vld [vmem:[%s806 + $0x28] sm:$0xf]
      %v818 = vld [vmem:[%s806 + $0x2c] sm:$0xf]
      %v819 = vld [vmem:[%s806 + $0x30] sm:$0xf]
      %v820 = vld [vmem:[%s806 + $0x34] sm:$0xf]
      %v821 = vld [vmem:[%s806 + $0x38] sm:$0xf]
      %v822 = vld [vmem:[%s806 + $0x3c] sm:$0xf]
      %v823 = vld [vmem:[%s806 + $0x40] sm:$0xf]
      %v824 = vld [vmem:[%s806 + $0x44] sm:$0xf]
      %v825 = vld [vmem:[%s806 + $0x48] sm:$0xf]
      %v826 = vld [vmem:[%s806 + $0x4c] sm:$0xf]
      %v827 = vld [vmem:[%s806 + $0x50] sm:$0xf]
      %v828 = vld [vmem:[%s806 + $0x54] sm:$0xf]
      %v829 = vld [vmem:[%s806 + $0x58] sm:$0xf]
      %v830 = vld [vmem:[%s806 + $0x5c] sm:$0xf]
      %v831 = vld [vmem:[%s806 + $0x60] sm:$0xf]
      %v832 = vld [vmem:[%s806 + $0x64] sm:$0xf]
      %v833 = vld [vmem:[%s806 + $0x68] sm:$0xf]
      %v834 = vld [vmem:[%s806 + $0x6c] sm:$0xf]
      %v835 = vld [vmem:[%s806 + $0x70] sm:$0xf]
      %v836 = vld [vmem:[%s806 + $0x74] sm:$0xf]
      %v837 = vld [vmem:[%s806 + $0x78] sm:$0xf]
      %v838 = vld [vmem:[%s806 + $0x7c] sm:$0xf]
      %v839 = vld [vmem:[%s806 + $0x80] sm:$0xf]
      %v840 = vld [vmem:[%s806 + $0x84] sm:$0xf]
      %v841 = vld [vmem:[%s806 + $0x88] sm:$0xf]
      %v842 = vld [vmem:[%s806 + $0x8c] sm:$0xf]
      %v843 = vld [vmem:[%s806 + $0x90] sm:$0xf]
      %v844 = vld [vmem:[%s806 + $0x94] sm:$0xf]
      %v845 = vld [vmem:[%s806 + $0x98] sm:$0xf]
      %v846 = vld [vmem:[%s806 + $0x9c] sm:$0xf]
      %v847 = vld [vmem:[%s806 + $0xa0] sm:$0xf]
      %v848 = vld [vmem:[%s806 + $0xa4] sm:$0xf]
      %v849 = vld [vmem:[%s806 + $0xa8] sm:$0xf]
      %v850 = vld [vmem:[%s806 + $0xac] sm:$0xf]
      %v851 = vld [vmem:[%s806 + $0xb0] sm:$0xf]
      %v852 = vld [vmem:[%s806 + $0xb4] sm:$0xf]
      %v853 = vld [vmem:[%s806 + $0xb8] sm:$0xf]
      %v854 = vld [vmem:[%s806 + $0xbc] sm:$0xf]
      %s855 = scalar_lea.vmem [#allocation3], 24
      %v856 = vld [vmem:[%s855] sm:$0xff]
      %v857 = vld [vmem:[%s855 + $0x8] sm:$0xff]
      %v858 = vld [vmem:[%s855 + $0x10] sm:$0xff]
      %v859 = vld [vmem:[%s855 + $0x18] sm:$0xff]
      %v860 = vld [vmem:[%s855 + $0x20] sm:$0xff]
      %v861 = vld [vmem:[%s855 + $0x28] sm:$0xff]
      %v862 = vld [vmem:[%s855 + $0x30] sm:$0xff]
      %v863 = vld [vmem:[%s855 + $0x38] sm:$0xff]
      %v864 = vld [vmem:[%s855 + $0x40] sm:$0xff]
      %v865 = vld [vmem:[%s855 + $0x48] sm:$0xff]
      %v866 = vld [vmem:[%s855 + $0x50] sm:$0xff]
      %v867 = vld [vmem:[%s855 + $0x58] sm:$0xff]
      %v868 = vld [vmem:[%s855 + $0x60] sm:$0xff]
      %v869 = vld [vmem:[%s855 + $0x68] sm:$0xff]
      %v870 = vld [vmem:[%s855 + $0x70] sm:$0xff]
      %v871 = vld [vmem:[%s855 + $0x78] sm:$0xff]
      %v872 = vld [vmem:[%s855 + $0x80] sm:$0xff]
      %v873 = vld [vmem:[%s855 + $0x88] sm:$0xff]
      %v874 = vld [vmem:[%s855 + $0x90] sm:$0xff]
      %v875 = vld [vmem:[%s855 + $0x98] sm:$0xff]
      %v876 = vld [vmem:[%s855 + $0xa0] sm:$0xff]
      %v877 = vld [vmem:[%s855 + $0xa8] sm:$0xff]
      %v878 = vld [vmem:[%s855 + $0xb0] sm:$0xff]
      %v879 = vld [vmem:[%s855 + $0xb8] sm:$0xff]
      %v880 = vld [vmem:[%s855 + $0xc0] sm:$0xff]
      %v881 = vld [vmem:[%s855 + $0xc8] sm:$0xff]
      %v882 = vld [vmem:[%s855 + $0xd0] sm:$0xff]
      %v883 = vld [vmem:[%s855 + $0xd8] sm:$0xff]
      %v884 = vld [vmem:[%s855 + $0xe0] sm:$0xff]
      %v885 = vld [vmem:[%s855 + $0xe8] sm:$0xff]
      %v886 = vld [vmem:[%s855 + $0xf0] sm:$0xff]
      %v887 = vld [vmem:[%s855 + $0xf8] sm:$0xff]
      %v888 = vld [vmem:[%s855 + $0x100] sm:$0xff]
      %v889 = vld [vmem:[%s855 + $0x108] sm:$0xff]
      %v890 = vld [vmem:[%s855 + $0x110] sm:$0xff]
      %v891 = vld [vmem:[%s855 + $0x118] sm:$0xff]
      %v892 = vld [vmem:[%s855 + $0x120] sm:$0xff]
      %v893 = vld [vmem:[%s855 + $0x128] sm:$0xff]
      %v894 = vld [vmem:[%s855 + $0x130] sm:$0xff]
      %v895 = vld [vmem:[%s855 + $0x138] sm:$0xff]
      %v896 = vld [vmem:[%s855 + $0x140] sm:$0xff]
      %v897 = vld [vmem:[%s855 + $0x148] sm:$0xff]
      %v898 = vld [vmem:[%s855 + $0x150] sm:$0xff]
      %v899 = vld [vmem:[%s855 + $0x158] sm:$0xff]
      %v900 = vld [vmem:[%s855 + $0x160] sm:$0xff]
      %v901 = vld [vmem:[%s855 + $0x168] sm:$0xff]
      %v902 = vld [vmem:[%s855 + $0x170] sm:$0xff]
      %v903 = vld [vmem:[%s855 + $0x178] sm:$0xff]
      %s904 = sadd.s32 %s803, 1
      %s905 = smul.u32 %s904, 48
      %s906 = smul.addr %s905, 4
      %s907 = scalar_lea.vmem [#allocation4], %s906
      %v908 = vld [vmem:[%s907] sm:$0xf]
      %v909 = vld [vmem:[%s907 + $0x4] sm:$0xf]
      %v910 = vld [vmem:[%s907 + $0x8] sm:$0xf]
      %v911 = vld [vmem:[%s907 + $0xc] sm:$0xf]
      %v912 = vld [vmem:[%s907 + $0x10] sm:$0xf]
      %v913 = vld [vmem:[%s907 + $0x14] sm:$0xf]
      %v914 = vld [vmem:[%s907 + $0x18] sm:$0xf]
      %v915 = vld [vmem:[%s907 + $0x1c] sm:$0xf]
      %v916 = vld [vmem:[%s907 + $0x20] sm:$0xf]
      %v917 = vld [vmem:[%s907 + $0x24] sm:$0xf]
      %v918 = vld [vmem:[%s907 + $0x28] sm:$0xf]
      %v919 = vld [vmem:[%s907 + $0x2c] sm:$0xf]
      %v920 = vld [vmem:[%s907 + $0x30] sm:$0xf]
      %v921 = vld [vmem:[%s907 + $0x34] sm:$0xf]
      %v922 = vld [vmem:[%s907 + $0x38] sm:$0xf]
      %v923 = vld [vmem:[%s907 + $0x3c] sm:$0xf]
      %v924 = vld [vmem:[%s907 + $0x40] sm:$0xf]
      %v925 = vld [vmem:[%s907 + $0x44] sm:$0xf]
      %v926 = vld [vmem:[%s907 + $0x48] sm:$0xf]
      %v927 = vld [vmem:[%s907 + $0x4c] sm:$0xf]
      %v928 = vld [vmem:[%s907 + $0x50] sm:$0xf]
      %v929 = vld [vmem:[%s907 + $0x54] sm:$0xf]
      %v930 = vld [vmem:[%s907 + $0x58] sm:$0xf]
      %v931 = vld [vmem:[%s907 + $0x5c] sm:$0xf]
      %v932 = vld [vmem:[%s907 + $0x60] sm:$0xf]
      %v933 = vld [vmem:[%s907 + $0x64] sm:$0xf]
      %v934 = vld [vmem:[%s907 + $0x68] sm:$0xf]
      %v935 = vld [vmem:[%s907 + $0x6c] sm:$0xf]
      %v936 = vld [vmem:[%s907 + $0x70] sm:$0xf]
      %v937 = vld [vmem:[%s907 + $0x74] sm:$0xf]
      %v938 = vld [vmem:[%s907 + $0x78] sm:$0xf]
      %v939 = vld [vmem:[%s907 + $0x7c] sm:$0xf]
      %v940 = vld [vmem:[%s907 + $0x80] sm:$0xf]
      %v941 = vld [vmem:[%s907 + $0x84] sm:$0xf]
      %v942 = vld [vmem:[%s907 + $0x88] sm:$0xf]
      %v943 = vld [vmem:[%s907 + $0x8c] sm:$0xf]
      %v944 = vld [vmem:[%s907 + $0x90] sm:$0xf]
      %v945 = vld [vmem:[%s907 + $0x94] sm:$0xf]
      %v946 = vld [vmem:[%s907 + $0x98] sm:$0xf]
      %v947 = vld [vmem:[%s907 + $0x9c] sm:$0xf]
      %v948 = vld [vmem:[%s907 + $0xa0] sm:$0xf]
      %v949 = vld [vmem:[%s907 + $0xa4] sm:$0xf]
      %v950 = vld [vmem:[%s907 + $0xa8] sm:$0xf]
      %v951 = vld [vmem:[%s907 + $0xac] sm:$0xf]
      %v952 = vld [vmem:[%s907 + $0xb0] sm:$0xf]
      %v953 = vld [vmem:[%s907 + $0xb4] sm:$0xf]
      %v954 = vld [vmem:[%s907 + $0xb8] sm:$0xf]
      %v955 = vld [vmem:[%s907 + $0xbc] sm:$0xf]
      %v1004 = vunpack.c.l.b16 %v908
      %v1005 = vunpack.c.l.b16 %v909
      %v1006 = vunpack.c.l.b16 %v910
      %v1007 = vunpack.c.l.b16 %v911
      %v1008 = vunpack.c.l.b16 %v912
      %v1009 = vunpack.c.l.b16 %v913
      %v1010 = vunpack.c.l.b16 %v914
      %v1011 = vunpack.c.l.b16 %v915
      %v1012 = vunpack.c.l.b16 %v916
      %v1013 = vunpack.c.l.b16 %v917
      %v1014 = vunpack.c.l.b16 %v918
      %v1015 = vunpack.c.l.b16 %v919
      %v1016 = vunpack.c.l.b16 %v920
      %v1017 = vunpack.c.l.b16 %v921
      %v1018 = vunpack.c.l.b16 %v922
      %v1019 = vunpack.c.l.b16 %v923
      %v1020 = vunpack.c.l.b16 %v924
      %v1021 = vunpack.c.l.b16 %v925
      %v1022 = vunpack.c.l.b16 %v926
      %v1023 = vunpack.c.l.b16 %v927
      %v1024 = vunpack.c.l.b16 %v928
      %v1025 = vunpack.c.l.b16 %v929
      %v1026 = vunpack.c.l.b16 %v930
      %v1027 = vunpack.c.l.b16 %v931
      %v1028 = vunpack.c.l.b16 %v932
      %v1029 = vunpack.c.l.b16 %v933
      %v1030 = vunpack.c.l.b16 %v934
      %v1031 = vunpack.c.l.b16 %v935
      %v1032 = vunpack.c.l.b16 %v936
      %v1033 = vunpack.c.l.b16 %v937
      %v1034 = vunpack.c.l.b16 %v938
      %v1035 = vunpack.c.l.b16 %v939
      %v1036 = vunpack.c.l.b16 %v940
      %v1037 = vunpack.c.l.b16 %v941
      %v1038 = vunpack.c.l.b16 %v942
      %v1039 = vunpack.c.l.b16 %v943
      %v1040 = vunpack.c.l.b16 %v944
      %v1041 = vunpack.c.l.b16 %v945
      %v1042 = vunpack.c.l.b16 %v946
      %v1043 = vunpack.c.l.b16 %v947
      %v1044 = vunpack.c.l.b16 %v948
      %v1045 = vunpack.c.l.b16 %v949
      %v1046 = vunpack.c.l.b16 %v950
      %v1047 = vunpack.c.l.b16 %v951
      %v1048 = vunpack.c.l.b16 %v952
      %v1049 = vunpack.c.l.b16 %v953
      %v1050 = vunpack.c.l.b16 %v954
      %v1051 = vunpack.c.l.b16 %v955
      %v1052 = vpack.c.b16 %v1005, %v1004
      %v1053 = vpack.c.b16 %v1007, %v1006
      %v1054 = vpack.c.b16 %v1009, %v1008
      %v1055 = vpack.c.b16 %v1011, %v1010
      %v1056 = vpack.c.b16 %v1013, %v1012
      %v1057 = vpack.c.b16 %v1015, %v1014
      %v1058 = vpack.c.b16 %v1017, %v1016
      %v1059 = vpack.c.b16 %v1019, %v1018
      %v1060 = vpack.c.b16 %v1021, %v1020
      %v1061 = vpack.c.b16 %v1023, %v1022
      %v1062 = vpack.c.b16 %v1025, %v1024
      %v1063 = vpack.c.b16 %v1027, %v1026
      %v1064 = vpack.c.b16 %v1029, %v1028
      %v1065 = vpack.c.b16 %v1031, %v1030
      %v1066 = vpack.c.b16 %v1033, %v1032
      %v1067 = vpack.c.b16 %v1035, %v1034
      %v1068 = vpack.c.b16 %v1037, %v1036
      %v1069 = vpack.c.b16 %v1039, %v1038
      %v1070 = vpack.c.b16 %v1041, %v1040
      %v1071 = vpack.c.b16 %v1043, %v1042
      %v1072 = vpack.c.b16 %v1045, %v1044
      %v1073 = vpack.c.b16 %v1047, %v1046
      %v1074 = vpack.c.b16 %v1049, %v1048
      %v1075 = vpack.c.b16 %v1051, %v1050
      %1100 = vmatprep.subr.bf16.mxu0 0
      %1101 = vmatpush1.bf16.msra.mxu0 %v1052
      %1102 = vmatprep.subr.bf16.mxu0 0
      %1103 = vmatpush1.bf16.msra.mxu0 %v1053
      %1104 = vmatprep.subr.bf16.mxu0 0
      %1105 = vmatpush1.bf16.msra.mxu0 %v1054
      %1106 = vmatprep.subr.bf16.mxu0 0
      %1107 = vmatpush1.bf16.msra.mxu0 %v1055
      %1108 = vmatprep.subr.bf16.mxu0 0
      %1109 = vmatpush1.bf16.msra.mxu0 %v1056
      %1110 = vmatprep.subr.bf16.mxu0 0
      %1111 = vmatpush1.bf16.msra.mxu0 %v1057
      %1112 = vmatprep.subr.bf16.mxu0 0
      %1113 = vmatpush1.bf16.msra.mxu0 %v1058
      %1114 = vmatprep.subr.bf16.mxu0 0
      %1115 = vmatpush1.bf16.msra.mxu0 %v1059
      %1116 = vmatprep.subr.bf16.mxu0 0
      %1117 = vmatpush1.bf16.msra.mxu0 %v1060
      %1118 = vmatprep.subr.bf16.mxu0 0
      %1119 = vmatpush1.bf16.msra.mxu0 %v1061
      %1120 = vmatprep.subr.bf16.mxu0 0
      %1121 = vmatpush1.bf16.msra.mxu0 %v1062
      %1122 = vmatprep.subr.bf16.mxu0 0
      %1123 = vmatpush1.bf16.msra.mxu0 %v1063
      %1124 = vmatprep.subr.bf16.mxu0 0
      %1125 = vmatpush1.bf16.msra.mxu0 %v1064
      %1126 = vmatprep.subr.bf16.mxu0 0
      %1127 = vmatpush1.bf16.msra.mxu0 %v1065
      %1128 = vmatprep.subr.bf16.mxu0 0
      %1129 = vmatpush1.bf16.msra.mxu0 %v1066
      %1130 = vmatprep.subr.bf16.mxu0 0
      %1131 = vmatpush1.bf16.msra.mxu0 %v1067
      %1132 = vmatprep.mubr.bf16.mxu0 %v857
      %1133 = vmatmul.mubr.bf16.gmra.mrb[0].mxu0 %v856
      %v1134 = vpop.f32.mrb[0].mxu0
      %v1135 = vadd.f32 0.0, %v1134
      %v1136 = vpop.f32.mrb[0].mxu0
      %v1137 = vpop.f32.mrb[0].mxu0
      %v1138 = vadd.f32 0.0, %v1137
      %v1139 = vpop.f32.mrb[0].mxu0
      %1140 = vmatprep.mubr.bf16.mxu0 %v860
      %1141 = vmatmul.mubr.bf16.gmra.mrb[0].mxu0 %v859
      %v1142 = vpop.f32.mrb[0].mxu0
      %v1143 = vadd.f32 0.0, %v1142
      %v1144 = vpop.f32.mrb[0].mxu0
      %v1145 = vpop.f32.mrb[0].mxu0
      %v1146 = vadd.f32 0.0, %v1145
      %v1147 = vpop.f32.mrb[0].mxu0
      %1148 = vmatprep.mubr.bf16.mxu0 %v863
      %1149 = vmatmul.mubr.bf16.gmra.mrb[0].mxu0 %v862
      %v1150 = vpop.f32.mrb[0].mxu0
      %v1151 = vadd.f32 0.0, %v1150
      %v1152 = vpop.f32.mrb[0].mxu0
      %v1153 = vpop.f32.mrb[0].mxu0
      %v1154 = vadd.f32 0.0, %v1153
      %v1155 = vpop.f32.mrb[0].mxu0
      %1156 = vmatprep.mubr.bf16.mxu0 %v866
      %1157 = vmatmul.mubr.bf16.gmra.mrb[0].mxu0 %v865
      %v1158 = vpop.f32.mrb[0].mxu0
      %v1159 = vadd.f32 0.0, %v1158
      %v1160 = vpop.f32.mrb[0].mxu0
      %v1161 = vpop.f32.mrb[0].mxu0
      %v1162 = vadd.f32 0.0, %v1161
      %v1163 = vpop.f32.mrb[0].mxu0
      %1164 = vmatprep.mubr.bf16.mxu0 %v869
      %1165 = vmatmul.mubr.bf16.gmra.mrb[0].mxu0 %v868
      %v1166 = vpop.f32.mrb[0].mxu0
      %v1167 = vadd.f32 0.0, %v1166
      %v1168 = vpop.f32.mrb[0].mxu0
      %v1169 = vpop.f32.mrb[0].mxu0
      %v1170 = vadd.f32 0.0, %v1169
      %v1171 = vpop.f32.mrb[0].mxu0
      %1172 = vmatprep.mubr.bf16.mxu0 %v872
      %1173 = vmatmul.mubr.bf16.gmra.mrb[0].mxu0 %v871
      %v1174 = vpop.f32.mrb[0].mxu0
      %v1175 = vadd.f32 0.0, %v1174
      %v1176 = vpop.f32.mrb[0].mxu0
      %v1177 = vpop.f32.mrb[0].mxu0
      %v1178 = vadd.f32 0.0, %v1177
      %v1179 = vpop.f32.mrb[0].mxu0
      %1180 = vmatprep.mubr.bf16.mxu0 %v875
      %1181 = vmatmul.mubr.bf16.gmra.mrb[0].mxu0 %v874
      %v1182 = vpop.f32.mrb[0].mxu0
      %v1183 = vadd.f32 0.0, %v1182
      %v1184 = vpop.f32.mrb[0].mxu0
      %v1185 = vpop.f32.mrb[0].mxu0
      %v1186 = vadd.f32 0.0, %v1185
      %v1187 = vpop.f32.mrb[0].mxu0
      %1188 = vmatprep.mubr.bf16.mxu0 %v878
      %1189 = vmatmul.mubr.bf16.gmra.mrb[0].mxu0 %v877
      %v1190 = vpop.f32.mrb[0].mxu0
      %v1191 = vadd.f32 0.0, %v1190
      %v1192 = vpop.f32.mrb[0].mxu0
      %v1193 = vpop.f32.mrb[0].mxu0
      %v1194 = vadd.f32 0.0, %v1193
      %v1195 = vpop.f32.mrb[0].mxu0
      %1196 = vmatprep.mubr.bf16.mxu0 %v881
      %1197 = vmatmul.mubr.bf16.gmra.mrb[0].mxu0 %v880
      %v1198 = vpop.f32.mrb[0].mxu0
      %v1199 = vadd.f32 0.0, %v1198
      %v1200 = vpop.f32.mrb[0].mxu0
      %v1201 = vpop.f32.mrb[0].mxu0
      %v1202 = vadd.f32 0.0, %v1201
      %v1203 = vpop.f32.mrb[0].mxu0
      %1204 = vmatprep.mubr.bf16.mxu0 %v884
      %1205 = vmatmul.mubr.bf16.gmra.mrb[0].mxu0 %v883
      %v1206 = vpop.f32.mrb[0].mxu0
      %v1207 = vadd.f32 0.0, %v1206
      %v1208 = vpop.f32.mrb[0].mxu0
      %v1209 = vpop.f32.mrb[0].mxu0
      %v1210 = vadd.f32 0.0, %v1209
      %v1211 = vpop.f32.mrb[0].mxu0
      %1212 = vmatprep.mubr.bf16.mxu0 %v887
      %1213 = vmatmul.mubr.bf16.gmra.mrb[0].mxu0 %v886
      %v1214 = vpop.f32.mrb[0].mxu0
      %v1215 = vadd.f32 0.0, %v1214
      %v1216 = vpop.f32.mrb[0].mxu0
      %v1217 = vpop.f32.mrb[0].mxu0
      %v1218 = vadd.f32 0.0, %v1217
      %v1219 = vpop.f32.mrb[0].mxu0
      %1220 = vmatprep.mubr.bf16.mxu0 %v890
      %1221 = vmatmul.mubr.bf16.gmra.mrb[0].mxu0 %v889
      %v1222 = vpop.f32.mrb[0].mxu0
      %v1223 = vadd.f32 0.0, %v1222
      %v1224 = vpop.f32.mrb[0].mxu0
      %v1225 = vpop.f32.mrb[0].mxu0
      %v1226 = vadd.f32 0.0, %v1225
      %v1227 = vpop.f32.mrb[0].mxu0
      %1228 = vmatprep.mubr.bf16.mxu0 %v893
      %1229 = vmatmul.mubr.bf16.gmra.mrb[0].mxu0 %v892
      %v1230 = vpop.f32.mrb[0].mxu0
      %v1231 = vadd.f32 0.0, %v1230
      %v1232 = vpop.f32.mrb[0].mxu0
      %v1233 = vpop.f32.mrb[0].mxu0
      %v1234 = vadd.f32 0.0, %v1233
      %v1235 = vpop.f32.mrb[0].mxu0
      %1236 = vmatprep.mubr.bf16.mxu0 %v896
      %1237 = vmatmul.mubr.bf16.gmra.mrb[0].mxu0 %v895
      %v1238 = vpop.f32.mrb[0].mxu0
      %v1239 = vadd.f32 0.0, %v1238
      %v1240 = vpop.f32.mrb[0].mxu0
      %v1241 = vpop.f32.mrb[0].mxu0
      %v1242 = vadd.f32 0.0, %v1241
      %v1243 = vpop.f32.mrb[0].mxu0
      %1244 = vmatprep.mubr.bf16.mxu0 %v899
      %1245 = vmatmul.mubr.bf16.gmra.mrb[0].mxu0 %v898
      %v1246 = vpop.f32.mrb[0].mxu0
      %v1247 = vadd.f32 0.0, %v1246
      %v1248 = vpop.f32.mrb[0].mxu0
      %v1249 = vpop.f32.mrb[0].mxu0
      %v1250 = vadd.f32 0.0, %v1249
      %v1251 = vpop.f32.mrb[0].mxu0
      %1252 = vmatprep.mubr.bf16.mxu0 %v902
      %1253 = vmatmul.mubr.bf16.gmra.mrb[0].mxu0 %v901
      %v1254 = vpop.f32.mrb[0].mxu0
      %v1255 = vadd.f32 0.0, %v1254
      %v1256 = vpop.f32.mrb[0].mxu0
      %v1257 = vpop.f32.mrb[0].mxu0
      %v1258 = vadd.f32 0.0, %v1257
      %v1259 = vpop.f32.mrb[0].mxu0
      %1260 = vdwg.mxu0
      %1261 = vmatprep.subr.bf16.mxu0 0
      %1262 = vmatpush1.bf16.msra.mxu0 %v1068
      %1263 = vmatprep.subr.bf16.mxu0 0
      %1264 = vmatpush1.bf16.msra.mxu0 %v1069
      %1265 = vmatprep.subr.bf16.mxu0 0
      %1266 = vmatpush1.bf16.msra.mxu0 %v1070
      %1267 = vmatprep.subr.bf16.mxu0 0
      %1268 = vmatpush1.bf16.msra.mxu0 %v1071
      %1269 = vmatprep.subr.bf16.mxu0 0
      %1270 = vmatpush1.bf16.msra.mxu0 %v1072
      %1271 = vmatprep.subr.bf16.mxu0 0
      %1272 = vmatpush1.bf16.msra.mxu0 %v1073
      %1273 = vmatprep.subr.bf16.mxu0 0
      %1274 = vmatpush1.bf16.msra.mxu0 %v1074
      %1275 = vmatprep.subr.bf16.mxu0 0
      %1276 = vmatpush1.bf16.msra.mxu0 %v1075
      %1277 = vmatprep.subr.bf16.mxu0 0
      %1278 = vmatpush1.bf16.msra.mxu0 0
      %1279 = vmatprep.subr.bf16.mxu0 0
      %1280 = vmatpush1.bf16.msra.mxu0 0
      %1281 = vmatprep.subr.bf16.mxu0 0
      %1282 = vmatpush1.bf16.msra.mxu0 0
      %1283 = vmatprep.subr.bf16.mxu0 0
      %1284 = vmatpush1.bf16.msra.mxu0 0
      %1285 = vmatprep.subr.bf16.mxu0 0
      %1286 = vmatpush1.bf16.msra.mxu0 0
      %1287 = vmatprep.subr.bf16.mxu0 0
      %1288 = vmatpush1.bf16.msra.mxu0 0
      %1289 = vmatprep.subr.bf16.mxu0 0
      %1290 = vmatpush1.bf16.msra.mxu0 0
      %1291 = vmatprep.subr.bf16.mxu0 0
      %1292 = vmatpush1.bf16.msra.mxu0 0
      %1293 = vmatprep.mubr.bf16.mxu0 0
      %1294 = vmatmul.mubr.bf16.gmra.mrb[0].mxu0 %v858
      %v1295 = vpop.f32.mrb[0].mxu0
      %v1296 = vadd.f32 %v1135, %v1295
      %v1297 = vpop.f32.mrb[0].mxu0
      %v1298 = vpop.f32.mrb[0].mxu0
      %v1299 = vadd.f32 %v1138, %v1298
      %v1300 = vpop.f32.mrb[0].mxu0
      %1301 = vmatprep.mubr.bf16.mxu0 0
      %1302 = vmatmul.mubr.bf16.gmra.mrb[0].mxu0 %v861
      %v1303 = vpop.f32.mrb[0].mxu0
      %v1304 = vadd.f32 %v1143, %v1303
      %v1305 = vpop.f32.mrb[0].mxu0
      %v1306 = vpop.f32.mrb[0].mxu0
      %v1307 = vadd.f32 %v1146, %v1306
      %v1308 = vpop.f32.mrb[0].mxu0
      %1309 = vmatprep.mubr.bf16.mxu0 0
      %1310 = vmatmul.mubr.bf16.gmra.mrb[0].mxu0 %v864
      %v1311 = vpop.f32.mrb[0].mxu0
      %v1312 = vadd.f32 %v1151, %v1311
      %v1313 = vpop.f32.mrb[0].mxu0
      %v1314 = vpop.f32.mrb[0].mxu0
      %v1315 = vadd.f32 %v1154, %v1314
      %v1316 = vpop.f32.mrb[0].mxu0
      %1317 = vmatprep.mubr.bf16.mxu0 0
      %1318 = vmatmul.mubr.bf16.gmra.mrb[0].mxu0 %v867
      %v1319 = vpop.f32.mrb[0].mxu0
      %v1320 = vadd.f32 %v1159, %v1319
      %v1321 = vpop.f32.mrb[0].mxu0
      %v1322 = vpop.f32.mrb[0].mxu0
      %v1323 = vadd.f32 %v1162, %v1322
      %v1324 = vpop.f32.mrb[0].mxu0
      %1325 = vmatprep.mubr.bf16.mxu0 0
      %1326 = vmatmul.mubr.bf16.gmra.mrb[0].mxu0 %v870
      %v1327 = vpop.f32.mrb[0].mxu0
      %v1328 = vadd.f32 %v1167, %v1327
      %v1329 = vpop.f32.mrb[0].mxu0
      %v1330 = vpop.f32.mrb[0].mxu0
      %v1331 = vadd.f32 %v1170, %v1330
      %v1332 = vpop.f32.mrb[0].mxu0
      %1333 = vmatprep.mubr.bf16.mxu0 0
      %1334 = vmatmul.mubr.bf16.gmra.mrb[0].mxu0 %v873
      %v1335 = vpop.f32.mrb[0].mxu0
      %v1336 = vadd.f32 %v1175, %v1335
      %v1337 = vpop.f32.mrb[0].mxu0
      %v1338 = vpop.f32.mrb[0].mxu0
      %v1339 = vadd.f32 %v1178, %v1338
      %v1340 = vpop.f32.mrb[0].mxu0
      %1341 = vmatprep.mubr.bf16.mxu0 0
      %1342 = vmatmul.mubr.bf16.gmra.mrb[0].mxu0 %v876
      %v1343 = vpop.f32.mrb[0].mxu0
      %v1344 = vadd.f32 %v1183, %v1343
      %v1345 = vpop.f32.mrb[0].mxu0
      %v1346 = vpop.f32.mrb[0].mxu0
      %v1347 = vadd.f32 %v1186, %v1346
      %v1348 = vpop.f32.mrb[0].mxu0
      %1349 = vmatprep.mubr.bf16.mxu0 0
      %1350 = vmatmul.mubr.bf16.gmra.mrb[0].mxu0 %v879
      %v1351 = vpop.f32.mrb[0].mxu0
      %v1352 = vadd.f32 %v1191, %v1351
      %v1353 = vpop.f32.mrb[0].mxu0
      %v1354 = vpop.f32.mrb[0].mxu0
      %v1355 = vadd.f32 %v1194, %v1354
      %v1356 = vpop.f32.mrb[0].mxu0
      %1357 = vmatprep.mubr.bf16.mxu0 0
      %1358 = vmatmul.mubr.bf16.gmra.mrb[0].mxu0 %v882
      %v1359 = vpop.f32.mrb[0].mxu0
      %v1360 = vadd.f32 %v1199, %v1359
      %v1361 = vpop.f32.mrb[0].mxu0
      %v1362 = vpop.f32.mrb[0].mxu0
      %v1363 = vadd.f32 %v1202, %v1362
      %v1364 = vpop.f32.mrb[0].mxu0
      %1365 = vmatprep.mubr.bf16.mxu0 0
      %1366 = vmatmul.mubr.bf16.gmra.mrb[0].mxu0 %v885
      %v1367 = vpop.f32.mrb[0].mxu0
      %v1368 = vadd.f32 %v1207, %v1367
      %v1369 = vpop.f32.mrb[0].mxu0
      %v1370 = vpop.f32.mrb[0].mxu0
      %v1371 = vadd.f32 %v1210, %v1370
      %v1372 = vpop.f32.mrb[0].mxu0
      %1373 = vmatprep.mubr.bf16.mxu0 0
      %1374 = vmatmul.mubr.bf16.gmra.mrb[0].mxu0 %v888
      %v1375 = vpop.f32.mrb[0].mxu0
      %v1376 = vadd.f32 %v1215, %v1375
      %v1377 = vpop.f32.mrb[0].mxu0
      %v1378 = vpop.f32.mrb[0].mxu0
      %v1379 = vadd.f32 %v1218, %v1378
      %v1380 = vpop.f32.mrb[0].mxu0
      %1381 = vmatprep.mubr.bf16.mxu0 0
      %1382 = vmatmul.mubr.bf16.gmra.mrb[0].mxu0 %v891
      %v1383 = vpop.f32.mrb[0].mxu0
      %v1384 = vadd.f32 %v1223, %v1383
      %v1385 = vpop.f32.mrb[0].mxu0
      %v1386 = vpop.f32.mrb[0].mxu0
      %v1387 = vadd.f32 %v1226, %v1386
      %v1388 = vpop.f32.mrb[0].mxu0
      %1389 = vmatprep.mubr.bf16.mxu0 0
      %1390 = vmatmul.mubr.bf16.gmra.mrb[0].mxu0 %v894
      %v1391 = vpop.f32.mrb[0].mxu0
      %v1392 = vadd.f32 %v1231, %v1391
      %v1393 = vpop.f32.mrb[0].mxu0
      %v1394 = vpop.f32.mrb[0].mxu0
      %v1395 = vadd.f32 %v1234, %v1394
      %v1396 = vpop.f32.mrb[0].mxu0
      %1397 = vmatprep.mubr.bf16.mxu0 0
      %1398 = vmatmul.mubr.bf16.gmra.mrb[0].mxu0 %v897
      %v1399 = vpop.f32.mrb[0].mxu0
      %v1400 = vadd.f32 %v1239, %v1399
      %v1401 = vpop.f32.mrb[0].mxu0
      %v1402 = vpop.f32.mrb[0].mxu0
      %v1403 = vadd.f32 %v1242, %v1402
      %v1404 = vpop.f32.mrb[0].mxu0
      %1405 = vmatprep.mubr.bf16.mxu0 0
      %1406 = vmatmul.mubr.bf16.gmra.mrb[0].mxu0 %v900
      %v1407 = vpop.f32.mrb[0].mxu0
      %v1408 = vadd.f32 %v1247, %v1407
      %v1409 = vpop.f32.mrb[0].mxu0
      %v1410 = vpop.f32.mrb[0].mxu0
      %v1411 = vadd.f32 %v1250, %v1410
      %v1412 = vpop.f32.mrb[0].mxu0
      %1413 = vmatprep.mubr.bf16.mxu0 0
      %1414 = vmatmul.mubr.bf16.gmra.mrb[0].mxu0 %v903
      %v1415 = vpop.f32.mrb[0].mxu0
      %v1416 = vadd.f32 %v1255, %v1415
      %v1417 = vpop.f32.mrb[0].mxu0
      %v1418 = vpop.f32.mrb[0].mxu0
      %v1419 = vadd.f32 %v1258, %v1418
      %v1420 = vpop.f32.mrb[0].mxu0
      %1421 = vdwg.mxu0
      %v1470 = vunpack.c.l.b16 %v807
      %v1471 = vunpack.c.l.b16 %v808
      %v1472 = vunpack.c.l.b16 %v809
      %v1473 = vunpack.c.l.b16 %v810
      %v1474 = vunpack.c.l.b16 %v811
      %v1475 = vunpack.c.l.b16 %v812
      %v1476 = vunpack.c.l.b16 %v813
      %v1477 = vunpack.c.l.b16 %v814
      %v1478 = vunpack.c.l.b16 %v815
      %v1479 = vunpack.c.l.b16 %v816
      %v1480 = vunpack.c.l.b16 %v817
      %v1481 = vunpack.c.l.b16 %v818
      %v1482 = vunpack.c.l.b16 %v819
      %v1483 = vunpack.c.l.b16 %v820
      %v1484 = vunpack.c.l.b16 %v821
      %v1485 = vunpack.c.l.b16 %v822
      %v1486 = vunpack.c.l.b16 %v823
      %v1487 = vunpack.c.l.b16 %v824
      %v1488 = vunpack.c.l.b16 %v825
      %v1489 = vunpack.c.l.b16 %v826
      %v1490 = vunpack.c.l.b16 %v827
      %v1491 = vunpack.c.l.b16 %v828
      %v1492 = vunpack.c.l.b16 %v829
      %v1493 = vunpack.c.l.b16 %v830
      %v1494 = vunpack.c.l.b16 %v831
      %v1495 = vunpack.c.l.b16 %v832
      %v1496 = vunpack.c.l.b16 %v833
      %v1497 = vunpack.c.l.b16 %v834
      %v1498 = vunpack.c.l.b16 %v835
      %v1499 = vunpack.c.l.b16 %v836
      %v1500 = vunpack.c.l.b16 %v837
      %v1501 = vunpack.c.l.b16 %v838
      %v1502 = vunpack.c.l.b16 %v839
      %v1503 = vunpack.c.l.b16 %v840
      %v1504 = vunpack.c.l.b16 %v841
      %v1505 = vunpack.c.l.b16 %v842
      %v1506 = vunpack.c.l.b16 %v843
      %v1507 = vunpack.c.l.b16 %v844
      %v1508 = vunpack.c.l.b16 %v845
      %v1509 = vunpack.c.l.b16 %v846
      %v1510 = vunpack.c.l.b16 %v847
      %v1511 = vunpack.c.l.b16 %v848
      %v1512 = vunpack.c.l.b16 %v849
      %v1513 = vunpack.c.l.b16 %v850
      %v1514 = vunpack.c.l.b16 %v851
      %v1515 = vunpack.c.l.b16 %v852
      %v1516 = vunpack.c.l.b16 %v853
      %v1517 = vunpack.c.l.b16 %v854
      %v1518 = vpack.c.b16 %v1471, %v1470
      %v1519 = vpack.c.b16 %v1473, %v1472
      %v1520 = vpack.c.b16 %v1475, %v1474
      %v1521 = vpack.c.b16 %v1477, %v1476
      %v1522 = vpack.c.b16 %v1479, %v1478
      %v1523 = vpack.c.b16 %v1481, %v1480
      %v1524 = vpack.c.b16 %v1483, %v1482
      %v1525 = vpack.c.b16 %v1485, %v1484
      %v1526 = vpack.c.b16 %v1487, %v1486
      %v1527 = vpack.c.b16 %v1489, %v1488
      %v1528 = vpack.c.b16 %v1491, %v1490
      %v1529 = vpack.c.b16 %v1493, %v1492
      %v1530 = vpack.c.b16 %v1495, %v1494
      %v1531 = vpack.c.b16 %v1497, %v1496
      %v1532 = vpack.c.b16 %v1499, %v1498
      %v1533 = vpack.c.b16 %v1501, %v1500
      %v1534 = vpack.c.b16 %v1503, %v1502
      %v1535 = vpack.c.b16 %v1505, %v1504
      %v1536 = vpack.c.b16 %v1507, %v1506
      %v1537 = vpack.c.b16 %v1509, %v1508
      %v1538 = vpack.c.b16 %v1511, %v1510
      %v1539 = vpack.c.b16 %v1513, %v1512
      %v1540 = vpack.c.b16 %v1515, %v1514
      %v1541 = vpack.c.b16 %v1517, %v1516
      %1566 = vmatprep.subr.bf16.mxu0 0
      %1567 = vmatpush1.bf16.msra.mxu0 %v1518
      %1568 = vmatprep.subr.bf16.mxu0 0
      %1569 = vmatpush1.bf16.msra.mxu0 %v1519
      %1570 = vmatprep.subr.bf16.mxu0 0
      %1571 = vmatpush1.bf16.msra.mxu0 %v1520
      %1572 = vmatprep.subr.bf16.mxu0 0
      %1573 = vmatpush1.bf16.msra.mxu0 %v1521
      %1574 = vmatprep.subr.bf16.mxu0 0
      %1575 = vmatpush1.bf16.msra.mxu0 %v1522
      %1576 = vmatprep.subr.bf16.mxu0 0
      %1577 = vmatpush1.bf16.msra.mxu0 %v1523
      %1578 = vmatprep.subr.bf16.mxu0 0
      %1579 = vmatpush1.bf16.msra.mxu0 %v1524
      %1580 = vmatprep.subr.bf16.mxu0 0
      %1581 = vmatpush1.bf16.msra.mxu0 %v1525
      %1582 = vmatprep.subr.bf16.mxu0 0
      %1583 = vmatpush1.bf16.msra.mxu0 %v1526
      %1584 = vmatprep.subr.bf16.mxu0 0
      %1585 = vmatpush1.bf16.msra.mxu0 %v1527
      %1586 = vmatprep.subr.bf16.mxu0 0
      %1587 = vmatpush1.bf16.msra.mxu0 %v1528
      %1588 = vmatprep.subr.bf16.mxu0 0
      %1589 = vmatpush1.bf16.msra.mxu0 %v1529
      %1590 = vmatprep.subr.bf16.mxu0 0
      %1591 = vmatpush1.bf16.msra.mxu0 %v1530
      %1592 = vmatprep.subr.bf16.mxu0 0
      %1593 = vmatpush1.bf16.msra.mxu0 %v1531
      %1594 = vmatprep.subr.bf16.mxu0 0
      %1595 = vmatpush1.bf16.msra.mxu0 %v1532
      %1596 = vmatprep.subr.bf16.mxu0 0
      %1597 = vmatpush1.bf16.msra.mxu0 %v1533
      %1598 = vmatprep.mubr.bf16.mxu0 %v756
      %1599 = vmatmul.mubr.bf16.gmra.mrb[0].mxu0 %v755
      %v1600 = vpop.f32.mrb[0].mxu0
      %v1601 = vadd.f32 %v1296, %v1600
      %v1602 = vpop.f32.mrb[0].mxu0
      %v1603 = vpop.f32.mrb[0].mxu0
      %v1604 = vadd.f32 %v1299, %v1603
      %v1605 = vpop.f32.mrb[0].mxu0
      %1606 = vmatprep.mubr.bf16.mxu0 %v759
      %1607 = vmatmul.mubr.bf16.gmra.mrb[0].mxu0 %v758
      %v1608 = vpop.f32.mrb[0].mxu0
      %v1609 = vadd.f32 %v1304, %v1608
      %v1610 = vpop.f32.mrb[0].mxu0
      %v1611 = vpop.f32.mrb[0].mxu0
      %v1612 = vadd.f32 %v1307, %v1611
      %v1613 = vpop.f32.mrb[0].mxu0
      %1614 = vmatprep.mubr.bf16.mxu0 %v762
      %1615 = vmatmul.mubr.bf16.gmra.mrb[0].mxu0 %v761
      %v1616 = vpop.f32.mrb[0].mxu0
      %v1617 = vadd.f32 %v1312, %v1616
      %v1618 = vpop.f32.mrb[0].mxu0
      %v1619 = vpop.f32.mrb[0].mxu0
      %v1620 = vadd.f32 %v1315, %v1619
      %v1621 = vpop.f32.mrb[0].mxu0
      %1622 = vmatprep.mubr.bf16.mxu0 %v765
      %1623 = vmatmul.mubr.bf16.gmra.mrb[0].mxu0 %v764
      %v1624 = vpop.f32.mrb[0].mxu0
      %v1625 = vadd.f32 %v1320, %v1624
      %v1626 = vpop.f32.mrb[0].mxu0
      %v1627 = vpop.f32.mrb[0].mxu0
      %v1628 = vadd.f32 %v1323, %v1627
      %v1629 = vpop.f32.mrb[0].mxu0
      %1630 = vmatprep.mubr.bf16.mxu0 %v768
      %1631 = vmatmul.mubr.bf16.gmra.mrb[0].mxu0 %v767
      %v1632 = vpop.f32.mrb[0].mxu0
      %v1633 = vadd.f32 %v1328, %v1632
      %v1634 = vpop.f32.mrb[0].mxu0
      %v1635 = vpop.f32.mrb[0].mxu0
      %v1636 = vadd.f32 %v1331, %v1635
      %v1637 = vpop.f32.mrb[0].mxu0
      %1638 = vmatprep.mubr.bf16.mxu0 %v771
      %1639 = vmatmul.mubr.bf16.gmra.mrb[0].mxu0 %v770
      %v1640 = vpop.f32.mrb[0].mxu0
      %v1641 = vadd.f32 %v1336, %v1640
      %v1642 = vpop.f32.mrb[0].mxu0
      %v1643 = vpop.f32.mrb[0].mxu0
      %v1644 = vadd.f32 %v1339, %v1643
      %v1645 = vpop.f32.mrb[0].mxu0
      %1646 = vmatprep.mubr.bf16.mxu0 %v774
      %1647 = vmatmul.mubr.bf16.gmra.mrb[0].mxu0 %v773
      %v1648 = vpop.f32.mrb[0].mxu0
      %v1649 = vadd.f32 %v1344, %v1648
      %v1650 = vpop.f32.mrb[0].mxu0
      %v1651 = vpop.f32.mrb[0].mxu0
      %v1652 = vadd.f32 %v1347, %v1651
      %v1653 = vpop.f32.mrb[0].mxu0
      %1654 = vmatprep.mubr.bf16.mxu0 %v777
      %1655 = vmatmul.mubr.bf16.gmra.mrb[0].mxu0 %v776
      %v1656 = vpop.f32.mrb[0].mxu0
      %v1657 = vadd.f32 %v1352, %v1656
      %v1658 = vpop.f32.mrb[0].mxu0
      %v1659 = vpop.f32.mrb[0].mxu0
      %v1660 = vadd.f32 %v1355, %v1659
      %v1661 = vpop.f32.mrb[0].mxu0
      %1662 = vmatprep.mubr.bf16.mxu0 %v780
      %1663 = vmatmul.mubr.bf16.gmra.mrb[0].mxu0 %v779
      %v1664 = vpop.f32.mrb[0].mxu0
      %v1665 = vadd.f32 %v1360, %v1664
      %v1666 = vpop.f32.mrb[0].mxu0
      %v1667 = vpop.f32.mrb[0].mxu0
      %v1668 = vadd.f32 %v1363, %v1667
      %v1669 = vpop.f32.mrb[0].mxu0
      %1670 = vmatprep.mubr.bf16.mxu0 %v783
      %1671 = vmatmul.mubr.bf16.gmra.mrb[0].mxu0 %v782
      %v1672 = vpop.f32.mrb[0].mxu0
      %v1673 = vadd.f32 %v1368, %v1672
      %v1674 = vpop.f32.mrb[0].mxu0
      %v1675 = vpop.f32.mrb[0].mxu0
      %v1676 = vadd.f32 %v1371, %v1675
      %v1677 = vpop.f32.mrb[0].mxu0
      %1678 = vmatprep.mubr.bf16.mxu0 %v786
      %1679 = vmatmul.mubr.bf16.gmra.mrb[0].mxu0 %v785
      %v1680 = vpop.f32.mrb[0].mxu0
      %v1681 = vadd.f32 %v1376, %v1680
      %v1682 = vpop.f32.mrb[0].mxu0
      %v1683 = vpop.f32.mrb[0].mxu0
      %v1684 = vadd.f32 %v1379, %v1683
      %v1685 = vpop.f32.mrb[0].mxu0
      %1686 = vmatprep.mubr.bf16.mxu0 %v789
      %1687 = vmatmul.mubr.bf16.gmra.mrb[0].mxu0 %v788
      %v1688 = vpop.f32.mrb[0].mxu0
      %v1689 = vadd.f32 %v1384, %v1688
      %v1690 = vpop.f32.mrb[0].mxu0
      %v1691 = vpop.f32.mrb[0].mxu0
      %v1692 = vadd.f32 %v1387, %v1691
      %v1693 = vpop.f32.mrb[0].mxu0
      %1694 = vmatprep.mubr.bf16.mxu0 %v792
      %1695 = vmatmul.mubr.bf16.gmra.mrb[0].mxu0 %v791
      %v1696 = vpop.f32.mrb[0].mxu0
      %v1697 = vadd.f32 %v1392, %v1696
      %v1698 = vpop.f32.mrb[0].mxu0
      %v1699 = vpop.f32.mrb[0].mxu0
      %v1700 = vadd.f32 %v1395, %v1699
      %v1701 = vpop.f32.mrb[0].mxu0
      %1702 = vmatprep.mubr.bf16.mxu0 %v795
      %1703 = vmatmul.mubr.bf16.gmra.mrb[0].mxu0 %v794
      %v1704 = vpop.f32.mrb[0].mxu0
      %v1705 = vadd.f32 %v1400, %v1704
      %v1706 = vpop.f32.mrb[0].mxu0
      %v1707 = vpop.f32.mrb[0].mxu0
      %v1708 = vadd.f32 %v1403, %v1707
      %v1709 = vpop.f32.mrb[0].mxu0
      %1710 = vmatprep.mubr.bf16.mxu0 %v798
      %1711 = vmatmul.mubr.bf16.gmra.mrb[0].mxu0 %v797
      %v1712 = vpop.f32.mrb[0].mxu0
      %v1713 = vadd.f32 %v1408, %v1712
      %v1714 = vpop.f32.mrb[0].mxu0
      %v1715 = vpop.f32.mrb[0].mxu0
      %v1716 = vadd.f32 %v1411, %v1715
      %v1717 = vpop.f32.mrb[0].mxu0
      %1718 = vmatprep.mubr.bf16.mxu0 %v801
      %1719 = vmatmul.mubr.bf16.gmra.mrb[0].mxu0 %v800
      %v1720 = vpop.f32.mrb[0].mxu0
      %v1721 = vadd.f32 %v1416, %v1720
      %v1722 = vpop.f32.mrb[0].mxu0
      %v1723 = vpop.f32.mrb[0].mxu0
      %v1724 = vadd.f32 %v1419, %v1723
      %v1725 = vpop.f32.mrb[0].mxu0
      %1726 = vdwg.mxu0
      %1727 = vmatprep.subr.bf16.mxu0 0
      %1728 = vmatpush1.bf16.msra.mxu0 %v1534
      %1729 = vmatprep.subr.bf16.mxu0 0
      %1730 = vmatpush1.bf16.msra.mxu0 %v1535
      %1731 = vmatprep.subr.bf16.mxu0 0
      %1732 = vmatpush1.bf16.msra.mxu0 %v1536
      %1733 = vmatprep.subr.bf16.mxu0 0
      %1734 = vmatpush1.bf16.msra.mxu0 %v1537
      %1735 = vmatprep.subr.bf16.mxu0 0
      %1736 = vmatpush1.bf16.msra.mxu0 %v1538
      %1737 = vmatprep.subr.bf16.mxu0 0
      %1738 = vmatpush1.bf16.msra.mxu0 %v1539
      %1739 = vmatprep.subr.bf16.mxu0 0
      %1740 = vmatpush1.bf16.msra.mxu0 %v1540
      %1741 = vmatprep.subr.bf16.mxu0 0
      %1742 = vmatpush1.bf16.msra.mxu0 %v1541
      %1743 = vmatprep.subr.bf16.mxu0 0
      %1744 = vmatpush1.bf16.msra.mxu0 0
      %1745 = vmatprep.subr.bf16.mxu0 0
      %1746 = vmatpush1.bf16.msra.mxu0 0
      %1747 = vmatprep.subr.bf16.mxu0 0
      %1748 = vmatpush1.bf16.msra.mxu0 0
      %1749 = vmatprep.subr.bf16.mxu0 0
      %1750 = vmatpush1.bf16.msra.mxu0 0
      %1751 = vmatprep.subr.bf16.mxu0 0
      %1752 = vmatpush1.bf16.msra.mxu0 0
      %1753 = vmatprep.subr.bf16.mxu0 0
      %1754 = vmatpush1.bf16.msra.mxu0 0
      %1755 = vmatprep.subr.bf16.mxu0 0
      %1756 = vmatpush1.bf16.msra.mxu0 0
      %1757 = vmatprep.subr.bf16.mxu0 0
      %1758 = vmatpush1.bf16.msra.mxu0 0
      %1759 = vmatprep.mubr.bf16.mxu0 0
      %1760 = vmatmul.mubr.bf16.gmra.mrb[0].mxu0 %v757
      %v1761 = vpop.f32.mrb[0].mxu0
      %v1762 = vadd.f32 %v1601, %v1761
      %v1763 = vpop.f32.mrb[0].mxu0
      %v1764 = vpop.f32.mrb[0].mxu0
      %v1765 = vadd.f32 %v1604, %v1764
      %v1766 = vpop.f32.mrb[0].mxu0
      %1767 = vmatprep.mubr.bf16.mxu0 0
      %1768 = vmatmul.mubr.bf16.gmra.mrb[0].mxu0 %v760
      %v1769 = vpop.f32.mrb[0].mxu0
      %v1770 = vadd.f32 %v1609, %v1769
      %v1771 = vpop.f32.mrb[0].mxu0
      %v1772 = vpop.f32.mrb[0].mxu0
      %v1773 = vadd.f32 %v1612, %v1772
      %v1774 = vpop.f32.mrb[0].mxu0
      %1775 = vmatprep.mubr.bf16.mxu0 0
      %1776 = vmatmul.mubr.bf16.gmra.mrb[0].mxu0 %v763
      %v1777 = vpop.f32.mrb[0].mxu0
      %v1778 = vadd.f32 %v1617, %v1777
      %v1779 = vpop.f32.mrb[0].mxu0
      %v1780 = vpop.f32.mrb[0].mxu0
      %v1781 = vadd.f32 %v1620, %v1780
      %v1782 = vpop.f32.mrb[0].mxu0
      %1783 = vmatprep.mubr.bf16.mxu0 0
      %1784 = vmatmul.mubr.bf16.gmra.mrb[0].mxu0 %v766
      %v1785 = vpop.f32.mrb[0].mxu0
      %v1786 = vadd.f32 %v1625, %v1785
      %v1787 = vpop.f32.mrb[0].mxu0
      %v1788 = vpop.f32.mrb[0].mxu0
      %v1789 = vadd.f32 %v1628, %v1788
      %v1790 = vpop.f32.mrb[0].mxu0
      %1791 = vmatprep.mubr.bf16.mxu0 0
      %1792 = vmatmul.mubr.bf16.gmra.mrb[0].mxu0 %v769
      %v1793 = vpop.f32.mrb[0].mxu0
      %v1794 = vadd.f32 %v1633, %v1793
      %v1795 = vpop.f32.mrb[0].mxu0
      %v1796 = vpop.f32.mrb[0].mxu0
      %v1797 = vadd.f32 %v1636, %v1796
      %v1798 = vpop.f32.mrb[0].mxu0
      %1799 = vmatprep.mubr.bf16.mxu0 0
      %1800 = vmatmul.mubr.bf16.gmra.mrb[0].mxu0 %v772
      %v1801 = vpop.f32.mrb[0].mxu0
      %v1802 = vadd.f32 %v1641, %v1801
      %v1803 = vpop.f32.mrb[0].mxu0
      %v1804 = vpop.f32.mrb[0].mxu0
      %v1805 = vadd.f32 %v1644, %v1804
      %v1806 = vpop.f32.mrb[0].mxu0
      %1807 = vmatprep.mubr.bf16.mxu0 0
      %1808 = vmatmul.mubr.bf16.gmra.mrb[0].mxu0 %v775
      %v1809 = vpop.f32.mrb[0].mxu0
      %v1810 = vadd.f32 %v1649, %v1809
      %v1811 = vpop.f32.mrb[0].mxu0
      %v1812 = vpop.f32.mrb[0].mxu0
      %v1813 = vadd.f32 %v1652, %v1812
      %v1814 = vpop.f32.mrb[0].mxu0
      %1815 = vmatprep.mubr.bf16.mxu0 0
      %1816 = vmatmul.mubr.bf16.gmra.mrb[0].mxu0 %v778
      %v1817 = vpop.f32.mrb[0].mxu0
      %v1818 = vadd.f32 %v1657, %v1817
      %v1819 = vpop.f32.mrb[0].mxu0
      %v1820 = vpop.f32.mrb[0].mxu0
      %v1821 = vadd.f32 %v1660, %v1820
      %v1822 = vpop.f32.mrb[0].mxu0
      %1823 = vmatprep.mubr.bf16.mxu0 0
      %1824 = vmatmul.mubr.bf16.gmra.mrb[0].mxu0 %v781
      %v1825 = vpop.f32.mrb[0].mxu0
      %v1826 = vadd.f32 %v1665, %v1825
      %v1827 = vpop.f32.mrb[0].mxu0
      %v1828 = vpop.f32.mrb[0].mxu0
      %v1829 = vadd.f32 %v1668, %v1828
      %v1830 = vpop.f32.mrb[0].mxu0
      %1831 = vmatprep.mubr.bf16.mxu0 0
      %1832 = vmatmul.mubr.bf16.gmra.mrb[0].mxu0 %v784
      %v1833 = vpop.f32.mrb[0].mxu0
      %v1834 = vadd.f32 %v1673, %v1833
      %v1835 = vpop.f32.mrb[0].mxu0
      %v1836 = vpop.f32.mrb[0].mxu0
      %v1837 = vadd.f32 %v1676, %v1836
      %v1838 = vpop.f32.mrb[0].mxu0
      %1839 = vmatprep.mubr.bf16.mxu0 0
      %1840 = vmatmul.mubr.bf16.gmra.mrb[0].mxu0 %v787
      %v1841 = vpop.f32.mrb[0].mxu0
      %v1842 = vadd.f32 %v1681, %v1841
      %v1843 = vpop.f32.mrb[0].mxu0
      %v1844 = vpop.f32.mrb[0].mxu0
      %v1845 = vadd.f32 %v1684, %v1844
      %v1846 = vpop.f32.mrb[0].mxu0
      %1847 = vmatprep.mubr.bf16.mxu0 0
      %1848 = vmatmul.mubr.bf16.gmra.mrb[0].mxu0 %v790
      %v1849 = vpop.f32.mrb[0].mxu0
      %v1850 = vadd.f32 %v1689, %v1849
      %v1851 = vpop.f32.mrb[0].mxu0
      %v1852 = vpop.f32.mrb[0].mxu0
      %v1853 = vadd.f32 %v1692, %v1852
      %v1854 = vpop.f32.mrb[0].mxu0
      %1855 = vmatprep.mubr.bf16.mxu0 0
      %1856 = vmatmul.mubr.bf16.gmra.mrb[0].mxu0 %v793
      %v1857 = vpop.f32.mrb[0].mxu0
      %v1858 = vadd.f32 %v1697, %v1857
      %v1859 = vpop.f32.mrb[0].mxu0
      %v1860 = vpop.f32.mrb[0].mxu0
      %v1861 = vadd.f32 %v1700, %v1860
      %v1862 = vpop.f32.mrb[0].mxu0
      %1863 = vmatprep.mubr.bf16.mxu0 0
      %1864 = vmatmul.mubr.bf16.gmra.mrb[0].mxu0 %v796
      %v1865 = vpop.f32.mrb[0].mxu0
      %v1866 = vadd.f32 %v1705, %v1865
      %v1867 = vpop.f32.mrb[0].mxu0
      %v1868 = vpop.f32.mrb[0].mxu0
      %v1869 = vadd.f32 %v1708, %v1868
      %v1870 = vpop.f32.mrb[0].mxu0
      %1871 = vmatprep.mubr.bf16.mxu0 0
      %1872 = vmatmul.mubr.bf16.gmra.mrb[0].mxu0 %v799
      %v1873 = vpop.f32.mrb[0].mxu0
      %v1874 = vadd.f32 %v1713, %v1873
      %v1875 = vpop.f32.mrb[0].mxu0
      %v1876 = vpop.f32.mrb[0].mxu0
      %v1877 = vadd.f32 %v1716, %v1876
      %v1878 = vpop.f32.mrb[0].mxu0
      %1879 = vmatprep.mubr.bf16.mxu0 0
      %1880 = vmatmul.mubr.bf16.gmra.mrb[0].mxu0 %v802
      %v1881 = vpop.f32.mrb[0].mxu0
      %v1882 = vadd.f32 %v1721, %v1881
      %v1883 = vpop.f32.mrb[0].mxu0
      %v1884 = vpop.f32.mrb[0].mxu0
      %v1885 = vadd.f32 %v1724, %v1884
      %v1886 = vpop.f32.mrb[0].mxu0
      %1887 = vdwg.mxu0
      %s1888 = scalar_lea.vmem [#allocation3], 48
      %v1889 = vld [vmem:[%s1888] sm:$0xff]
      %v1890 = vld [vmem:[%s1888 + $0x8] sm:$0xff]
      %v1891 = vld [vmem:[%s1888 + $0x10] sm:$0xff]
      %v1892 = vld [vmem:[%s1888 + $0x18] sm:$0xff]
      %v1893 = vld [vmem:[%s1888 + $0x20] sm:$0xff]
      %v1894 = vld [vmem:[%s1888 + $0x28] sm:$0xff]
      %v1895 = vld [vmem:[%s1888 + $0x30] sm:$0xff]
      %v1896 = vld [vmem:[%s1888 + $0x38] sm:$0xff]
      %v1897 = vld [vmem:[%s1888 + $0x40] sm:$0xff]
      %v1898 = vld [vmem:[%s1888 + $0x48] sm:$0xff]
      %v1899 = vld [vmem:[%s1888 + $0x50] sm:$0xff]
      %v1900 = vld [vmem:[%s1888 + $0x58] sm:$0xff]
      %v1901 = vld [vmem:[%s1888 + $0x60] sm:$0xff]
      %v1902 = vld [vmem:[%s1888 + $0x68] sm:$0xff]
      %v1903 = vld [vmem:[%s1888 + $0x70] sm:$0xff]
      %v1904 = vld [vmem:[%s1888 + $0x78] sm:$0xff]
      %v1905 = vld [vmem:[%s1888 + $0x80] sm:$0xff]
      %v1906 = vld [vmem:[%s1888 + $0x88] sm:$0xff]
      %v1907 = vld [vmem:[%s1888 + $0x90] sm:$0xff]
      %v1908 = vld [vmem:[%s1888 + $0x98] sm:$0xff]
      %v1909 = vld [vmem:[%s1888 + $0xa0] sm:$0xff]
      %v1910 = vld [vmem:[%s1888 + $0xa8] sm:$0xff]
      %v1911 = vld [vmem:[%s1888 + $0xb0] sm:$0xff]
      %v1912 = vld [vmem:[%s1888 + $0xb8] sm:$0xff]
      %v1913 = vld [vmem:[%s1888 + $0xc0] sm:$0xff]
      %v1914 = vld [vmem:[%s1888 + $0xc8] sm:$0xff]
      %v1915 = vld [vmem:[%s1888 + $0xd0] sm:$0xff]
      %v1916 = vld [vmem:[%s1888 + $0xd8] sm:$0xff]
      %v1917 = vld [vmem:[%s1888 + $0xe0] sm:$0xff]
      %v1918 = vld [vmem:[%s1888 + $0xe8] sm:$0xff]
      %v1919 = vld [vmem:[%s1888 + $0xf0] sm:$0xff]
      %v1920 = vld [vmem:[%s1888 + $0xf8] sm:$0xff]
      %v1921 = vld [vmem:[%s1888 + $0x100] sm:$0xff]
      %v1922 = vld [vmem:[%s1888 + $0x108] sm:$0xff]
      %v1923 = vld [vmem:[%s1888 + $0x110] sm:$0xff]
      %v1924 = vld [vmem:[%s1888 + $0x118] sm:$0xff]
      %v1925 = vld [vmem:[%s1888 + $0x120] sm:$0xff]
      %v1926 = vld [vmem:[%s1888 + $0x128] sm:$0xff]
      %v1927 = vld [vmem:[%s1888 + $0x130] sm:$0xff]
      %v1928 = vld [vmem:[%s1888 + $0x138] sm:$0xff]
      %v1929 = vld [vmem:[%s1888 + $0x140] sm:$0xff]
      %v1930 = vld [vmem:[%s1888 + $0x148] sm:$0xff]
      %v1931 = vld [vmem:[%s1888 + $0x150] sm:$0xff]
      %v1932 = vld [vmem:[%s1888 + $0x158] sm:$0xff]
      %v1933 = vld [vmem:[%s1888 + $0x160] sm:$0xff]
      %v1934 = vld [vmem:[%s1888 + $0x168] sm:$0xff]
      %v1935 = vld [vmem:[%s1888 + $0x170] sm:$0xff]
      %v1936 = vld [vmem:[%s1888 + $0x178] sm:$0xff]
      %s1937 = sadd.s32 %s803, 2
      %s1938 = smul.u32 %s1937, 48
      %s1939 = smul.addr %s1938, 4
      %s1940 = scalar_lea.vmem [#allocation4], %s1939
      %v1941 = vld [vmem:[%s1940] sm:$0xf]
      %v1942 = vld [vmem:[%s1940 + $0x4] sm:$0xf]
      %v1943 = vld [vmem:[%s1940 + $0x8] sm:$0xf]
      %v1944 = vld [vmem:[%s1940 + $0xc] sm:$0xf]
      %v1945 = vld [vmem:[%s1940 + $0x10] sm:$0xf]
      %v1946 = vld [vmem:[%s1940 + $0x14] sm:$0xf]
      %v1947 = vld [vmem:[%s1940 + $0x18] sm:$0xf]
      %v1948 = vld [vmem:[%s1940 + $0x1c] sm:$0xf]
      %v1949 = vld [vmem:[%s1940 + $0x20] sm:$0xf]
      %v1950 = vld [vmem:[%s1940 + $0x24] sm:$0xf]
      %v1951 = vld [vmem:[%s1940 + $0x28] sm:$0xf]
      %v1952 = vld [vmem:[%s1940 + $0x2c] sm:$0xf]
      %v1953 = vld [vmem:[%s1940 + $0x30] sm:$0xf]
      %v1954 = vld [vmem:[%s1940 + $0x34] sm:$0xf]
      %v1955 = vld [vmem:[%s1940 + $0x38] sm:$0xf]
      %v1956 = vld [vmem:[%s1940 + $0x3c] sm:$0xf]
      %v1957 = vld [vmem:[%s1940 + $0x40] sm:$0xf]
      %v1958 = vld [vmem:[%s1940 + $0x44] sm:$0xf]
      %v1959 = vld [vmem:[%s1940 + $0x48] sm:$0xf]
      %v1960 = vld [vmem:[%s1940 + $0x4c] sm:$0xf]
      %v1961 = vld [vmem:[%s1940 + $0x50] sm:$0xf]
      %v1962 = vld [vmem:[%s1940 + $0x54] sm:$0xf]
      %v1963 = vld [vmem:[%s1940 + $0x58] sm:$0xf]
      %v1964 = vld [vmem:[%s1940 + $0x5c] sm:$0xf]
      %v1965 = vld [vmem:[%s1940 + $0x60] sm:$0xf]
      %v1966 = vld [vmem:[%s1940 + $0x64] sm:$0xf]
      %v1967 = vld [vmem:[%s1940 + $0x68] sm:$0xf]
      %v1968 = vld [vmem:[%s1940 + $0x6c] sm:$0xf]
      %v1969 = vld [vmem:[%s1940 + $0x70] sm:$0xf]
      %v1970 = vld [vmem:[%s1940 + $0x74] sm:$0xf]
      %v1971 = vld [vmem:[%s1940 + $0x78] sm:$0xf]
      %v1972 = vld [vmem:[%s1940 + $0x7c] sm:$0xf]
      %v1973 = vld [vmem:[%s1940 + $0x80] sm:$0xf]
      %v1974 = vld [vmem:[%s1940 + $0x84] sm:$0xf]
      %v1975 = vld [vmem:[%s1940 + $0x88] sm:$0xf]
      %v1976 = vld [vmem:[%s1940 + $0x8c] sm:$0xf]
      %v1977 = vld [vmem:[%s1940 + $0x90] sm:$0xf]
      %v1978 = vld [vmem:[%s1940 + $0x94] sm:$0xf]
      %v1979 = vld [vmem:[%s1940 + $0x98] sm:$0xf]
      %v1980 = vld [vmem:[%s1940 + $0x9c] sm:$0xf]
      %v1981 = vld [vmem:[%s1940 + $0xa0] sm:$0xf]
      %v1982 = vld [vmem:[%s1940 + $0xa4] sm:$0xf]
      %v1983 = vld [vmem:[%s1940 + $0xa8] sm:$0xf]
      %v1984 = vld [vmem:[%s1940 + $0xac] sm:$0xf]
      %v1985 = vld [vmem:[%s1940 + $0xb0] sm:$0xf]
      %v1986 = vld [vmem:[%s1940 + $0xb4] sm:$0xf]
      %v1987 = vld [vmem:[%s1940 + $0xb8] sm:$0xf]
      %v1988 = vld [vmem:[%s1940 + $0xbc] sm:$0xf]
      %v2037 = vunpack.c.l.b16 %v1941
      %v2038 = vunpack.c.l.b16 %v1942
      %v2039 = vunpack.c.l.b16 %v1943
      %v2040 = vunpack.c.l.b16 %v1944
      %v2041 = vunpack.c.l.b16 %v1945
      %v2042 = vunpack.c.l.b16 %v1946
      %v2043 = vunpack.c.l.b16 %v1947
      %v2044 = vunpack.c.l.b16 %v1948
      %v2045 = vunpack.c.l.b16 %v1949
      %v2046 = vunpack.c.l.b16 %v1950
      %v2047 = vunpack.c.l.b16 %v1951
      %v2048 = vunpack.c.l.b16 %v1952
      %v2049 = vunpack.c.l.b16 %v1953
      %v2050 = vunpack.c.l.b16 %v1954
      %v2051 = vunpack.c.l.b16 %v1955
      %v2052 = vunpack.c.l.b16 %v1956
      %v2053 = vunpack.c.l.b16 %v1957
      %v2054 = vunpack.c.l.b16 %v1958
      %v2055 = vunpack.c.l.b16 %v1959
      %v2056 = vunpack.c.l.b16 %v1960
      %v2057 = vunpack.c.l.b16 %v1961
      %v2058 = vunpack.c.l.b16 %v1962
      %v2059 = vunpack.c.l.b16 %v1963
      %v2060 = vunpack.c.l.b16 %v1964
      %v2061 = vunpack.c.l.b16 %v1965
      %v2062 = vunpack.c.l.b16 %v1966
      %v2063 = vunpack.c.l.b16 %v1967
      %v2064 = vunpack.c.l.b16 %v1968
      %v2065 = vunpack.c.l.b16 %v1969
      %v2066 = vunpack.c.l.b16 %v1970
      %v2067 = vunpack.c.l.b16 %v1971
      %v2068 = vunpack.c.l.b16 %v1972
      %v2069 = vunpack.c.l.b16 %v1973
      %v2070 = vunpack.c.l.b16 %v1974
      %v2071 = vunpack.c.l.b16 %v1975
      %v2072 = vunpack.c.l.b16 %v1976
      %v2073 = vunpack.c.l.b16 %v1977
      %v2074 = vunpack.c.l.b16 %v1978
      %v2075 = vunpack.c.l.b16 %v1979
      %v2076 = vunpack.c.l.b16 %v1980
      %v2077 = vunpack.c.l.b16 %v1981
      %v2078 = vunpack.c.l.b16 %v1982
      %v2079 = vunpack.c.l.b16 %v1983
      %v2080 = vunpack.c.l.b16 %v1984
      %v2081 = vunpack.c.l.b16 %v1985
      %v2082 = vunpack.c.l.b16 %v1986
      %v2083 = vunpack.c.l.b16 %v1987
      %v2084 = vunpack.c.l.b16 %v1988
      %v2085 = vpack.c.b16 %v2038, %v2037
      %v2086 = vpack.c.b16 %v2040, %v2039
      %v2087 = vpack.c.b16 %v2042, %v2041
      %v2088 = vpack.c.b16 %v2044, %v2043
      %v2089 = vpack.c.b16 %v2046, %v2045
      %v2090 = vpack.c.b16 %v2048, %v2047
      %v2091 = vpack.c.b16 %v2050, %v2049
      %v2092 = vpack.c.b16 %v2052, %v2051
      %v2093 = vpack.c.b16 %v2054, %v2053
      %v2094 = vpack.c.b16 %v2056, %v2055
      %v2095 = vpack.c.b16 %v2058, %v2057
      %v2096 = vpack.c.b16 %v2060, %v2059
      %v2097 = vpack.c.b16 %v2062, %v2061
      %v2098 = vpack.c.b16 %v2064, %v2063
      %v2099 = vpack.c.b16 %v2066, %v2065
      %v2100 = vpack.c.b16 %v2068, %v2067
      %v2101 = vpack.c.b16 %v2070, %v2069
      %v2102 = vpack.c.b16 %v2072, %v2071
      %v2103 = vpack.c.b16 %v2074, %v2073
      %v2104 = vpack.c.b16 %v2076, %v2075
      %v2105 = vpack.c.b16 %v2078, %v2077
      %v2106 = vpack.c.b16 %v2080, %v2079
      %v2107 = vpack.c.b16 %v2082, %v2081
      %v2108 = vpack.c.b16 %v2084, %v2083
      %2133 = vmatprep.subr.bf16.mxu0 0
      %2134 = vmatpush1.bf16.msra.mxu0 %v2085
      %2135 = vmatprep.subr.bf16.mxu0 0
      %2136 = vmatpush1.bf16.msra.mxu0 %v2086
      %2137 = vmatprep.subr.bf16.mxu0 0
      %2138 = vmatpush1.bf16.msra.mxu0 %v2087
      %2139 = vmatprep.subr.bf16.mxu0 0
      %2140 = vmatpush1.bf16.msra.mxu0 %v2088
      %2141 = vmatprep.subr.bf16.mxu0 0
      %2142 = vmatpush1.bf16.msra.mxu0 %v2089
      %2143 = vmatprep.subr.bf16.mxu0 0
      %2144 = vmatpush1.bf16.msra.mxu0 %v2090
      %2145 = vmatprep.subr.bf16.mxu0 0
      %2146 = vmatpush1.bf16.msra.mxu0 %v2091
      %2147 = vmatprep.subr.bf16.mxu0 0
      %2148 = vmatpush1.bf16.msra.mxu0 %v2092
      %2149 = vmatprep.subr.bf16.mxu0 0
      %2150 = vmatpush1.bf16.msra.mxu0 %v2093
      %2151 = vmatprep.subr.bf16.mxu0 0
      %2152 = vmatpush1.bf16.msra.mxu0 %v2094
      %2153 = vmatprep.subr.bf16.mxu0 0
      %2154 = vmatpush1.bf16.msra.mxu0 %v2095
      %2155 = vmatprep.subr.bf16.mxu0 0
      %2156 = vmatpush1.bf16.msra.mxu0 %v2096
      %2157 = vmatprep.subr.bf16.mxu0 0
      %2158 = vmatpush1.bf16.msra.mxu0 %v2097
      %2159 = vmatprep.subr.bf16.mxu0 0
      %2160 = vmatpush1.bf16.msra.mxu0 %v2098
      %2161 = vmatprep.subr.bf16.mxu0 0
      %2162 = vmatpush1.bf16.msra.mxu0 %v2099
      %2163 = vmatprep.subr.bf16.mxu0 0
      %2164 = vmatpush1.bf16.msra.mxu0 %v2100
      %2165 = vmatprep.mubr.bf16.mxu0 %v1890
      %2166 = vmatmul.mubr.bf16.gmra.mrb[0].mxu0 %v1889
      %v2167 = vpop.f32.mrb[0].mxu0
      %v2168 = vadd.f32 0.0, %v2167
      %v2169 = vpop.f32.mrb[0].mxu0
      %v2170 = vpop.f32.mrb[0].mxu0
      %v2171 = vadd.f32 0.0, %v2170
      %v2172 = vpop.f32.mrb[0].mxu0
      %2173 = vmatprep.mubr.bf16.mxu0 %v1893
      %2174 = vmatmul.mubr.bf16.gmra.mrb[0].mxu0 %v1892
      %v2175 = vpop.f32.mrb[0].mxu0
      %v2176 = vadd.f32 0.0, %v2175
      %v2177 = vpop.f32.mrb[0].mxu0
      %v2178 = vpop.f32.mrb[0].mxu0
      %v2179 = vadd.f32 0.0, %v2178
      %v2180 = vpop.f32.mrb[0].mxu0
      %2181 = vmatprep.mubr.bf16.mxu0 %v1896
      %2182 = vmatmul.mubr.bf16.gmra.mrb[0].mxu0 %v1895
      %v2183 = vpop.f32.mrb[0].mxu0
      %v2184 = vadd.f32 0.0, %v2183
      %v2185 = vpop.f32.mrb[0].mxu0
      %v2186 = vpop.f32.mrb[0].mxu0
      %v2187 = vadd.f32 0.0, %v2186
      %v2188 = vpop.f32.mrb[0].mxu0
      %2189 = vmatprep.mubr.bf16.mxu0 %v1899
      %2190 = vmatmul.mubr.bf16.gmra.mrb[0].mxu0 %v1898
      %v2191 = vpop.f32.mrb[0].mxu0
      %v2192 = vadd.f32 0.0, %v2191
      %v2193 = vpop.f32.mrb[0].mxu0
      %v2194 = vpop.f32.mrb[0].mxu0
      %v2195 = vadd.f32 0.0, %v2194
      %v2196 = vpop.f32.mrb[0].mxu0
      %2197 = vmatprep.mubr.bf16.mxu0 %v1902
      %2198 = vmatmul.mubr.bf16.gmra.mrb[0].mxu0 %v1901
      %v2199 = vpop.f32.mrb[0].mxu0
      %v2200 = vadd.f32 0.0, %v2199
      %v2201 = vpop.f32.mrb[0].mxu0
      %v2202 = vpop.f32.mrb[0].mxu0
      %v2203 = vadd.f32 0.0, %v2202
      %v2204 = vpop.f32.mrb[0].mxu0
      %2205 = vmatprep.mubr.bf16.mxu0 %v1905
      %2206 = vmatmul.mubr.bf16.gmra.mrb[0].mxu0 %v1904
      %v2207 = vpop.f32.mrb[0].mxu0
      %v2208 = vadd.f32 0.0, %v2207
      %v2209 = vpop.f32.mrb[0].mxu0
      %v2210 = vpop.f32.mrb[0].mxu0
      %v2211 = vadd.f32 0.0, %v2210
      %v2212 = vpop.f32.mrb[0].mxu0
      %2213 = vmatprep.mubr.bf16.mxu0 %v1908
      %2214 = vmatmul.mubr.bf16.gmra.mrb[0].mxu0 %v1907
      %v2215 = vpop.f32.mrb[0].mxu0
      %v2216 = vadd.f32 0.0, %v2215
      %v2217 = vpop.f32.mrb[0].mxu0
      %v2218 = vpop.f32.mrb[0].mxu0
      %v2219 = vadd.f32 0.0, %v2218
      %v2220 = vpop.f32.mrb[0].mxu0
      %2221 = vmatprep.mubr.bf16.mxu0 %v1911
      %2222 = vmatmul.mubr.bf16.gmra.mrb[0].mxu0 %v1910
      %v2223 = vpop.f32.mrb[0].mxu0
      %v2224 = vadd.f32 0.0, %v2223
      %v2225 = vpop.f32.mrb[0].mxu0
      %v2226 = vpop.f32.mrb[0].mxu0
      %v2227 = vadd.f32 0.0, %v2226
      %v2228 = vpop.f32.mrb[0].mxu0
      %2229 = vmatprep.mubr.bf16.mxu0 %v1914
      %2230 = vmatmul.mubr.bf16.gmra.mrb[0].mxu0 %v1913
      %v2231 = vpop.f32.mrb[0].mxu0
      %v2232 = vadd.f32 0.0, %v2231
      %v2233 = vpop.f32.mrb[0].mxu0
      %v2234 = vpop.f32.mrb[0].mxu0
      %v2235 = vadd.f32 0.0, %v2234
      %v2236 = vpop.f32.mrb[0].mxu0
      %2237 = vmatprep.mubr.bf16.mxu0 %v1917
      %2238 = vmatmul.mubr.bf16.gmra.mrb[0].mxu0 %v1916
      %v2239 = vpop.f32.mrb[0].mxu0
      %v2240 = vadd.f32 0.0, %v2239
      %v2241 = vpop.f32.mrb[0].mxu0
      %v2242 = vpop.f32.mrb[0].mxu0
      %v2243 = vadd.f32 0.0, %v2242
      %v2244 = vpop.f32.mrb[0].mxu0
      %2245 = vmatprep.mubr.bf16.mxu0 %v1920
      %2246 = vmatmul.mubr.bf16.gmra.mrb[0].mxu0 %v1919
      %v2247 = vpop.f32.mrb[0].mxu0
      %v2248 = vadd.f32 0.0, %v2247
      %v2249 = vpop.f32.mrb[0].mxu0
      %v2250 = vpop.f32.mrb[0].mxu0
      %v2251 = vadd.f32 0.0, %v2250
      %v2252 = vpop.f32.mrb[0].mxu0
      %2253 = vmatprep.mubr.bf16.mxu0 %v1923
      %2254 = vmatmul.mubr.bf16.gmra.mrb[0].mxu0 %v1922
      %v2255 = vpop.f32.mrb[0].mxu0
      %v2256 = vadd.f32 0.0, %v2255
      %v2257 = vpop.f32.mrb[0].mxu0
      %v2258 = vpop.f32.mrb[0].mxu0
      %v2259 = vadd.f32 0.0, %v2258
      %v2260 = vpop.f32.mrb[0].mxu0
      %2261 = vmatprep.mubr.bf16.mxu0 %v1926
      %2262 = vmatmul.mubr.bf16.gmra.mrb[0].mxu0 %v1925
      %v2263 = vpop.f32.mrb[0].mxu0
      %v2264 = vadd.f32 0.0, %v2263
      %v2265 = vpop.f32.mrb[0].mxu0
      %v2266 = vpop.f32.mrb[0].mxu0
      %v2267 = vadd.f32 0.0, %v2266
      %v2268 = vpop.f32.mrb[0].mxu0
      %2269 = vmatprep.mubr.bf16.mxu0 %v1929
      %2270 = vmatmul.mubr.bf16.gmra.mrb[0].mxu0 %v1928
      %v2271 = vpop.f32.mrb[0].mxu0
      %v2272 = vadd.f32 0.0, %v2271
      %v2273 = vpop.f32.mrb[0].mxu0
      %v2274 = vpop.f32.mrb[0].mxu0
      %v2275 = vadd.f32 0.0, %v2274
      %v2276 = vpop.f32.mrb[0].mxu0
      %2277 = vmatprep.mubr.bf16.mxu0 %v1932
      %2278 = vmatmul.mubr.bf16.gmra.mrb[0].mxu0 %v1931
      %v2279 = vpop.f32.mrb[0].mxu0
      %v2280 = vadd.f32 0.0, %v2279
      %v2281 = vpop.f32.mrb[0].mxu0
      %v2282 = vpop.f32.mrb[0].mxu0
      %v2283 = vadd.f32 0.0, %v2282
      %v2284 = vpop.f32.mrb[0].mxu0
      %2285 = vmatprep.mubr.bf16.mxu0 %v1935
      %2286 = vmatmul.mubr.bf16.gmra.mrb[0].mxu0 %v1934
      %v2287 = vpop.f32.mrb[0].mxu0
      %v2288 = vadd.f32 0.0, %v2287
      %v2289 = vpop.f32.mrb[0].mxu0
      %v2290 = vpop.f32.mrb[0].mxu0
      %v2291 = vadd.f32 0.0, %v2290
      %v2292 = vpop.f32.mrb[0].mxu0
      %2293 = vdwg.mxu0
      %2294 = vmatprep.subr.bf16.mxu0 0
      %2295 = vmatpush1.bf16.msra.mxu0 %v2101
      %2296 = vmatprep.subr.bf16.mxu0 0
      %2297 = vmatpush1.bf16.msra.mxu0 %v2102
      %2298 = vmatprep.subr.bf16.mxu0 0
      %2299 = vmatpush1.bf16.msra.mxu0 %v2103
      %2300 = vmatprep.subr.bf16.mxu0 0
      %2301 = vmatpush1.bf16.msra.mxu0 %v2104
      %2302 = vmatprep.subr.bf16.mxu0 0
      %2303 = vmatpush1.bf16.msra.mxu0 %v2105
      %2304 = vmatprep.subr.bf16.mxu0 0
      %2305 = vmatpush1.bf16.msra.mxu0 %v2106
      %2306 = vmatprep.subr.bf16.mxu0 0
      %2307 = vmatpush1.bf16.msra.mxu0 %v2107
      %2308 = vmatprep.subr.bf16.mxu0 0
      %2309 = vmatpush1.bf16.msra.mxu0 %v2108
      %2310 = vmatprep.subr.bf16.mxu0 0
      %2311 = vmatpush1.bf16.msra.mxu0 0
      %2312 = vmatprep.subr.bf16.mxu0 0
      %2313 = vmatpush1.bf16.msra.mxu0 0
      %2314 = vmatprep.subr.bf16.mxu0 0
      %2315 = vmatpush1.bf16.msra.mxu0 0
      %2316 = vmatprep.subr.bf16.mxu0 0
      %2317 = vmatpush1.bf16.msra.mxu0 0
      %2318 = vmatprep.subr.bf16.mxu0 0
      %2319 = vmatpush1.bf16.msra.mxu0 0
      %2320 = vmatprep.subr.bf16.mxu0 0
      %2321 = vmatpush1.bf16.msra.mxu0 0
      %2322 = vmatprep.subr.bf16.mxu0 0
      %2323 = vmatpush1.bf16.msra.mxu0 0
      %2324 = vmatprep.subr.bf16.mxu0 0
      %2325 = vmatpush1.bf16.msra.mxu0 0
      %2326 = vmatprep.mubr.bf16.mxu0 0
      %2327 = vmatmul.mubr.bf16.gmra.mrb[0].mxu0 %v1891
      %v2328 = vpop.f32.mrb[0].mxu0
      %v2329 = vadd.f32 %v2168, %v2328
      %v2330 = vpop.f32.mrb[0].mxu0
      %v2331 = vpop.f32.mrb[0].mxu0
      %v2332 = vadd.f32 %v2171, %v2331
      %v2333 = vpop.f32.mrb[0].mxu0
      %2334 = vmatprep.mubr.bf16.mxu0 0
      %2335 = vmatmul.mubr.bf16.gmra.mrb[0].mxu0 %v1894
      %v2336 = vpop.f32.mrb[0].mxu0
      %v2337 = vadd.f32 %v2176, %v2336
      %v2338 = vpop.f32.mrb[0].mxu0
      %v2339 = vpop.f32.mrb[0].mxu0
      %v2340 = vadd.f32 %v2179, %v2339
      %v2341 = vpop.f32.mrb[0].mxu0
      %2342 = vmatprep.mubr.bf16.mxu0 0
      %2343 = vmatmul.mubr.bf16.gmra.mrb[0].mxu0 %v1897
      %v2344 = vpop.f32.mrb[0].mxu0
      %v2345 = vadd.f32 %v2184, %v2344
      %v2346 = vpop.f32.mrb[0].mxu0
      %v2347 = vpop.f32.mrb[0].mxu0
      %v2348 = vadd.f32 %v2187, %v2347
      %v2349 = vpop.f32.mrb[0].mxu0
      %2350 = vmatprep.mubr.bf16.mxu0 0
      %2351 = vmatmul.mubr.bf16.gmra.mrb[0].mxu0 %v1900
      %v2352 = vpop.f32.mrb[0].mxu0
      %v2353 = vadd.f32 %v2192, %v2352
      %v2354 = vpop.f32.mrb[0].mxu0
      %v2355 = vpop.f32.mrb[0].mxu0
      %v2356 = vadd.f32 %v2195, %v2355
      %v2357 = vpop.f32.mrb[0].mxu0
      %2358 = vmatprep.mubr.bf16.mxu0 0
      %2359 = vmatmul.mubr.bf16.gmra.mrb[0].mxu0 %v1903
      %v2360 = vpop.f32.mrb[0].mxu0
      %v2361 = vadd.f32 %v2200, %v2360
      %v2362 = vpop.f32.mrb[0].mxu0
      %v2363 = vpop.f32.mrb[0].mxu0
      %v2364 = vadd.f32 %v2203, %v2363
      %v2365 = vpop.f32.mrb[0].mxu0
      %2366 = vmatprep.mubr.bf16.mxu0 0
      %2367 = vmatmul.mubr.bf16.gmra.mrb[0].mxu0 %v1906
      %v2368 = vpop.f32.mrb[0].mxu0
      %v2369 = vadd.f32 %v2208, %v2368
      %v2370 = vpop.f32.mrb[0].mxu0
      %v2371 = vpop.f32.mrb[0].mxu0
      %v2372 = vadd.f32 %v2211, %v2371
      %v2373 = vpop.f32.mrb[0].mxu0
      %2374 = vmatprep.mubr.bf16.mxu0 0
      %2375 = vmatmul.mubr.bf16.gmra.mrb[0].mxu0 %v1909
      %v2376 = vpop.f32.mrb[0].mxu0
      %v2377 = vadd.f32 %v2216, %v2376
      %v2378 = vpop.f32.mrb[0].mxu0
      %v2379 = vpop.f32.mrb[0].mxu0
      %v2380 = vadd.f32 %v2219, %v2379
      %v2381 = vpop.f32.mrb[0].mxu0
      %2382 = vmatprep.mubr.bf16.mxu0 0
      %2383 = vmatmul.mubr.bf16.gmra.mrb[0].mxu0 %v1912
      %v2384 = vpop.f32.mrb[0].mxu0
      %v2385 = vadd.f32 %v2224, %v2384
      %v2386 = vpop.f32.mrb[0].mxu0
      %v2387 = vpop.f32.mrb[0].mxu0
      %v2388 = vadd.f32 %v2227, %v2387
      %v2389 = vpop.f32.mrb[0].mxu0
      %2390 = vmatprep.mubr.bf16.mxu0 0
      %2391 = vmatmul.mubr.bf16.gmra.mrb[0].mxu0 %v1915
      %v2392 = vpop.f32.mrb[0].mxu0
      %v2393 = vadd.f32 %v2232, %v2392
      %v2394 = vpop.f32.mrb[0].mxu0
      %v2395 = vpop.f32.mrb[0].mxu0
      %v2396 = vadd.f32 %v2235, %v2395
      %v2397 = vpop.f32.mrb[0].mxu0
      %2398 = vmatprep.mubr.bf16.mxu0 0
      %2399 = vmatmul.mubr.bf16.gmra.mrb[0].mxu0 %v1918
      %v2400 = vpop.f32.mrb[0].mxu0
      %v2401 = vadd.f32 %v2240, %v2400
      %v2402 = vpop.f32.mrb[0].mxu0
      %v2403 = vpop.f32.mrb[0].mxu0
      %v2404 = vadd.f32 %v2243, %v2403
      %v2405 = vpop.f32.mrb[0].mxu0
      %2406 = vmatprep.mubr.bf16.mxu0 0
      %2407 = vmatmul.mubr.bf16.gmra.mrb[0].mxu0 %v1921
      %v2408 = vpop.f32.mrb[0].mxu0
      %v2409 = vadd.f32 %v2248, %v2408
      %v2410 = vpop.f32.mrb[0].mxu0
      %v2411 = vpop.f32.mrb[0].mxu0
      %v2412 = vadd.f32 %v2251, %v2411
      %v2413 = vpop.f32.mrb[0].mxu0
      %2414 = vmatprep.mubr.bf16.mxu0 0
      %2415 = vmatmul.mubr.bf16.gmra.mrb[0].mxu0 %v1924
      %v2416 = vpop.f32.mrb[0].mxu0
      %v2417 = vadd.f32 %v2256, %v2416
      %v2418 = vpop.f32.mrb[0].mxu0
      %v2419 = vpop.f32.mrb[0].mxu0
      %v2420 = vadd.f32 %v2259, %v2419
      %v2421 = vpop.f32.mrb[0].mxu0
      %2422 = vmatprep.mubr.bf16.mxu0 0
      %2423 = vmatmul.mubr.bf16.gmra.mrb[0].mxu0 %v1927
      %v2424 = vpop.f32.mrb[0].mxu0
      %v2425 = vadd.f32 %v2264, %v2424
      %v2426 = vpop.f32.mrb[0].mxu0
      %v2427 = vpop.f32.mrb[0].mxu0
      %v2428 = vadd.f32 %v2267, %v2427
      %v2429 = vpop.f32.mrb[0].mxu0
      %2430 = vmatprep.mubr.bf16.mxu0 0
      %2431 = vmatmul.mubr.bf16.gmra.mrb[0].mxu0 %v1930
      %v2432 = vpop.f32.mrb[0].mxu0
      %v2433 = vadd.f32 %v2272, %v2432
      %v2434 = vpop.f32.mrb[0].mxu0
      %v2435 = vpop.f32.mrb[0].mxu0
      %v2436 = vadd.f32 %v2275, %v2435
      %v2437 = vpop.f32.mrb[0].mxu0
      %2438 = vmatprep.mubr.bf16.mxu0 0
      %2439 = vmatmul.mubr.bf16.gmra.mrb[0].mxu0 %v1933
      %v2440 = vpop.f32.mrb[0].mxu0
      %v2441 = vadd.f32 %v2280, %v2440
      %v2442 = vpop.f32.mrb[0].mxu0
      %v2443 = vpop.f32.mrb[0].mxu0
      %v2444 = vadd.f32 %v2283, %v2443
      %v2445 = vpop.f32.mrb[0].mxu0
      %2446 = vmatprep.mubr.bf16.mxu0 0
      %2447 = vmatmul.mubr.bf16.gmra.mrb[0].mxu0 %v1936
      %v2448 = vpop.f32.mrb[0].mxu0
      %v2449 = vadd.f32 %v2288, %v2448
      %v2450 = vpop.f32.mrb[0].mxu0
      %v2451 = vpop.f32.mrb[0].mxu0
      %v2452 = vadd.f32 %v2291, %v2451
      %v2453 = vpop.f32.mrb[0].mxu0
      %2454 = vdwg.mxu0
      %v2455 = vadd.f32 %v1762, %v2329
      %v2456 = vadd.f32 %v1765, %v2332
      %v2457 = vadd.f32 %v1770, %v2337
      %v2458 = vadd.f32 %v1773, %v2340
      %v2459 = vadd.f32 %v1778, %v2345
      %v2460 = vadd.f32 %v1781, %v2348
      %v2461 = vadd.f32 %v1786, %v2353
      %v2462 = vadd.f32 %v1789, %v2356
      %v2463 = vadd.f32 %v1794, %v2361
      %v2464 = vadd.f32 %v1797, %v2364
      %v2465 = vadd.f32 %v1802, %v2369
      %v2466 = vadd.f32 %v1805, %v2372
      %v2467 = vadd.f32 %v1810, %v2377
      %v2468 = vadd.f32 %v1813, %v2380
      %v2469 = vadd.f32 %v1818, %v2385
      %v2470 = vadd.f32 %v1821, %v2388
      %v2471 = vadd.f32 %v1826, %v2393
      %v2472 = vadd.f32 %v1829, %v2396
      %v2473 = vadd.f32 %v1834, %v2401
      %v2474 = vadd.f32 %v1837, %v2404
      %v2475 = vadd.f32 %v1842, %v2409
      %v2476 = vadd.f32 %v1845, %v2412
      %v2477 = vadd.f32 %v1850, %v2417
      %v2478 = vadd.f32 %v1853, %v2420
      %v2479 = vadd.f32 %v1858, %v2425
      %v2480 = vadd.f32 %v1861, %v2428
      %v2481 = vadd.f32 %v1866, %v2433
      %v2482 = vadd.f32 %v1869, %v2436
      %v2483 = vadd.f32 %v1874, %v2441
      %v2484 = vadd.f32 %v1877, %v2444
      %v2485 = vadd.f32 %v1882, %v2449
      %v2486 = vadd.f32 %v1885, %v2452
      %s2487 = scalar_lea.vmem [#allocation6], %s277
      %v2488 = vld [vmem:[%s2487] sm:$0x1]
      %v2490 = vlaneseq
      %v2491 = vshrl.u32 %v2490, 7
      %v2492 = vsub.s32 0, %v2491
      %v2493 = vrot.slane %v2488, %v2492
      %v2495 = vmul.f32 %v2455, %v2493
      %v2496 = vmul.f32 %v2456, %v2493
      %v2497 = vmul.f32 %v2457, %v2493
      %v2498 = vmul.f32 %v2458, %v2493
      %v2499 = vmul.f32 %v2459, %v2493
      %v2500 = vmul.f32 %v2460, %v2493
      %v2501 = vmul.f32 %v2461, %v2493
      %v2502 = vmul.f32 %v2462, %v2493
      %v2503 = vmul.f32 %v2463, %v2493
      %v2504 = vmul.f32 %v2464, %v2493
      %v2505 = vmul.f32 %v2465, %v2493
      %v2506 = vmul.f32 %v2466, %v2493
      %v2507 = vmul.f32 %v2467, %v2493
      %v2508 = vmul.f32 %v2468, %v2493
      %v2509 = vmul.f32 %v2469, %v2493
      %v2510 = vmul.f32 %v2470, %v2493
      %v2511 = vmul.f32 %v2471, %v2493
      %v2512 = vmul.f32 %v2472, %v2493
      %v2513 = vmul.f32 %v2473, %v2493
      %v2514 = vmul.f32 %v2474, %v2493
      %v2515 = vmul.f32 %v2475, %v2493
      %v2516 = vmul.f32 %v2476, %v2493
      %v2517 = vmul.f32 %v2477, %v2493
      %v2518 = vmul.f32 %v2478, %v2493
      %v2519 = vmul.f32 %v2479, %v2493
      %v2520 = vmul.f32 %v2480, %v2493
      %v2521 = vmul.f32 %v2481, %v2493
      %v2522 = vmul.f32 %v2482, %v2493
      %v2523 = vmul.f32 %v2483, %v2493
      %v2524 = vmul.f32 %v2484, %v2493
      %v2525 = vmul.f32 %v2485, %v2493
      %v2526 = vmul.f32 %v2486, %v2493
      %s2527 = scalar_lea.vmem [#allocation8], %s277
      %v2528 = vld [vmem:[%s2527] sm:$0x1]
      %v2530 = vlaneseq
      %v2531 = vshrl.u32 %v2530, 7
      %v2532 = vsub.s32 0, %v2531
      %v2533 = vrot.slane %v2528, %v2532
      %v2535 = vadd.f32 %v2495, %v2533
      %v2536 = vadd.f32 %v2496, %v2533
      %v2537 = vadd.f32 %v2497, %v2533
      %v2538 = vadd.f32 %v2498, %v2533
      %v2539 = vadd.f32 %v2499, %v2533
      %v2540 = vadd.f32 %v2500, %v2533
      %v2541 = vadd.f32 %v2501, %v2533
      %v2542 = vadd.f32 %v2502, %v2533
      %v2543 = vadd.f32 %v2503, %v2533
      %v2544 = vadd.f32 %v2504, %v2533
      %v2545 = vadd.f32 %v2505, %v2533
      %v2546 = vadd.f32 %v2506, %v2533
      %v2547 = vadd.f32 %v2507, %v2533
      %v2548 = vadd.f32 %v2508, %v2533
      %v2549 = vadd.f32 %v2509, %v2533
      %v2550 = vadd.f32 %v2510, %v2533
      %v2551 = vadd.f32 %v2511, %v2533
      %v2552 = vadd.f32 %v2512, %v2533
      %v2553 = vadd.f32 %v2513, %v2533
      %v2554 = vadd.f32 %v2514, %v2533
      %v2555 = vadd.f32 %v2515, %v2533
      %v2556 = vadd.f32 %v2516, %v2533
      %v2557 = vadd.f32 %v2517, %v2533
      %v2558 = vadd.f32 %v2518, %v2533
      %v2559 = vadd.f32 %v2519, %v2533
      %v2560 = vadd.f32 %v2520, %v2533
      %v2561 = vadd.f32 %v2521, %v2533
      %v2562 = vadd.f32 %v2522, %v2533
      %v2563 = vadd.f32 %v2523, %v2533
      %v2564 = vadd.f32 %v2524, %v2533
      %v2565 = vadd.f32 %v2525, %v2533
      %v2566 = vadd.f32 %v2526, %v2533
      %v2567 = vmax.f32 %v2535, 0.0
      %v2568 = vmax.f32 %v2536, 0.0
      %v2569 = vmax.f32 %v2537, 0.0
      %v2570 = vmax.f32 %v2538, 0.0
      %v2571 = vmax.f32 %v2539, 0.0
      %v2572 = vmax.f32 %v2540, 0.0
      %v2573 = vmax.f32 %v2541, 0.0
      %v2574 = vmax.f32 %v2542, 0.0
      %v2575 = vmax.f32 %v2543, 0.0
      %v2576 = vmax.f32 %v2544, 0.0
      %v2577 = vmax.f32 %v2545, 0.0
      %v2578 = vmax.f32 %v2546, 0.0
      %v2579 = vmax.f32 %v2547, 0.0
      %v2580 = vmax.f32 %v2548, 0.0
      %v2581 = vmax.f32 %v2549, 0.0
      %v2582 = vmax.f32 %v2550, 0.0
      %v2583 = vmax.f32 %v2551, 0.0
      %v2584 = vmax.f32 %v2552, 0.0
      %v2585 = vmax.f32 %v2553, 0.0
      %v2586 = vmax.f32 %v2554, 0.0
      %v2587 = vmax.f32 %v2555, 0.0
      %v2588 = vmax.f32 %v2556, 0.0
      %v2589 = vmax.f32 %v2557, 0.0
      %v2590 = vmax.f32 %v2558, 0.0
      %v2591 = vmax.f32 %v2559, 0.0
      %v2592 = vmax.f32 %v2560, 0.0
      %v2593 = vmax.f32 %v2561, 0.0
      %v2594 = vmax.f32 %v2562, 0.0
      %v2595 = vmax.f32 %v2563, 0.0
      %v2596 = vmax.f32 %v2564, 0.0
      %v2597 = vmax.f32 %v2565, 0.0
      %v2598 = vmax.f32 %v2566, 0.0
      %v2599 = vpack.c.bf16 %v2568, %v2567
      %v2600 = vpack.c.bf16 %v2570, %v2569
      %v2601 = vpack.c.bf16 %v2572, %v2571
      %v2602 = vpack.c.bf16 %v2574, %v2573
      %v2603 = vpack.c.bf16 %v2576, %v2575
      %v2604 = vpack.c.bf16 %v2578, %v2577
      %v2605 = vpack.c.bf16 %v2580, %v2579
      %v2606 = vpack.c.bf16 %v2582, %v2581
      %v2607 = vpack.c.bf16 %v2584, %v2583
      %v2608 = vpack.c.bf16 %v2586, %v2585
      %v2609 = vpack.c.bf16 %v2588, %v2587
      %v2610 = vpack.c.bf16 %v2590, %v2589
      %v2611 = vpack.c.bf16 %v2592, %v2591
      %v2612 = vpack.c.bf16 %v2594, %v2593
      %v2613 = vpack.c.bf16 %v2596, %v2595
      %v2614 = vpack.c.bf16 %v2598, %v2597
      %2615 = vst [vmem:[%s259] sm:$0xff] %v2599
      %2616 = vst [vmem:[%s259 + $0x8] sm:$0xff] %v2600
      %2617 = vst [vmem:[%s259 + $0x10] sm:$0xff] %v2601
      %2618 = vst [vmem:[%s259 + $0x18] sm:$0xff] %v2602
      %2619 = vst [vmem:[%s259 + $0x20] sm:$0xff] %v2603
      %2620 = vst [vmem:[%s259 + $0x28] sm:$0xff] %v2604
      %2621 = vst [vmem:[%s259 + $0x30] sm:$0xff] %v2605
      %2622 = vst [vmem:[%s259 + $0x38] sm:$0xff] %v2606
      %2623 = vst [vmem:[%s259 + $0x40] sm:$0xff] %v2607
      %2624 = vst [vmem:[%s259 + $0x48] sm:$0xff] %v2608
      %2625 = vst [vmem:[%s259 + $0x50] sm:$0xff] %v2609
      %2626 = vst [vmem:[%s259 + $0x58] sm:$0xff] %v2610
      %2627 = vst [vmem:[%s259 + $0x60] sm:$0xff] %v2611
      %2628 = vst [vmem:[%s259 + $0x68] sm:$0xff] %v2612
      %2629 = vst [vmem:[%s259 + $0x70] sm:$0xff] %v2613
      %2630 = vst [vmem:[%s259 + $0x78] sm:$0xff] %v2614
    $region34: #{_lambda_.1} parent=1 // loop_footer
      %s281 = sadd.s32 1, %s277
    $region35: #{_lambda_.1} parent=1 // loop_footer_branch
      %276 = sbr.rel target = $region31
    $region36: #{_lambda_.1} parent=1 // loop_exit
      _
    %v2631 = vld [vmem:[#allocation2] sm:$0xff]
    %v2632 = vld [vmem:[#allocation2 + $0x8] sm:$0xff]
    %v2633 = vld [vmem:[#allocation2 + $0x10] sm:$0xff]
    %v2634 = vld [vmem:[#allocation2 + $0x18] sm:$0xff]
    %v2635 = vld [vmem:[#allocation2 + $0x20] sm:$0xff]
    %v2636 = vld [vmem:[#allocation2 + $0x28] sm:$0xff]
    %v2637 = vld [vmem:[#allocation2 + $0x30] sm:$0xff]
    %v2638 = vld [vmem:[#allocation2 + $0x38] sm:$0xff]
    %v2639 = vld [vmem:[#allocation2 + $0x40] sm:$0xff]
    %v2640 = vld [vmem:[#allocation2 + $0x48] sm:$0xff]
    %v2641 = vld [vmem:[#allocation2 + $0x50] sm:$0xff]
    %v2642 = vld [vmem:[#allocation2 + $0x58] sm:$0xff]
    %v2643 = vld [vmem:[#allocation2 + $0x60] sm:$0xff]
    %v2644 = vld [vmem:[#allocation2 + $0x68] sm:$0xff]
    %v2645 = vld [vmem:[#allocation2 + $0x70] sm:$0xff]
    %v2646 = vld [vmem:[#allocation2 + $0x78] sm:$0xff]
    %v2647 = vld [vmem:[#allocation2 + $0x80] sm:$0xff]
    %v2648 = vld [vmem:[#allocation2 + $0x88] sm:$0xff]
    %2649 = vst [vmem:[#allocation3 + $0x8] sm:$0xff] %v2631
    %2650 = vst [vmem:[#allocation3 + $0x20] sm:$0xff] %v2632
    %2651 = vst [vmem:[#allocation3 + $0x38] sm:$0xff] %v2633
    %2652 = vst [vmem:[#allocation3 + $0x50] sm:$0xff] %v2634
    %2653 = vst [vmem:[#allocation3 + $0x68] sm:$0xff] %v2635
    %2654 = vst [vmem:[#allocation3 + $0x80] sm:$0xff] %v2636
    %2655 = vst [vmem:[#allocation3 + $0x98] sm:$0xff] %v2637
    %2656 = vst [vmem:[#allocation3 + $0xb0] sm:$0xff] %v2638
    %2657 = vst [vmem:[#allocation3 + $0xc8] sm:$0xff] %v2639
    %2658 = vst [vmem:[#allocation3 + $0xe0] sm:$0xff] %v2640
    %2659 = vst [vmem:[#allocation3 + $0xf8] sm:$0xff] %v2641
    %2660 = vst [vmem:[#allocation3 + $0x110] sm:$0xff] %v2642
    %2661 = vst [vmem:[#allocation3 + $0x128] sm:$0xff] %v2643
    %2662 = vst [vmem:[#allocation3 + $0x140] sm:$0xff] %v2644
    %2663 = vst [vmem:[#allocation3 + $0x158] sm:$0xff] %v2645
    %2664 = vst [vmem:[#allocation3 + $0x170] sm:$0xff] %v2646
    %2665 = vst [vmem:[#allocation3 + $0x188] sm:$0xff] %v2647
    %2666 = vst [vmem:[#allocation3 + $0x1a0] sm:$0xff] %v2648
    %v2667 = vld [vmem:[#allocation2] sm:$0xff]
    %v2668 = vld [vmem:[#allocation2 + $0x8] sm:$0xff]
    %v2669 = vld [vmem:[#allocation2 + $0x10] sm:$0xff]
    %v2670 = vld [vmem:[#allocation2 + $0x18] sm:$0xff]
    %v2671 = vld [vmem:[#allocation2 + $0x20] sm:$0xff]
    %v2672 = vld [vmem:[#allocation2 + $0x28] sm:$0xff]
    %v2673 = vld [vmem:[#allocation2 + $0x30] sm:$0xff]
    %v2674 = vld [vmem:[#allocation2 + $0x38] sm:$0xff]
    %v2675 = vld [vmem:[#allocation2 + $0x40] sm:$0xff]
    %v2676 = vld [vmem:[#allocation2 + $0x48] sm:$0xff]
    %v2677 = vld [vmem:[#allocation2 + $0x50] sm:$0xff]
    %v2678 = vld [vmem:[#allocation2 + $0x58] sm:$0xff]
    %v2679 = vld [vmem:[#allocation2 + $0x60] sm:$0xff]
    %v2680 = vld [vmem:[#allocation2 + $0x68] sm:$0xff]
    %v2681 = vld [vmem:[#allocation2 + $0x70] sm:$0xff]
    %v2682 = vld [vmem:[#allocation2 + $0x78] sm:$0xff]
    %v2683 = vld [vmem:[#allocation2 + $0x80] sm:$0xff]
    %v2684 = vld [vmem:[#allocation2 + $0x88] sm:$0xff]
    %v2686 = vshrl.u32 %v2667, 16
    %v2688 = vrot.slane %v2686, 7
    %v2689 = vshll.u32 %v2667, 16
    %v2691 = vor.u32 %v2688, %v2689
    %v2693 = vshrl.u32 %v2668, 16
    %v2695 = vrot.slane %v2693, 7
    %v2696 = vshll.u32 %v2668, 16
    %v2698 = vor.u32 %v2695, %v2696
    %v2700 = vshrl.u32 %v2669, 16
    %v2702 = vrot.slane %v2700, 7
    %v2703 = vshll.u32 %v2669, 16
    %v2705 = vor.u32 %v2702, %v2703
    %v2707 = vshrl.u32 %v2670, 16
    %v2709 = vrot.slane %v2707, 7
    %v2710 = vshll.u32 %v2670, 16
    %v2712 = vor.u32 %v2709, %v2710
    %v2714 = vshrl.u32 %v2671, 16
    %v2716 = vrot.slane %v2714, 7
    %v2717 = vshll.u32 %v2671, 16
    %v2719 = vor.u32 %v2716, %v2717
    %v2721 = vshrl.u32 %v2672, 16
    %v2723 = vrot.slane %v2721, 7
    %v2724 = vshll.u32 %v2672, 16
    %v2726 = vor.u32 %v2723, %v2724
    %v2728 = vshrl.u32 %v2673, 16
    %v2730 = vrot.slane %v2728, 7
    %v2731 = vshll.u32 %v2673, 16
    %v2733 = vor.u32 %v2730, %v2731
    %v2735 = vshrl.u32 %v2674, 16
    %v2737 = vrot.slane %v2735, 7
    %v2738 = vshll.u32 %v2674, 16
    %v2740 = vor.u32 %v2737, %v2738
    %v2742 = vshrl.u32 %v2675, 16
    %v2744 = vrot.slane %v2742, 7
    %v2745 = vshll.u32 %v2675, 16
    %v2747 = vor.u32 %v2744, %v2745
    %v2749 = vshrl.u32 %v2676, 16
    %v2751 = vrot.slane %v2749, 7
    %v2752 = vshll.u32 %v2676, 16
    %v2754 = vor.u32 %v2751, %v2752
    %v2756 = vshrl.u32 %v2677, 16
    %v2758 = vrot.slane %v2756, 7
    %v2759 = vshll.u32 %v2677, 16
    %v2761 = vor.u32 %v2758, %v2759
    %v2763 = vshrl.u32 %v2678, 16
    %v2765 = vrot.slane %v2763, 7
    %v2766 = vshll.u32 %v2678, 16
    %v2768 = vor.u32 %v2765, %v2766
    %v2770 = vshrl.u32 %v2679, 16
    %v2772 = vrot.slane %v2770, 7
    %v2773 = vshll.u32 %v2679, 16
    %v2775 = vor.u32 %v2772, %v2773
    %v2777 = vshrl.u32 %v2680, 16
    %v2779 = vrot.slane %v2777, 7
    %v2780 = vshll.u32 %v2680, 16
    %v2782 = vor.u32 %v2779, %v2780
    %v2784 = vshrl.u32 %v2681, 16
    %v2786 = vrot.slane %v2784, 7
    %v2787 = vshll.u32 %v2681, 16
    %v2789 = vor.u32 %v2786, %v2787
    %v2791 = vshrl.u32 %v2682, 16
    %v2793 = vrot.slane %v2791, 7
    %v2794 = vshll.u32 %v2682, 16
    %v2796 = vor.u32 %v2793, %v2794
    %v2798 = vshrl.u32 %v2683, 16
    %v2800 = vrot.slane %v2798, 7
    %v2801 = vshll.u32 %v2683, 16
    %v2803 = vor.u32 %v2800, %v2801
    %v2805 = vshrl.u32 %v2684, 16
    %v2807 = vrot.slane %v2805, 7
    %v2808 = vshll.u32 %v2684, 16
    %v2810 = vor.u32 %v2807, %v2808
    %vm2829 = vcmask 1047552
    %vm2830 = vsmask.f32 7938
    %vm2831 = vmand %vm2829, %vm2830
    %v2832 = vld [vmem:[#allocation3] sm:$0xff]
    %v2833 = vsel %vm2831, %v2691, %v2832
    %2834 = vst [vmem:[#allocation3] sm:$0xff] %v2833
    %v2835 = vld [vmem:[#allocation3 + $0x18] sm:$0xff]
    %v2836 = vsel %vm2831, %v2698, %v2835
    %2837 = vst [vmem:[#allocation3 + $0x18] sm:$0xff] %v2836
    %v2838 = vld [vmem:[#allocation3 + $0x30] sm:$0xff]
    %v2839 = vsel %vm2831, %v2705, %v2838
    %2840 = vst [vmem:[#allocation3 + $0x30] sm:$0xff] %v2839
    %v2841 = vld [vmem:[#allocation3 + $0x48] sm:$0xff]
    %v2842 = vsel %vm2831, %v2712, %v2841
    %2843 = vst [vmem:[#allocation3 + $0x48] sm:$0xff] %v2842
    %v2844 = vld [vmem:[#allocation3 + $0x60] sm:$0xff]
    %v2845 = vsel %vm2831, %v2719, %v2844
    %2846 = vst [vmem:[#allocation3 + $0x60] sm:$0xff] %v2845
    %v2847 = vld [vmem:[#allocation3 + $0x78] sm:$0xff]
    %v2848 = vsel %vm2831, %v2726, %v2847
    %2849 = vst [vmem:[#allocation3 + $0x78] sm:$0xff] %v2848
    %v2850 = vld [vmem:[#allocation3 + $0x90] sm:$0xff]
    %v2851 = vsel %vm2831, %v2733, %v2850
    %2852 = vst [vmem:[#allocation3 + $0x90] sm:$0xff] %v2851
    %v2853 = vld [vmem:[#allocation3 + $0xa8] sm:$0xff]
    %v2854 = vsel %vm2831, %v2740, %v2853
    %2855 = vst [vmem:[#allocation3 + $0xa8] sm:$0xff] %v2854
    %v2856 = vld [vmem:[#allocation3 + $0xc0] sm:$0xff]
    %v2857 = vsel %vm2831, %v2747, %v2856
    %2858 = vst [vmem:[#allocation3 + $0xc0] sm:$0xff] %v2857
    %v2859 = vld [vmem:[#allocation3 + $0xd8] sm:$0xff]
    %v2860 = vsel %vm2831, %v2754, %v2859
    %2861 = vst [vmem:[#allocation3 + $0xd8] sm:$0xff] %v2860
    %v2862 = vld [vmem:[#allocation3 + $0xf0] sm:$0xff]
    %v2863 = vsel %vm2831, %v2761, %v2862
    %2864 = vst [vmem:[#allocation3 + $0xf0] sm:$0xff] %v2863
    %v2865 = vld [vmem:[#allocation3 + $0x108] sm:$0xff]
    %v2866 = vsel %vm2831, %v2768, %v2865
    %2867 = vst [vmem:[#allocation3 + $0x108] sm:$0xff] %v2866
    %v2868 = vld [vmem:[#allocation3 + $0x120] sm:$0xff]
    %v2869 = vsel %vm2831, %v2775, %v2868
    %2870 = vst [vmem:[#allocation3 + $0x120] sm:$0xff] %v2869
    %v2871 = vld [vmem:[#allocation3 + $0x138] sm:$0xff]
    %v2872 = vsel %vm2831, %v2782, %v2871
    %2873 = vst [vmem:[#allocation3 + $0x138] sm:$0xff] %v2872
    %v2874 = vld [vmem:[#allocation3 + $0x150] sm:$0xff]
    %v2875 = vsel %vm2831, %v2789, %v2874
    %2876 = vst [vmem:[#allocation3 + $0x150] sm:$0xff] %v2875
    %v2877 = vld [vmem:[#allocation3 + $0x168] sm:$0xff]
    %v2878 = vsel %vm2831, %v2796, %v2877
    %2879 = vst [vmem:[#allocation3 + $0x168] sm:$0xff] %v2878
    %v2880 = vld [vmem:[#allocation3 + $0x180] sm:$0xff]
    %v2881 = vsel %vm2831, %v2803, %v2880
    %2882 = vst [vmem:[#allocation3 + $0x180] sm:$0xff] %v2881
    %v2883 = vld [vmem:[#allocation3 + $0x198] sm:$0xff]
    %v2884 = vsel %vm2831, %v2810, %v2883
    %2885 = vst [vmem:[#allocation3 + $0x198] sm:$0xff] %v2884
    %v2886 = vld [vmem:[#allocation2] sm:$0xff]
    %v2887 = vld [vmem:[#allocation2 + $0x8] sm:$0xff]
    %v2888 = vld [vmem:[#allocation2 + $0x10] sm:$0xff]
    %v2889 = vld [vmem:[#allocation2 + $0x18] sm:$0xff]
    %v2890 = vld [vmem:[#allocation2 + $0x20] sm:$0xff]
    %v2891 = vld [vmem:[#allocation2 + $0x28] sm:$0xff]
    %v2892 = vld [vmem:[#allocation2 + $0x30] sm:$0xff]
    %v2893 = vld [vmem:[#allocation2 + $0x38] sm:$0xff]
    %v2894 = vld [vmem:[#allocation2 + $0x40] sm:$0xff]
    %v2895 = vld [vmem:[#allocation2 + $0x48] sm:$0xff]
    %v2896 = vld [vmem:[#allocation2 + $0x50] sm:$0xff]
    %v2897 = vld [vmem:[#allocation2 + $0x58] sm:$0xff]
    %v2898 = vld [vmem:[#allocation2 + $0x60] sm:$0xff]
    %v2899 = vld [vmem:[#allocation2 + $0x68] sm:$0xff]
    %v2900 = vld [vmem:[#allocation2 + $0x70] sm:$0xff]
    %v2901 = vld [vmem:[#allocation2 + $0x78] sm:$0xff]
    %v2902 = vld [vmem:[#allocation2 + $0x80] sm:$0xff]
    %v2903 = vld [vmem:[#allocation2 + $0x88] sm:$0xff]
    %v2905 = vshrl.u32 %v2886, 16
    %v2907 = vshll.u32 %v2886, 16
    %v2909 = vrot.slane %v2907, 1
    %v2910 = vor.u32 %v2905, %v2909
    %v2912 = vshrl.u32 %v2887, 16
    %v2914 = vshll.u32 %v2887, 16
    %v2916 = vrot.slane %v2914, 1
    %v2917 = vor.u32 %v2912, %v2916
    %v2919 = vshrl.u32 %v2888, 16
    %v2921 = vshll.u32 %v2888, 16
    %v2923 = vrot.slane %v2921, 1
    %v2924 = vor.u32 %v2919, %v2923
    %v2926 = vshrl.u32 %v2889, 16
    %v2928 = vshll.u32 %v2889, 16
    %v2930 = vrot.slane %v2928, 1
    %v2931 = vor.u32 %v2926, %v2930
    %v2933 = vshrl.u32 %v2890, 16
    %v2935 = vshll.u32 %v2890, 16
    %v2937 = vrot.slane %v2935, 1
    %v2938 = vor.u32 %v2933, %v2937
    %v2940 = vshrl.u32 %v2891, 16
    %v2942 = vshll.u32 %v2891, 16
    %v2944 = vrot.slane %v2942, 1
    %v2945 = vor.u32 %v2940, %v2944
    %v2947 = vshrl.u32 %v2892, 16
    %v2949 = vshll.u32 %v2892, 16
    %v2951 = vrot.slane %v2949, 1
    %v2952 = vor.u32 %v2947, %v2951
    %v2954 = vshrl.u32 %v2893, 16
    %v2956 = vshll.u32 %v2893, 16
    %v2958 = vrot.slane %v2956, 1
    %v2959 = vor.u32 %v2954, %v2958
    %v2961 = vshrl.u32 %v2894, 16
    %v2963 = vshll.u32 %v2894, 16
    %v2965 = vrot.slane %v2963, 1
    %v2966 = vor.u32 %v2961, %v2965
    %v2968 = vshrl.u32 %v2895, 16
    %v2970 = vshll.u32 %v2895, 16
    %v2972 = vrot.slane %v2970, 1
    %v2973 = vor.u32 %v2968, %v2972
    %v2975 = vshrl.u32 %v2896, 16
    %v2977 = vshll.u32 %v2896, 16
    %v2979 = vrot.slane %v2977, 1
    %v2980 = vor.u32 %v2975, %v2979
    %v2982 = vshrl.u32 %v2897, 16
    %v2984 = vshll.u32 %v2897, 16
    %v2986 = vrot.slane %v2984, 1
    %v2987 = vor.u32 %v2982, %v2986
    %v2989 = vshrl.u32 %v2898, 16
    %v2991 = vshll.u32 %v2898, 16
    %v2993 = vrot.slane %v2991, 1
    %v2994 = vor.u32 %v2989, %v2993
    %v2996 = vshrl.u32 %v2899, 16
    %v2998 = vshll.u32 %v2899, 16
    %v3000 = vrot.slane %v2998, 1
    %v3001 = vor.u32 %v2996, %v3000
    %v3003 = vshrl.u32 %v2900, 16
    %v3005 = vshll.u32 %v2900, 16
    %v3007 = vrot.slane %v3005, 1
    %v3008 = vor.u32 %v3003, %v3007
    %v3010 = vshrl.u32 %v2901, 16
    %v3012 = vshll.u32 %v2901, 16
    %v3014 = vrot.slane %v3012, 1
    %v3015 = vor.u32 %v3010, %v3014
    %v3017 = vshrl.u32 %v2902, 16
    %v3019 = vshll.u32 %v2902, 16
    %v3021 = vrot.slane %v3019, 1
    %v3022 = vor.u32 %v3017, %v3021
    %v3024 = vshrl.u32 %v2903, 16
    %v3026 = vshll.u32 %v2903, 16
    %v3028 = vrot.slane %v3026, 1
    %v3029 = vor.u32 %v3024, %v3028
    %vm3048 = vsmask.f32 7424
    %vm3049 = vmand %vm2829, %vm3048
    %v3050 = vld [vmem:[#allocation3 + $0x10] sm:$0xff]
    %v3051 = vsel %vm3049, %v2910, %v3050
    %3052 = vst [vmem:[#allocation3 + $0x10] sm:$0xff] %v3051
    %v3053 = vld [vmem:[#allocation3 + $0x28] sm:$0xff]
    %v3054 = vsel %vm3049, %v2917, %v3053
    %3055 = vst [vmem:[#allocation3 + $0x28] sm:$0xff] %v3054
    %v3056 = vld [vmem:[#allocation3 + $0x40] sm:$0xff]
    %v3057 = vsel %vm3049, %v2924, %v3056
    %3058 = vst [vmem:[#allocation3 + $0x40] sm:$0xff] %v3057
    %v3059 = vld [vmem:[#allocation3 + $0x58] sm:$0xff]
    %v3060 = vsel %vm3049, %v2931, %v3059
    %3061 = vst [vmem:[#allocation3 + $0x58] sm:$0xff] %v3060
    %v3062 = vld [vmem:[#allocation3 + $0x70] sm:$0xff]
    %v3063 = vsel %vm3049, %v2938, %v3062
    %3064 = vst [vmem:[#allocation3 + $0x70] sm:$0xff] %v3063
    %v3065 = vld [vmem:[#allocation3 + $0x88] sm:$0xff]
    %v3066 = vsel %vm3049, %v2945, %v3065
    %3067 = vst [vmem:[#allocation3 + $0x88] sm:$0xff] %v3066
    %v3068 = vld [vmem:[#allocation3 + $0xa0] sm:$0xff]
    %v3069 = vsel %vm3049, %v2952, %v3068
    %3070 = vst [vmem:[#allocation3 + $0xa0] sm:$0xff] %v3069
    %v3071 = vld [vmem:[#allocation3 + $0xb8] sm:$0xff]
    %v3072 = vsel %vm3049, %v2959, %v3071
    %3073 = vst [vmem:[#allocation3 + $0xb8] sm:$0xff] %v3072
    %v3074 = vld [vmem:[#allocation3 + $0xd0] sm:$0xff]
    %v3075 = vsel %vm3049, %v2966, %v3074
    %3076 = vst [vmem:[#allocation3 + $0xd0] sm:$0xff] %v3075
    %v3077 = vld [vmem:[#allocation3 + $0xe8] sm:$0xff]
    %v3078 = vsel %vm3049, %v2973, %v3077
    %3079 = vst [vmem:[#allocation3 + $0xe8] sm:$0xff] %v3078
    %v3080 = vld [vmem:[#allocation3 + $0x100] sm:$0xff]
    %v3081 = vsel %vm3049, %v2980, %v3080
    %3082 = vst [vmem:[#allocation3 + $0x100] sm:$0xff] %v3081
    %v3083 = vld [vmem:[#allocation3 + $0x118] sm:$0xff]
    %v3084 = vsel %vm3049, %v2987, %v3083
    %3085 = vst [vmem:[#allocation3 + $0x118] sm:$0xff] %v3084
    %v3086 = vld [vmem:[#allocation3 + $0x130] sm:$0xff]
    %v3087 = vsel %vm3049, %v2994, %v3086
    %3088 = vst [vmem:[#allocation3 + $0x130] sm:$0xff] %v3087
    %v3089 = vld [vmem:[#allocation3 + $0x148] sm:$0xff]
    %v3090 = vsel %vm3049, %v3001, %v3089
    %3091 = vst [vmem:[#allocation3 + $0x148] sm:$0xff] %v3090
    %v3092 = vld [vmem:[#allocation3 + $0x160] sm:$0xff]
    %v3093 = vsel %vm3049, %v3008, %v3092
    %3094 = vst [vmem:[#allocation3 + $0x160] sm:$0xff] %v3093
    %v3095 = vld [vmem:[#allocation3 + $0x178] sm:$0xff]
    %v3096 = vsel %vm3049, %v3015, %v3095
    %3097 = vst [vmem:[#allocation3 + $0x178] sm:$0xff] %v3096
    %v3098 = vld [vmem:[#allocation3 + $0x190] sm:$0xff]
    %v3099 = vsel %vm3049, %v3022, %v3098
    %3100 = vst [vmem:[#allocation3 + $0x190] sm:$0xff] %v3099
    %v3101 = vld [vmem:[#allocation3 + $0x1a8] sm:$0xff]
    %v3102 = vsel %vm3049, %v3029, %v3101
    %3103 = vst [vmem:[#allocation3 + $0x1a8] sm:$0xff] %v3102
    %v3104 = vld [vmem:[#allocation3] sm:$0xff]
    %v3105 = vld [vmem:[#allocation3 + $0x8] sm:$0xff]
    %v3106 = vld [vmem:[#allocation3 + $0x10] sm:$0xff]
    %v3107 = vld [vmem:[#allocation3 + $0x18] sm:$0xff]
    %v3108 = vld [vmem:[#allocation3 + $0x20] sm:$0xff]
    %v3109 = vld [vmem:[#allocation3 + $0x28] sm:$0xff]
    %v3110 = vld [vmem:[#allocation3 + $0x30] sm:$0xff]
    %v3111 = vld [vmem:[#allocation3 + $0x38] sm:$0xff]
    %v3112 = vld [vmem:[#allocation3 + $0x40] sm:$0xff]
    %v3113 = vld [vmem:[#allocation3 + $0x48] sm:$0xff]
    %v3114 = vld [vmem:[#allocation3 + $0x50] sm:$0xff]
    %v3115 = vld [vmem:[#allocation3 + $0x58] sm:$0xff]
    %v3116 = vld [vmem:[#allocation3 + $0x60] sm:$0xff]
    %v3117 = vld [vmem:[#allocation3 + $0x68] sm:$0xff]
    %v3118 = vld [vmem:[#allocation3 + $0x70] sm:$0xff]
    %v3119 = vld [vmem:[#allocation3 + $0x78] sm:$0xff]
    %v3120 = vld [vmem:[#allocation3 + $0x80] sm:$0xff]
    %v3121 = vld [vmem:[#allocation3 + $0x88] sm:$0xff]
    %v3122 = vld [vmem:[#allocation3 + $0x90] sm:$0xff]
    %v3123 = vld [vmem:[#allocation3 + $0x98] sm:$0xff]
    %v3124 = vld [vmem:[#allocation3 + $0xa0] sm:$0xff]
    %v3125 = vld [vmem:[#allocation3 + $0xa8] sm:$0xff]
    %v3126 = vld [vmem:[#allocation3 + $0xb0] sm:$0xff]
    %v3127 = vld [vmem:[#allocation3 + $0xb8] sm:$0xff]
    %v3128 = vld [vmem:[#allocation3 + $0xc0] sm:$0xff]
    %v3129 = vld [vmem:[#allocation3 + $0xc8] sm:$0xff]
    %v3130 = vld [vmem:[#allocation3 + $0xd0] sm:$0xff]
    %v3131 = vld [vmem:[#allocation3 + $0xd8] sm:$0xff]
    %v3132 = vld [vmem:[#allocation3 + $0xe0] sm:$0xff]
    %v3133 = vld [vmem:[#allocation3 + $0xe8] sm:$0xff]
    %v3134 = vld [vmem:[#allocation3 + $0xf0] sm:$0xff]
    %v3135 = vld [vmem:[#allocation3 + $0xf8] sm:$0xff]
    %v3136 = vld [vmem:[#allocation3 + $0x100] sm:$0xff]
    %v3137 = vld [vmem:[#allocation3 + $0x108] sm:$0xff]
    %v3138 = vld [vmem:[#allocation3 + $0x110] sm:$0xff]
    %v3139 = vld [vmem:[#allocation3 + $0x118] sm:$0xff]
    %v3140 = vld [vmem:[#allocation3 + $0x120] sm:$0xff]
    %v3141 = vld [vmem:[#allocation3 + $0x128] sm:$0xff]
    %v3142 = vld [vmem:[#allocation3 + $0x130] sm:$0xff]
    %v3143 = vld [vmem:[#allocation3 + $0x138] sm:$0xff]
    %v3144 = vld [vmem:[#allocation3 + $0x140] sm:$0xff]
    %v3145 = vld [vmem:[#allocation3 + $0x148] sm:$0xff]
    %v3146 = vld [vmem:[#allocation3 + $0x150] sm:$0xff]
    %v3147 = vld [vmem:[#allocation3 + $0x158] sm:$0xff]
    %v3148 = vld [vmem:[#allocation3 + $0x160] sm:$0xff]
    %v3149 = vld [vmem:[#allocation3 + $0x168] sm:$0xff]
    %v3150 = vld [vmem:[#allocation3 + $0x170] sm:$0xff]
    %v3151 = vld [vmem:[#allocation3 + $0x178] sm:$0xff]
    %s3152 = scalar_lea.vmem [#allocation4], 9216
    %v3153 = vld [vmem:[%s3152] sm:$0xf]
    %v3154 = vld [vmem:[%s3152 + $0x4] sm:$0xf]
    %v3155 = vld [vmem:[%s3152 + $0x8] sm:$0xf]
    %v3156 = vld [vmem:[%s3152 + $0xc] sm:$0xf]
    %v3157 = vld [vmem:[%s3152 + $0x10] sm:$0xf]
    %v3158 = vld [vmem:[%s3152 + $0x14] sm:$0xf]
    %v3159 = vld [vmem:[%s3152 + $0x18] sm:$0xf]
    %v3160 = vld [vmem:[%s3152 + $0x1c] sm:$0xf]
    %v3161 = vld [vmem:[%s3152 + $0x20] sm:$0xf]
    %v3162 = vld [vmem:[%s3152 + $0x24] sm:$0xf]
    %v3163 = vld [vmem:[%s3152 + $0x28] sm:$0xf]
    %v3164 = vld [vmem:[%s3152 + $0x2c] sm:$0xf]
    %v3165 = vld [vmem:[%s3152 + $0x30] sm:$0xf]
    %v3166 = vld [vmem:[%s3152 + $0x34] sm:$0xf]
    %v3167 = vld [vmem:[%s3152 + $0x38] sm:$0xf]
    %v3168 = vld [vmem:[%s3152 + $0x3c] sm:$0xf]
    %v3169 = vld [vmem:[%s3152 + $0x40] sm:$0xf]
    %v3170 = vld [vmem:[%s3152 + $0x44] sm:$0xf]
    %v3171 = vld [vmem:[%s3152 + $0x48] sm:$0xf]
    %v3172 = vld [vmem:[%s3152 + $0x4c] sm:$0xf]
    %v3173 = vld [vmem:[%s3152 + $0x50] sm:$0xf]
    %v3174 = vld [vmem:[%s3152 + $0x54] sm:$0xf]
    %v3175 = vld [vmem:[%s3152 + $0x58] sm:$0xf]
    %v3176 = vld [vmem:[%s3152 + $0x5c] sm:$0xf]
    %v3177 = vld [vmem:[%s3152 + $0x60] sm:$0xf]
    %v3178 = vld [vmem:[%s3152 + $0x64] sm:$0xf]
    %v3179 = vld [vmem:[%s3152 + $0x68] sm:$0xf]
    %v3180 = vld [vmem:[%s3152 + $0x6c] sm:$0xf]
    %v3181 = vld [vmem:[%s3152 + $0x70] sm:$0xf]
    %v3182 = vld [vmem:[%s3152 + $0x74] sm:$0xf]
    %v3183 = vld [vmem:[%s3152 + $0x78] sm:$0xf]
    %v3184 = vld [vmem:[%s3152 + $0x7c] sm:$0xf]
    %v3185 = vld [vmem:[%s3152 + $0x80] sm:$0xf]
    %v3186 = vld [vmem:[%s3152 + $0x84] sm:$0xf]
    %v3187 = vld [vmem:[%s3152 + $0x88] sm:$0xf]
    %v3188 = vld [vmem:[%s3152 + $0x8c] sm:$0xf]
    %v3189 = vld [vmem:[%s3152 + $0x90] sm:$0xf]
    %v3190 = vld [vmem:[%s3152 + $0x94] sm:$0xf]
    %v3191 = vld [vmem:[%s3152 + $0x98] sm:$0xf]
    %v3192 = vld [vmem:[%s3152 + $0x9c] sm:$0xf]
    %v3193 = vld [vmem:[%s3152 + $0xa0] sm:$0xf]
    %v3194 = vld [vmem:[%s3152 + $0xa4] sm:$0xf]
    %v3195 = vld [vmem:[%s3152 + $0xa8] sm:$0xf]
    %v3196 = vld [vmem:[%s3152 + $0xac] sm:$0xf]
    %v3197 = vld [vmem:[%s3152 + $0xb0] sm:$0xf]
    %v3198 = vld [vmem:[%s3152 + $0xb4] sm:$0xf]
    %v3199 = vld [vmem:[%s3152 + $0xb8] sm:$0xf]
    %v3200 = vld [vmem:[%s3152 + $0xbc] sm:$0xf]
    %s3201 = scalar_lea.vmem [#allocation3], 24
    %v3202 = vld [vmem:[%s3201] sm:$0xff]
    %v3203 = vld [vmem:[%s3201 + $0x8] sm:$0xff]
    %v3204 = vld [vmem:[%s3201 + $0x10] sm:$0xff]
    %v3205 = vld [vmem:[%s3201 + $0x18] sm:$0xff]
    %v3206 = vld [vmem:[%s3201 + $0x20] sm:$0xff]
    %v3207 = vld [vmem:[%s3201 + $0x28] sm:$0xff]
    %v3208 = vld [vmem:[%s3201 + $0x30] sm:$0xff]
    %v3209 = vld [vmem:[%s3201 + $0x38] sm:$0xff]
    %v3210 = vld [vmem:[%s3201 + $0x40] sm:$0xff]
    %v3211 = vld [vmem:[%s3201 + $0x48] sm:$0xff]
    %v3212 = vld [vmem:[%s3201 + $0x50] sm:$0xff]
    %v3213 = vld [vmem:[%s3201 + $0x58] sm:$0xff]
    %v3214 = vld [vmem:[%s3201 + $0x60] sm:$0xff]
    %v3215 = vld [vmem:[%s3201 + $0x68] sm:$0xff]
    %v3216 = vld [vmem:[%s3201 + $0x70] sm:$0xff]
    %v3217 = vld [vmem:[%s3201 + $0x78] sm:$0xff]
    %v3218 = vld [vmem:[%s3201 + $0x80] sm:$0xff]
    %v3219 = vld [vmem:[%s3201 + $0x88] sm:$0xff]
    %v3220 = vld [vmem:[%s3201 + $0x90] sm:$0xff]
    %v3221 = vld [vmem:[%s3201 + $0x98] sm:$0xff]
    %v3222 = vld [vmem:[%s3201 + $0xa0] sm:$0xff]
    %v3223 = vld [vmem:[%s3201 + $0xa8] sm:$0xff]
    %v3224 = vld [vmem:[%s3201 + $0xb0] sm:$0xff]
    %v3225 = vld [vmem:[%s3201 + $0xb8] sm:$0xff]
    %v3226 = vld [vmem:[%s3201 + $0xc0] sm:$0xff]
    %v3227 = vld [vmem:[%s3201 + $0xc8] sm:$0xff]
    %v3228 = vld [vmem:[%s3201 + $0xd0] sm:$0xff]
    %v3229 = vld [vmem:[%s3201 + $0xd8] sm:$0xff]
    %v3230 = vld [vmem:[%s3201 + $0xe0] sm:$0xff]
    %v3231 = vld [vmem:[%s3201 + $0xe8] sm:$0xff]
    %v3232 = vld [vmem:[%s3201 + $0xf0] sm:$0xff]
    %v3233 = vld [vmem:[%s3201 + $0xf8] sm:$0xff]
    %v3234 = vld [vmem:[%s3201 + $0x100] sm:$0xff]
    %v3235 = vld [vmem:[%s3201 + $0x108] sm:$0xff]
    %v3236 = vld [vmem:[%s3201 + $0x110] sm:$0xff]
    %v3237 = vld [vmem:[%s3201 + $0x118] sm:$0xff]
    %v3238 = vld [vmem:[%s3201 + $0x120] sm:$0xff]
    %v3239 = vld [vmem:[%s3201 + $0x128] sm:$0xff]
    %v3240 = vld [vmem:[%s3201 + $0x130] sm:$0xff]
    %v3241 = vld [vmem:[%s3201 + $0x138] sm:$0xff]
    %v3242 = vld [vmem:[%s3201 + $0x140] sm:$0xff]
    %v3243 = vld [vmem:[%s3201 + $0x148] sm:$0xff]
    %v3244 = vld [vmem:[%s3201 + $0x150] sm:$0xff]
    %v3245 = vld [vmem:[%s3201 + $0x158] sm:$0xff]
    %v3246 = vld [vmem:[%s3201 + $0x160] sm:$0xff]
    %v3247 = vld [vmem:[%s3201 + $0x168] sm:$0xff]
    %v3248 = vld [vmem:[%s3201 + $0x170] sm:$0xff]
    %v3249 = vld [vmem:[%s3201 + $0x178] sm:$0xff]
    %s3250 = scalar_lea.vmem [#allocation4], 9408
    %v3251 = vld [vmem:[%s3250] sm:$0xf]
    %v3252 = vld [vmem:[%s3250 + $0x4] sm:$0xf]
    %v3253 = vld [vmem:[%s3250 + $0x8] sm:$0xf]
    %v3254 = vld [vmem:[%s3250 + $0xc] sm:$0xf]
    %v3255 = vld [vmem:[%s3250 + $0x10] sm:$0xf]
    %v3256 = vld [vmem:[%s3250 + $0x14] sm:$0xf]
    %v3257 = vld [vmem:[%s3250 + $0x18] sm:$0xf]
    %v3258 = vld [vmem:[%s3250 + $0x1c] sm:$0xf]
    %v3259 = vld [vmem:[%s3250 + $0x20] sm:$0xf]
    %v3260 = vld [vmem:[%s3250 + $0x24] sm:$0xf]
    %v3261 = vld [vmem:[%s3250 + $0x28] sm:$0xf]
    %v3262 = vld [vmem:[%s3250 + $0x2c] sm:$0xf]
    %v3263 = vld [vmem:[%s3250 + $0x30] sm:$0xf]
    %v3264 = vld [vmem:[%s3250 + $0x34] sm:$0xf]
    %v3265 = vld [vmem:[%s3250 + $0x38] sm:$0xf]
    %v3266 = vld [vmem:[%s3250 + $0x3c] sm:$0xf]
    %v3267 = vld [vmem:[%s3250 + $0x40] sm:$0xf]
    %v3268 = vld [vmem:[%s3250 + $0x44] sm:$0xf]
    %v3269 = vld [vmem:[%s3250 + $0x48] sm:$0xf]
    %v3270 = vld [vmem:[%s3250 + $0x4c] sm:$0xf]
    %v3271 = vld [vmem:[%s3250 + $0x50] sm:$0xf]
    %v3272 = vld [vmem:[%s3250 + $0x54] sm:$0xf]
    %v3273 = vld [vmem:[%s3250 + $0x58] sm:$0xf]
    %v3274 = vld [vmem:[%s3250 + $0x5c] sm:$0xf]
    %v3275 = vld [vmem:[%s3250 + $0x60] sm:$0xf]
    %v3276 = vld [vmem:[%s3250 + $0x64] sm:$0xf]
    %v3277 = vld [vmem:[%s3250 + $0x68] sm:$0xf]
    %v3278 = vld [vmem:[%s3250 + $0x6c] sm:$0xf]
    %v3279 = vld [vmem:[%s3250 + $0x70] sm:$0xf]
    %v3280 = vld [vmem:[%s3250 + $0x74] sm:$0xf]
    %v3281 = vld [vmem:[%s3250 + $0x78] sm:$0xf]
    %v3282 = vld [vmem:[%s3250 + $0x7c] sm:$0xf]
    %v3283 = vld [vmem:[%s3250 + $0x80] sm:$0xf]
    %v3284 = vld [vmem:[%s3250 + $0x84] sm:$0xf]
    %v3285 = vld [vmem:[%s3250 + $0x88] sm:$0xf]
    %v3286 = vld [vmem:[%s3250 + $0x8c] sm:$0xf]
    %v3287 = vld [vmem:[%s3250 + $0x90] sm:$0xf]
    %v3288 = vld [vmem:[%s3250 + $0x94] sm:$0xf]
    %v3289 = vld [vmem:[%s3250 + $0x98] sm:$0xf]
    %v3290 = vld [vmem:[%s3250 + $0x9c] sm:$0xf]
    %v3291 = vld [vmem:[%s3250 + $0xa0] sm:$0xf]
    %v3292 = vld [vmem:[%s3250 + $0xa4] sm:$0xf]
    %v3293 = vld [vmem:[%s3250 + $0xa8] sm:$0xf]
    %v3294 = vld [vmem:[%s3250 + $0xac] sm:$0xf]
    %v3295 = vld [vmem:[%s3250 + $0xb0] sm:$0xf]
    %v3296 = vld [vmem:[%s3250 + $0xb4] sm:$0xf]
    %v3297 = vld [vmem:[%s3250 + $0xb8] sm:$0xf]
    %v3298 = vld [vmem:[%s3250 + $0xbc] sm:$0xf]
    %v3347 = vunpack.c.l.b16 %v3251
    %v3348 = vunpack.c.l.b16 %v3252
    %v3349 = vunpack.c.l.b16 %v3253
    %v3350 = vunpack.c.l.b16 %v3254
    %v3351 = vunpack.c.l.b16 %v3255
    %v3352 = vunpack.c.l.b16 %v3256
    %v3353 = vunpack.c.l.b16 %v3257
    %v3354 = vunpack.c.l.b16 %v3258
    %v3355 = vunpack.c.l.b16 %v3259
    %v3356 = vunpack.c.l.b16 %v3260
    %v3357 = vunpack.c.l.b16 %v3261
    %v3358 = vunpack.c.l.b16 %v3262
    %v3359 = vunpack.c.l.b16 %v3263
    %v3360 = vunpack.c.l.b16 %v3264
    %v3361 = vunpack.c.l.b16 %v3265
    %v3362 = vunpack.c.l.b16 %v3266
    %v3363 = vunpack.c.l.b16 %v3267
    %v3364 = vunpack.c.l.b16 %v3268
    %v3365 = vunpack.c.l.b16 %v3269
    %v3366 = vunpack.c.l.b16 %v3270
    %v3367 = vunpack.c.l.b16 %v3271
    %v3368 = vunpack.c.l.b16 %v3272
    %v3369 = vunpack.c.l.b16 %v3273
    %v3370 = vunpack.c.l.b16 %v3274
    %v3371 = vunpack.c.l.b16 %v3275
    %v3372 = vunpack.c.l.b16 %v3276
    %v3373 = vunpack.c.l.b16 %v3277
    %v3374 = vunpack.c.l.b16 %v3278
    %v3375 = vunpack.c.l.b16 %v3279
    %v3376 = vunpack.c.l.b16 %v3280
    %v3377 = vunpack.c.l.b16 %v3281
    %v3378 = vunpack.c.l.b16 %v3282
    %v3379 = vunpack.c.l.b16 %v3283
    %v3380 = vunpack.c.l.b16 %v3284
    %v3381 = vunpack.c.l.b16 %v3285
    %v3382 = vunpack.c.l.b16 %v3286
    %v3383 = vunpack.c.l.b16 %v3287
    %v3384 = vunpack.c.l.b16 %v3288
    %v3385 = vunpack.c.l.b16 %v3289
    %v3386 = vunpack.c.l.b16 %v3290
    %v3387 = vunpack.c.l.b16 %v3291
    %v3388 = vunpack.c.l.b16 %v3292
    %v3389 = vunpack.c.l.b16 %v3293
    %v3390 = vunpack.c.l.b16 %v3294
    %v3391 = vunpack.c.l.b16 %v3295
    %v3392 = vunpack.c.l.b16 %v3296
    %v3393 = vunpack.c.l.b16 %v3297
    %v3394 = vunpack.c.l.b16 %v3298
    %v3395 = vpack.c.b16 %v3348, %v3347
    %v3396 = vpack.c.b16 %v3350, %v3349
    %v3397 = vpack.c.b16 %v3352, %v3351
    %v3398 = vpack.c.b16 %v3354, %v3353
    %v3399 = vpack.c.b16 %v3356, %v3355
    %v3400 = vpack.c.b16 %v3358, %v3357
    %v3401 = vpack.c.b16 %v3360, %v3359
    %v3402 = vpack.c.b16 %v3362, %v3361
    %v3403 = vpack.c.b16 %v3364, %v3363
    %v3404 = vpack.c.b16 %v3366, %v3365
    %v3405 = vpack.c.b16 %v3368, %v3367
    %v3406 = vpack.c.b16 %v3370, %v3369
    %v3407 = vpack.c.b16 %v3372, %v3371
    %v3408 = vpack.c.b16 %v3374, %v3373
    %v3409 = vpack.c.b16 %v3376, %v3375
    %v3410 = vpack.c.b16 %v3378, %v3377
    %v3411 = vpack.c.b16 %v3380, %v3379
    %v3412 = vpack.c.b16 %v3382, %v3381
    %v3413 = vpack.c.b16 %v3384, %v3383
    %v3414 = vpack.c.b16 %v3386, %v3385
    %v3415 = vpack.c.b16 %v3388, %v3387
    %v3416 = vpack.c.b16 %v3390, %v3389
    %v3417 = vpack.c.b16 %v3392, %v3391
    %v3418 = vpack.c.b16 %v3394, %v3393
    %3443 = vmatprep.subr.bf16.mxu0 0
    %3444 = vmatpush1.bf16.msra.mxu0 %v3395
    %3445 = vmatprep.subr.bf16.mxu0 0
    %3446 = vmatpush1.bf16.msra.mxu0 %v3396
    %3447 = vmatprep.subr.bf16.mxu0 0
    %3448 = vmatpush1.bf16.msra.mxu0 %v3397
    %3449 = vmatprep.subr.bf16.mxu0 0
    %3450 = vmatpush1.bf16.msra.mxu0 %v3398
    %3451 = vmatprep.subr.bf16.mxu0 0
    %3452 = vmatpush1.bf16.msra.mxu0 %v3399
    %3453 = vmatprep.subr.bf16.mxu0 0
    %3454 = vmatpush1.bf16.msra.mxu0 %v3400
    %3455 = vmatprep.subr.bf16.mxu0 0
    %3456 = vmatpush1.bf16.msra.mxu0 %v3401
    %3457 = vmatprep.subr.bf16.mxu0 0
    %3458 = vmatpush1.bf16.msra.mxu0 %v3402
    %3459 = vmatprep.subr.bf16.mxu0 0
    %3460 = vmatpush1.bf16.msra.mxu0 %v3403
    %3461 = vmatprep.subr.bf16.mxu0 0
    %3462 = vmatpush1.bf16.msra.mxu0 %v3404
    %3463 = vmatprep.subr.bf16.mxu0 0
    %3464 = vmatpush1.bf16.msra.mxu0 %v3405
    %3465 = vmatprep.subr.bf16.mxu0 0
    %3466 = vmatpush1.bf16.msra.mxu0 %v3406
    %3467 = vmatprep.subr.bf16.mxu0 0
    %3468 = vmatpush1.bf16.msra.mxu0 %v3407
    %3469 = vmatprep.subr.bf16.mxu0 0
    %3470 = vmatpush1.bf16.msra.mxu0 %v3408
    %3471 = vmatprep.subr.bf16.mxu0 0
    %3472 = vmatpush1.bf16.msra.mxu0 %v3409
    %3473 = vmatprep.subr.bf16.mxu0 0
    %3474 = vmatpush1.bf16.msra.mxu0 %v3410
    %3475 = vmatprep.mubr.bf16.mxu0 %v3203
    %3476 = vmatmul.mubr.bf16.gmra.mrb[0].mxu0 %v3202
    %v3477 = vpop.f32.mrb[0].mxu0
    %v3478 = vadd.f32 0.0, %v3477
    %v3479 = vpop.f32.mrb[0].mxu0
    %v3480 = vpop.f32.mrb[0].mxu0
    %v3481 = vadd.f32 0.0, %v3480
    %v3482 = vpop.f32.mrb[0].mxu0
    %3483 = vmatprep.mubr.bf16.mxu0 %v3206
    %3484 = vmatmul.mubr.bf16.gmra.mrb[0].mxu0 %v3205
    %v3485 = vpop.f32.mrb[0].mxu0
    %v3486 = vadd.f32 0.0, %v3485
    %v3487 = vpop.f32.mrb[0].mxu0
    %v3488 = vpop.f32.mrb[0].mxu0
    %v3489 = vadd.f32 0.0, %v3488
    %v3490 = vpop.f32.mrb[0].mxu0
    %3491 = vmatprep.mubr.bf16.mxu0 %v3209
    %3492 = vmatmul.mubr.bf16.gmra.mrb[0].mxu0 %v3208
    %v3493 = vpop.f32.mrb[0].mxu0
    %v3494 = vadd.f32 0.0, %v3493
    %v3495 = vpop.f32.mrb[0].mxu0
    %v3496 = vpop.f32.mrb[0].mxu0
    %v3497 = vadd.f32 0.0, %v3496
    %v3498 = vpop.f32.mrb[0].mxu0
    %3499 = vmatprep.mubr.bf16.mxu0 %v3212
    %3500 = vmatmul.mubr.bf16.gmra.mrb[0].mxu0 %v3211
    %v3501 = vpop.f32.mrb[0].mxu0
    %v3502 = vadd.f32 0.0, %v3501
    %v3503 = vpop.f32.mrb[0].mxu0
    %v3504 = vpop.f32.mrb[0].mxu0
    %v3505 = vadd.f32 0.0, %v3504
    %v3506 = vpop.f32.mrb[0].mxu0
    %3507 = vmatprep.mubr.bf16.mxu0 %v3215
    %3508 = vmatmul.mubr.bf16.gmra.mrb[0].mxu0 %v3214
    %v3509 = vpop.f32.mrb[0].mxu0
    %v3510 = vadd.f32 0.0, %v3509
    %v3511 = vpop.f32.mrb[0].mxu0
    %v3512 = vpop.f32.mrb[0].mxu0
    %v3513 = vadd.f32 0.0, %v3512
    %v3514 = vpop.f32.mrb[0].mxu0
    %3515 = vmatprep.mubr.bf16.mxu0 %v3218
    %3516 = vmatmul.mubr.bf16.gmra.mrb[0].mxu0 %v3217
    %v3517 = vpop.f32.mrb[0].mxu0
    %v3518 = vadd.f32 0.0, %v3517
    %v3519 = vpop.f32.mrb[0].mxu0
    %v3520 = vpop.f32.mrb[0].mxu0
    %v3521 = vadd.f32 0.0, %v3520
    %v3522 = vpop.f32.mrb[0].mxu0
    %3523 = vmatprep.mubr.bf16.mxu0 %v3221
    %3524 = vmatmul.mubr.bf16.gmra.mrb[0].mxu0 %v3220
    %v3525 = vpop.f32.mrb[0].mxu0
    %v3526 = vadd.f32 0.0, %v3525
    %v3527 = vpop.f32.mrb[0].mxu0
    %v3528 = vpop.f32.mrb[0].mxu0
    %v3529 = vadd.f32 0.0, %v3528
    %v3530 = vpop.f32.mrb[0].mxu0
    %3531 = vmatprep.mubr.bf16.mxu0 %v3224
    %3532 = vmatmul.mubr.bf16.gmra.mrb[0].mxu0 %v3223
    %v3533 = vpop.f32.mrb[0].mxu0
    %v3534 = vadd.f32 0.0, %v3533
    %v3535 = vpop.f32.mrb[0].mxu0
    %v3536 = vpop.f32.mrb[0].mxu0
    %v3537 = vadd.f32 0.0, %v3536
    %v3538 = vpop.f32.mrb[0].mxu0
    %3539 = vmatprep.mubr.bf16.mxu0 %v3227
    %3540 = vmatmul.mubr.bf16.gmra.mrb[0].mxu0 %v3226
    %v3541 = vpop.f32.mrb[0].mxu0
    %v3542 = vadd.f32 0.0, %v3541
    %v3543 = vpop.f32.mrb[0].mxu0
    %v3544 = vpop.f32.mrb[0].mxu0
    %v3545 = vadd.f32 0.0, %v3544
    %v3546 = vpop.f32.mrb[0].mxu0
    %3547 = vmatprep.mubr.bf16.mxu0 %v3230
    %3548 = vmatmul.mubr.bf16.gmra.mrb[0].mxu0 %v3229
    %v3549 = vpop.f32.mrb[0].mxu0
    %v3550 = vadd.f32 0.0, %v3549
    %v3551 = vpop.f32.mrb[0].mxu0
    %v3552 = vpop.f32.mrb[0].mxu0
    %v3553 = vadd.f32 0.0, %v3552
    %v3554 = vpop.f32.mrb[0].mxu0
    %3555 = vmatprep.mubr.bf16.mxu0 %v3233
    %3556 = vmatmul.mubr.bf16.gmra.mrb[0].mxu0 %v3232
    %v3557 = vpop.f32.mrb[0].mxu0
    %v3558 = vadd.f32 0.0, %v3557
    %v3559 = vpop.f32.mrb[0].mxu0
    %v3560 = vpop.f32.mrb[0].mxu0
    %v3561 = vadd.f32 0.0, %v3560
    %v3562 = vpop.f32.mrb[0].mxu0
    %3563 = vmatprep.mubr.bf16.mxu0 %v3236
    %3564 = vmatmul.mubr.bf16.gmra.mrb[0].mxu0 %v3235
    %v3565 = vpop.f32.mrb[0].mxu0
    %v3566 = vadd.f32 0.0, %v3565
    %v3567 = vpop.f32.mrb[0].mxu0
    %v3568 = vpop.f32.mrb[0].mxu0
    %v3569 = vadd.f32 0.0, %v3568
    %v3570 = vpop.f32.mrb[0].mxu0
    %3571 = vmatprep.mubr.bf16.mxu0 %v3239
    %3572 = vmatmul.mubr.bf16.gmra.mrb[0].mxu0 %v3238
    %v3573 = vpop.f32.mrb[0].mxu0
    %v3574 = vadd.f32 0.0, %v3573
    %v3575 = vpop.f32.mrb[0].mxu0
    %v3576 = vpop.f32.mrb[0].mxu0
    %v3577 = vadd.f32 0.0, %v3576
    %v3578 = vpop.f32.mrb[0].mxu0
    %3579 = vmatprep.mubr.bf16.mxu0 %v3242
    %3580 = vmatmul.mubr.bf16.gmra.mrb[0].mxu0 %v3241
    %v3581 = vpop.f32.mrb[0].mxu0
    %v3582 = vadd.f32 0.0, %v3581
    %v3583 = vpop.f32.mrb[0].mxu0
    %v3584 = vpop.f32.mrb[0].mxu0
    %v3585 = vadd.f32 0.0, %v3584
    %v3586 = vpop.f32.mrb[0].mxu0
    %3587 = vmatprep.mubr.bf16.mxu0 %v3245
    %3588 = vmatmul.mubr.bf16.gmra.mrb[0].mxu0 %v3244
    %v3589 = vpop.f32.mrb[0].mxu0
    %v3590 = vadd.f32 0.0, %v3589
    %v3591 = vpop.f32.mrb[0].mxu0
    %v3592 = vpop.f32.mrb[0].mxu0
    %v3593 = vadd.f32 0.0, %v3592
    %v3594 = vpop.f32.mrb[0].mxu0
    %3595 = vmatprep.mubr.bf16.mxu0 %v3248
    %3596 = vmatmul.mubr.bf16.gmra.mrb[0].mxu0 %v3247
    %v3597 = vpop.f32.mrb[0].mxu0
    %v3598 = vadd.f32 0.0, %v3597
    %v3599 = vpop.f32.mrb[0].mxu0
    %v3600 = vpop.f32.mrb[0].mxu0
    %v3601 = vadd.f32 0.0, %v3600
    %v3602 = vpop.f32.mrb[0].mxu0
    %3603 = vdwg.mxu0
    %3604 = vmatprep.subr.bf16.mxu0 0
    %3605 = vmatpush1.bf16.msra.mxu0 %v3411
    %3606 = vmatprep.subr.bf16.mxu0 0
    %3607 = vmatpush1.bf16.msra.mxu0 %v3412
    %3608 = vmatprep.subr.bf16.mxu0 0
    %3609 = vmatpush1.bf16.msra.mxu0 %v3413
    %3610 = vmatprep.subr.bf16.mxu0 0
    %3611 = vmatpush1.bf16.msra.mxu0 %v3414
    %3612 = vmatprep.subr.bf16.mxu0 0
    %3613 = vmatpush1.bf16.msra.mxu0 %v3415
    %3614 = vmatprep.subr.bf16.mxu0 0
    %3615 = vmatpush1.bf16.msra.mxu0 %v3416
    %3616 = vmatprep.subr.bf16.mxu0 0
    %3617 = vmatpush1.bf16.msra.mxu0 %v3417
    %3618 = vmatprep.subr.bf16.mxu0 0
    %3619 = vmatpush1.bf16.msra.mxu0 %v3418
    %3620 = vmatprep.subr.bf16.mxu0 0
    %3621 = vmatpush1.bf16.msra.mxu0 0
    %3622 = vmatprep.subr.bf16.mxu0 0
    %3623 = vmatpush1.bf16.msra.mxu0 0
    %3624 = vmatprep.subr.bf16.mxu0 0
    %3625 = vmatpush1.bf16.msra.mxu0 0
    %3626 = vmatprep.subr.bf16.mxu0 0
    %3627 = vmatpush1.bf16.msra.mxu0 0
    %3628 = vmatprep.subr.bf16.mxu0 0
    %3629 = vmatpush1.bf16.msra.mxu0 0
    %3630 = vmatprep.subr.bf16.mxu0 0
    %3631 = vmatpush1.bf16.msra.mxu0 0
    %3632 = vmatprep.subr.bf16.mxu0 0
    %3633 = vmatpush1.bf16.msra.mxu0 0
    %3634 = vmatprep.subr.bf16.mxu0 0
    %3635 = vmatpush1.bf16.msra.mxu0 0
    %3636 = vmatprep.mubr.bf16.mxu0 0
    %3637 = vmatmul.mubr.bf16.gmra.mrb[0].mxu0 %v3204
    %v3638 = vpop.f32.mrb[0].mxu0
    %v3639 = vadd.f32 %v3478, %v3638
    %v3640 = vpop.f32.mrb[0].mxu0
    %v3641 = vpop.f32.mrb[0].mxu0
    %v3642 = vadd.f32 %v3481, %v3641
    %v3643 = vpop.f32.mrb[0].mxu0
    %3644 = vmatprep.mubr.bf16.mxu0 0
    %3645 = vmatmul.mubr.bf16.gmra.mrb[0].mxu0 %v3207
    %v3646 = vpop.f32.mrb[0].mxu0
    %v3647 = vadd.f32 %v3486, %v3646
    %v3648 = vpop.f32.mrb[0].mxu0
    %v3649 = vpop.f32.mrb[0].mxu0
    %v3650 = vadd.f32 %v3489, %v3649
    %v3651 = vpop.f32.mrb[0].mxu0
    %3652 = vmatprep.mubr.bf16.mxu0 0
    %3653 = vmatmul.mubr.bf16.gmra.mrb[0].mxu0 %v3210
    %v3654 = vpop.f32.mrb[0].mxu0
    %v3655 = vadd.f32 %v3494, %v3654
    %v3656 = vpop.f32.mrb[0].mxu0
    %v3657 = vpop.f32.mrb[0].mxu0
    %v3658 = vadd.f32 %v3497, %v3657
    %v3659 = vpop.f32.mrb[0].mxu0
    %3660 = vmatprep.mubr.bf16.mxu0 0
    %3661 = vmatmul.mubr.bf16.gmra.mrb[0].mxu0 %v3213
    %v3662 = vpop.f32.mrb[0].mxu0
    %v3663 = vadd.f32 %v3502, %v3662
    %v3664 = vpop.f32.mrb[0].mxu0
    %v3665 = vpop.f32.mrb[0].mxu0
    %v3666 = vadd.f32 %v3505, %v3665
    %v3667 = vpop.f32.mrb[0].mxu0
    %3668 = vmatprep.mubr.bf16.mxu0 0
    %3669 = vmatmul.mubr.bf16.gmra.mrb[0].mxu0 %v3216
    %v3670 = vpop.f32.mrb[0].mxu0
    %v3671 = vadd.f32 %v3510, %v3670
    %v3672 = vpop.f32.mrb[0].mxu0
    %v3673 = vpop.f32.mrb[0].mxu0
    %v3674 = vadd.f32 %v3513, %v3673
    %v3675 = vpop.f32.mrb[0].mxu0
    %3676 = vmatprep.mubr.bf16.mxu0 0
    %3677 = vmatmul.mubr.bf16.gmra.mrb[0].mxu0 %v3219
    %v3678 = vpop.f32.mrb[0].mxu0
    %v3679 = vadd.f32 %v3518, %v3678
    %v3680 = vpop.f32.mrb[0].mxu0
    %v3681 = vpop.f32.mrb[0].mxu0
    %v3682 = vadd.f32 %v3521, %v3681
    %v3683 = vpop.f32.mrb[0].mxu0
    %3684 = vmatprep.mubr.bf16.mxu0 0
    %3685 = vmatmul.mubr.bf16.gmra.mrb[0].mxu0 %v3222
    %v3686 = vpop.f32.mrb[0].mxu0
    %v3687 = vadd.f32 %v3526, %v3686
    %v3688 = vpop.f32.mrb[0].mxu0
    %v3689 = vpop.f32.mrb[0].mxu0
    %v3690 = vadd.f32 %v3529, %v3689
    %v3691 = vpop.f32.mrb[0].mxu0
    %3692 = vmatprep.mubr.bf16.mxu0 0
    %3693 = vmatmul.mubr.bf16.gmra.mrb[0].mxu0 %v3225
    %v3694 = vpop.f32.mrb[0].mxu0
    %v3695 = vadd.f32 %v3534, %v3694
    %v3696 = vpop.f32.mrb[0].mxu0
    %v3697 = vpop.f32.mrb[0].mxu0
    %v3698 = vadd.f32 %v3537, %v3697
    %v3699 = vpop.f32.mrb[0].mxu0
    %3700 = vmatprep.mubr.bf16.mxu0 0
    %3701 = vmatmul.mubr.bf16.gmra.mrb[0].mxu0 %v3228
    %v3702 = vpop.f32.mrb[0].mxu0
    %v3703 = vadd.f32 %v3542, %v3702
    %v3704 = vpop.f32.mrb[0].mxu0
    %v3705 = vpop.f32.mrb[0].mxu0
    %v3706 = vadd.f32 %v3545, %v3705
    %v3707 = vpop.f32.mrb[0].mxu0
    %3708 = vmatprep.mubr.bf16.mxu0 0
    %3709 = vmatmul.mubr.bf16.gmra.mrb[0].mxu0 %v3231
    %v3710 = vpop.f32.mrb[0].mxu0
    %v3711 = vadd.f32 %v3550, %v3710
    %v3712 = vpop.f32.mrb[0].mxu0
    %v3713 = vpop.f32.mrb[0].mxu0
    %v3714 = vadd.f32 %v3553, %v3713
    %v3715 = vpop.f32.mrb[0].mxu0
    %3716 = vmatprep.mubr.bf16.mxu0 0
    %3717 = vmatmul.mubr.bf16.gmra.mrb[0].mxu0 %v3234
    %v3718 = vpop.f32.mrb[0].mxu0
    %v3719 = vadd.f32 %v3558, %v3718
    %v3720 = vpop.f32.mrb[0].mxu0
    %v3721 = vpop.f32.mrb[0].mxu0
    %v3722 = vadd.f32 %v3561, %v3721
    %v3723 = vpop.f32.mrb[0].mxu0
    %3724 = vmatprep.mubr.bf16.mxu0 0
    %3725 = vmatmul.mubr.bf16.gmra.mrb[0].mxu0 %v3237
    %v3726 = vpop.f32.mrb[0].mxu0
    %v3727 = vadd.f32 %v3566, %v3726
    %v3728 = vpop.f32.mrb[0].mxu0
    %v3729 = vpop.f32.mrb[0].mxu0
    %v3730 = vadd.f32 %v3569, %v3729
    %v3731 = vpop.f32.mrb[0].mxu0
    %3732 = vmatprep.mubr.bf16.mxu0 0
    %3733 = vmatmul.mubr.bf16.gmra.mrb[0].mxu0 %v3240
    %v3734 = vpop.f32.mrb[0].mxu0
    %v3735 = vadd.f32 %v3574, %v3734
    %v3736 = vpop.f32.mrb[0].mxu0
    %v3737 = vpop.f32.mrb[0].mxu0
    %v3738 = vadd.f32 %v3577, %v3737
    %v3739 = vpop.f32.mrb[0].mxu0
    %3740 = vmatprep.mubr.bf16.mxu0 0
    %3741 = vmatmul.mubr.bf16.gmra.mrb[0].mxu0 %v3243
    %v3742 = vpop.f32.mrb[0].mxu0
    %v3743 = vadd.f32 %v3582, %v3742
    %v3744 = vpop.f32.mrb[0].mxu0
    %v3745 = vpop.f32.mrb[0].mxu0
    %v3746 = vadd.f32 %v3585, %v3745
    %v3747 = vpop.f32.mrb[0].mxu0
    %3748 = vmatprep.mubr.bf16.mxu0 0
    %3749 = vmatmul.mubr.bf16.gmra.mrb[0].mxu0 %v3246
    %v3750 = vpop.f32.mrb[0].mxu0
    %v3751 = vadd.f32 %v3590, %v3750
    %v3752 = vpop.f32.mrb[0].mxu0
    %v3753 = vpop.f32.mrb[0].mxu0
    %v3754 = vadd.f32 %v3593, %v3753
    %v3755 = vpop.f32.mrb[0].mxu0
    %3756 = vmatprep.mubr.bf16.mxu0 0
    %3757 = vmatmul.mubr.bf16.gmra.mrb[0].mxu0 %v3249
    %v3758 = vpop.f32.mrb[0].mxu0
    %v3759 = vadd.f32 %v3598, %v3758
    %v3760 = vpop.f32.mrb[0].mxu0
    %v3761 = vpop.f32.mrb[0].mxu0
    %v3762 = vadd.f32 %v3601, %v3761
    %v3763 = vpop.f32.mrb[0].mxu0
    %3764 = vdwg.mxu0
    %v3813 = vunpack.c.l.b16 %v3153
    %v3814 = vunpack.c.l.b16 %v3154
    %v3815 = vunpack.c.l.b16 %v3155
    %v3816 = vunpack.c.l.b16 %v3156
    %v3817 = vunpack.c.l.b16 %v3157
    %v3818 = vunpack.c.l.b16 %v3158
    %v3819 = vunpack.c.l.b16 %v3159
    %v3820 = vunpack.c.l.b16 %v3160
    %v3821 = vunpack.c.l.b16 %v3161
    %v3822 = vunpack.c.l.b16 %v3162
    %v3823 = vunpack.c.l.b16 %v3163
    %v3824 = vunpack.c.l.b16 %v3164
    %v3825 = vunpack.c.l.b16 %v3165
    %v3826 = vunpack.c.l.b16 %v3166
    %v3827 = vunpack.c.l.b16 %v3167
    %v3828 = vunpack.c.l.b16 %v3168
    %v3829 = vunpack.c.l.b16 %v3169
    %v3830 = vunpack.c.l.b16 %v3170
    %v3831 = vunpack.c.l.b16 %v3171
    %v3832 = vunpack.c.l.b16 %v3172
    %v3833 = vunpack.c.l.b16 %v3173
    %v3834 = vunpack.c.l.b16 %v3174
    %v3835 = vunpack.c.l.b16 %v3175
    %v3836 = vunpack.c.l.b16 %v3176
    %v3837 = vunpack.c.l.b16 %v3177
    %v3838 = vunpack.c.l.b16 %v3178
    %v3839 = vunpack.c.l.b16 %v3179
    %v3840 = vunpack.c.l.b16 %v3180
    %v3841 = vunpack.c.l.b16 %v3181
    %v3842 = vunpack.c.l.b16 %v3182
    %v3843 = vunpack.c.l.b16 %v3183
    %v3844 = vunpack.c.l.b16 %v3184
    %v3845 = vunpack.c.l.b16 %v3185
    %v3846 = vunpack.c.l.b16 %v3186
    %v3847 = vunpack.c.l.b16 %v3187
    %v3848 = vunpack.c.l.b16 %v3188
    %v3849 = vunpack.c.l.b16 %v3189
    %v3850 = vunpack.c.l.b16 %v3190
    %v3851 = vunpack.c.l.b16 %v3191
    %v3852 = vunpack.c.l.b16 %v3192
    %v3853 = vunpack.c.l.b16 %v3193
    %v3854 = vunpack.c.l.b16 %v3194
    %v3855 = vunpack.c.l.b16 %v3195
    %v3856 = vunpack.c.l.b16 %v3196
    %v3857 = vunpack.c.l.b16 %v3197
    %v3858 = vunpack.c.l.b16 %v3198
    %v3859 = vunpack.c.l.b16 %v3199
    %v3860 = vunpack.c.l.b16 %v3200
    %v3861 = vpack.c.b16 %v3814, %v3813
    %v3862 = vpack.c.b16 %v3816, %v3815
    %v3863 = vpack.c.b16 %v3818, %v3817
    %v3864 = vpack.c.b16 %v3820, %v3819
    %v3865 = vpack.c.b16 %v3822, %v3821
    %v3866 = vpack.c.b16 %v3824, %v3823
    %v3867 = vpack.c.b16 %v3826, %v3825
    %v3868 = vpack.c.b16 %v3828, %v3827
    %v3869 = vpack.c.b16 %v3830, %v3829
    %v3870 = vpack.c.b16 %v3832, %v3831
    %v3871 = vpack.c.b16 %v3834, %v3833
    %v3872 = vpack.c.b16 %v3836, %v3835
    %v3873 = vpack.c.b16 %v3838, %v3837
    %v3874 = vpack.c.b16 %v3840, %v3839
    %v3875 = vpack.c.b16 %v3842, %v3841
    %v3876 = vpack.c.b16 %v3844, %v3843
    %v3877 = vpack.c.b16 %v3846, %v3845
    %v3878 = vpack.c.b16 %v3848, %v3847
    %v3879 = vpack.c.b16 %v3850, %v3849
    %v3880 = vpack.c.b16 %v3852, %v3851
    %v3881 = vpack.c.b16 %v3854, %v3853
    %v3882 = vpack.c.b16 %v3856, %v3855
    %v3883 = vpack.c.b16 %v3858, %v3857
    %v3884 = vpack.c.b16 %v3860, %v3859
    %3909 = vmatprep.subr.bf16.mxu0 0
    %3910 = vmatpush1.bf16.msra.mxu0 %v3861
    %3911 = vmatprep.subr.bf16.mxu0 0
    %3912 = vmatpush1.bf16.msra.mxu0 %v3862
    %3913 = vmatprep.subr.bf16.mxu0 0
    %3914 = vmatpush1.bf16.msra.mxu0 %v3863
    %3915 = vmatprep.subr.bf16.mxu0 0
    %3916 = vmatpush1.bf16.msra.mxu0 %v3864
    %3917 = vmatprep.subr.bf16.mxu0 0
    %3918 = vmatpush1.bf16.msra.mxu0 %v3865
    %3919 = vmatprep.subr.bf16.mxu0 0
    %3920 = vmatpush1.bf16.msra.mxu0 %v3866
    %3921 = vmatprep.subr.bf16.mxu0 0
    %3922 = vmatpush1.bf16.msra.mxu0 %v3867
    %3923 = vmatprep.subr.bf16.mxu0 0
    %3924 = vmatpush1.bf16.msra.mxu0 %v3868
    %3925 = vmatprep.subr.bf16.mxu0 0
    %3926 = vmatpush1.bf16.msra.mxu0 %v3869
    %3927 = vmatprep.subr.bf16.mxu0 0
    %3928 = vmatpush1.bf16.msra.mxu0 %v3870
    %3929 = vmatprep.subr.bf16.mxu0 0
    %3930 = vmatpush1.bf16.msra.mxu0 %v3871
    %3931 = vmatprep.subr.bf16.mxu0 0
    %3932 = vmatpush1.bf16.msra.mxu0 %v3872
    %3933 = vmatprep.subr.bf16.mxu0 0
    %3934 = vmatpush1.bf16.msra.mxu0 %v3873
    %3935 = vmatprep.subr.bf16.mxu0 0
    %3936 = vmatpush1.bf16.msra.mxu0 %v3874
    %3937 = vmatprep.subr.bf16.mxu0 0
    %3938 = vmatpush1.bf16.msra.mxu0 %v3875
    %3939 = vmatprep.subr.bf16.mxu0 0
    %3940 = vmatpush1.bf16.msra.mxu0 %v3876
    %3941 = vmatprep.mubr.bf16.mxu0 %v3105
    %3942 = vmatmul.mubr.bf16.gmra.mrb[0].mxu0 %v3104
    %v3943 = vpop.f32.mrb[0].mxu0
    %v3944 = vadd.f32 %v3639, %v3943
    %v3945 = vpop.f32.mrb[0].mxu0
    %v3946 = vpop.f32.mrb[0].mxu0
    %v3947 = vadd.f32 %v3642, %v3946
    %v3948 = vpop.f32.mrb[0].mxu0
    %3949 = vmatprep.mubr.bf16.mxu0 %v3108
    %3950 = vmatmul.mubr.bf16.gmra.mrb[0].mxu0 %v3107
    %v3951 = vpop.f32.mrb[0].mxu0
    %v3952 = vadd.f32 %v3647, %v3951
    %v3953 = vpop.f32.mrb[0].mxu0
    %v3954 = vpop.f32.mrb[0].mxu0
    %v3955 = vadd.f32 %v3650, %v3954
    %v3956 = vpop.f32.mrb[0].mxu0
    %3957 = vmatprep.mubr.bf16.mxu0 %v3111
    %3958 = vmatmul.mubr.bf16.gmra.mrb[0].mxu0 %v3110
    %v3959 = vpop.f32.mrb[0].mxu0
    %v3960 = vadd.f32 %v3655, %v3959
    %v3961 = vpop.f32.mrb[0].mxu0
    %v3962 = vpop.f32.mrb[0].mxu0
    %v3963 = vadd.f32 %v3658, %v3962
    %v3964 = vpop.f32.mrb[0].mxu0
    %3965 = vmatprep.mubr.bf16.mxu0 %v3114
    %3966 = vmatmul.mubr.bf16.gmra.mrb[0].mxu0 %v3113
    %v3967 = vpop.f32.mrb[0].mxu0
    %v3968 = vadd.f32 %v3663, %v3967
    %v3969 = vpop.f32.mrb[0].mxu0
    %v3970 = vpop.f32.mrb[0].mxu0
    %v3971 = vadd.f32 %v3666, %v3970
    %v3972 = vpop.f32.mrb[0].mxu0
    %3973 = vmatprep.mubr.bf16.mxu0 %v3117
    %3974 = vmatmul.mubr.bf16.gmra.mrb[0].mxu0 %v3116
    %v3975 = vpop.f32.mrb[0].mxu0
    %v3976 = vadd.f32 %v3671, %v3975
    %v3977 = vpop.f32.mrb[0].mxu0
    %v3978 = vpop.f32.mrb[0].mxu0
    %v3979 = vadd.f32 %v3674, %v3978
    %v3980 = vpop.f32.mrb[0].mxu0
    %3981 = vmatprep.mubr.bf16.mxu0 %v3120
    %3982 = vmatmul.mubr.bf16.gmra.mrb[0].mxu0 %v3119
    %v3983 = vpop.f32.mrb[0].mxu0
    %v3984 = vadd.f32 %v3679, %v3983
    %v3985 = vpop.f32.mrb[0].mxu0
    %v3986 = vpop.f32.mrb[0].mxu0
    %v3987 = vadd.f32 %v3682, %v3986
    %v3988 = vpop.f32.mrb[0].mxu0
    %3989 = vmatprep.mubr.bf16.mxu0 %v3123
    %3990 = vmatmul.mubr.bf16.gmra.mrb[0].mxu0 %v3122
    %v3991 = vpop.f32.mrb[0].mxu0
    %v3992 = vadd.f32 %v3687, %v3991
    %v3993 = vpop.f32.mrb[0].mxu0
    %v3994 = vpop.f32.mrb[0].mxu0
    %v3995 = vadd.f32 %v3690, %v3994
    %v3996 = vpop.f32.mrb[0].mxu0
    %3997 = vmatprep.mubr.bf16.mxu0 %v3126
    %3998 = vmatmul.mubr.bf16.gmra.mrb[0].mxu0 %v3125
    %v3999 = vpop.f32.mrb[0].mxu0
    %v4000 = vadd.f32 %v3695, %v3999
    %v4001 = vpop.f32.mrb[0].mxu0
    %v4002 = vpop.f32.mrb[0].mxu0
    %v4003 = vadd.f32 %v3698, %v4002
    %v4004 = vpop.f32.mrb[0].mxu0
    %4005 = vmatprep.mubr.bf16.mxu0 %v3129
    %4006 = vmatmul.mubr.bf16.gmra.mrb[0].mxu0 %v3128
    %v4007 = vpop.f32.mrb[0].mxu0
    %v4008 = vadd.f32 %v3703, %v4007
    %v4009 = vpop.f32.mrb[0].mxu0
    %v4010 = vpop.f32.mrb[0].mxu0
    %v4011 = vadd.f32 %v3706, %v4010
    %v4012 = vpop.f32.mrb[0].mxu0
    %4013 = vmatprep.mubr.bf16.mxu0 %v3132
    %4014 = vmatmul.mubr.bf16.gmra.mrb[0].mxu0 %v3131
    %v4015 = vpop.f32.mrb[0].mxu0
    %v4016 = vadd.f32 %v3711, %v4015
    %v4017 = vpop.f32.mrb[0].mxu0
    %v4018 = vpop.f32.mrb[0].mxu0
    %v4019 = vadd.f32 %v3714, %v4018
    %v4020 = vpop.f32.mrb[0].mxu0
    %4021 = vmatprep.mubr.bf16.mxu0 %v3135
    %4022 = vmatmul.mubr.bf16.gmra.mrb[0].mxu0 %v3134
    %v4023 = vpop.f32.mrb[0].mxu0
    %v4024 = vadd.f32 %v3719, %v4023
    %v4025 = vpop.f32.mrb[0].mxu0
    %v4026 = vpop.f32.mrb[0].mxu0
    %v4027 = vadd.f32 %v3722, %v4026
    %v4028 = vpop.f32.mrb[0].mxu0
    %4029 = vmatprep.mubr.bf16.mxu0 %v3138
    %4030 = vmatmul.mubr.bf16.gmra.mrb[0].mxu0 %v3137
    %v4031 = vpop.f32.mrb[0].mxu0
    %v4032 = vadd.f32 %v3727, %v4031
    %v4033 = vpop.f32.mrb[0].mxu0
    %v4034 = vpop.f32.mrb[0].mxu0
    %v4035 = vadd.f32 %v3730, %v4034
    %v4036 = vpop.f32.mrb[0].mxu0
    %4037 = vmatprep.mubr.bf16.mxu0 %v3141
    %4038 = vmatmul.mubr.bf16.gmra.mrb[0].mxu0 %v3140
    %v4039 = vpop.f32.mrb[0].mxu0
    %v4040 = vadd.f32 %v3735, %v4039
    %v4041 = vpop.f32.mrb[0].mxu0
    %v4042 = vpop.f32.mrb[0].mxu0
    %v4043 = vadd.f32 %v3738, %v4042
    %v4044 = vpop.f32.mrb[0].mxu0
    %4045 = vmatprep.mubr.bf16.mxu0 %v3144
    %4046 = vmatmul.mubr.bf16.gmra.mrb[0].mxu0 %v3143
    %v4047 = vpop.f32.mrb[0].mxu0
    %v4048 = vadd.f32 %v3743, %v4047
    %v4049 = vpop.f32.mrb[0].mxu0
    %v4050 = vpop.f32.mrb[0].mxu0
    %v4051 = vadd.f32 %v3746, %v4050
    %v4052 = vpop.f32.mrb[0].mxu0
    %4053 = vmatprep.mubr.bf16.mxu0 %v3147
    %4054 = vmatmul.mubr.bf16.gmra.mrb[0].mxu0 %v3146
    %v4055 = vpop.f32.mrb[0].mxu0
    %v4056 = vadd.f32 %v3751, %v4055
    %v4057 = vpop.f32.mrb[0].mxu0
    %v4058 = vpop.f32.mrb[0].mxu0
    %v4059 = vadd.f32 %v3754, %v4058
    %v4060 = vpop.f32.mrb[0].mxu0
    %4061 = vmatprep.mubr.bf16.mxu0 %v3150
    %4062 = vmatmul.mubr.bf16.gmra.mrb[0].mxu0 %v3149
    %v4063 = vpop.f32.mrb[0].mxu0
    %v4064 = vadd.f32 %v3759, %v4063
    %v4065 = vpop.f32.mrb[0].mxu0
    %v4066 = vpop.f32.mrb[0].mxu0
    %v4067 = vadd.f32 %v3762, %v4066
    %v4068 = vpop.f32.mrb[0].mxu0
    %4069 = vdwg.mxu0
    %4070 = vmatprep.subr.bf16.mxu0 0
    %4071 = vmatpush1.bf16.msra.mxu0 %v3877
    %4072 = vmatprep.subr.bf16.mxu0 0
    %4073 = vmatpush1.bf16.msra.mxu0 %v3878
    %4074 = vmatprep.subr.bf16.mxu0 0
    %4075 = vmatpush1.bf16.msra.mxu0 %v3879
    %4076 = vmatprep.subr.bf16.mxu0 0
    %4077 = vmatpush1.bf16.msra.mxu0 %v3880
    %4078 = vmatprep.subr.bf16.mxu0 0
    %4079 = vmatpush1.bf16.msra.mxu0 %v3881
    %4080 = vmatprep.subr.bf16.mxu0 0
    %4081 = vmatpush1.bf16.msra.mxu0 %v3882
    %4082 = vmatprep.subr.bf16.mxu0 0
    %4083 = vmatpush1.bf16.msra.mxu0 %v3883
    %4084 = vmatprep.subr.bf16.mxu0 0
    %4085 = vmatpush1.bf16.msra.mxu0 %v3884
    %4086 = vmatprep.subr.bf16.mxu0 0
    %4087 = vmatpush1.bf16.msra.mxu0 0
    %4088 = vmatprep.subr.bf16.mxu0 0
    %4089 = vmatpush1.bf16.msra.mxu0 0
    %4090 = vmatprep.subr.bf16.mxu0 0
    %4091 = vmatpush1.bf16.msra.mxu0 0
    %4092 = vmatprep.subr.bf16.mxu0 0
    %4093 = vmatpush1.bf16.msra.mxu0 0
    %4094 = vmatprep.subr.bf16.mxu0 0
    %4095 = vmatpush1.bf16.msra.mxu0 0
    %4096 = vmatprep.subr.bf16.mxu0 0
    %4097 = vmatpush1.bf16.msra.mxu0 0
    %4098 = vmatprep.subr.bf16.mxu0 0
    %4099 = vmatpush1.bf16.msra.mxu0 0
    %4100 = vmatprep.subr.bf16.mxu0 0
    %4101 = vmatpush1.bf16.msra.mxu0 0
    %4102 = vmatprep.mubr.bf16.mxu0 0
    %4103 = vmatmul.mubr.bf16.gmra.mrb[0].mxu0 %v3106
    %v4104 = vpop.f32.mrb[0].mxu0
    %v4105 = vadd.f32 %v3944, %v4104
    %v4106 = vpop.f32.mrb[0].mxu0
    %v4107 = vpop.f32.mrb[0].mxu0
    %v4108 = vadd.f32 %v3947, %v4107
    %v4109 = vpop.f32.mrb[0].mxu0
    %4110 = vmatprep.mubr.bf16.mxu0 0
    %4111 = vmatmul.mubr.bf16.gmra.mrb[0].mxu0 %v3109
    %v4112 = vpop.f32.mrb[0].mxu0
    %v4113 = vadd.f32 %v3952, %v4112
    %v4114 = vpop.f32.mrb[0].mxu0
    %v4115 = vpop.f32.mrb[0].mxu0
    %v4116 = vadd.f32 %v3955, %v4115
    %v4117 = vpop.f32.mrb[0].mxu0
    %4118 = vmatprep.mubr.bf16.mxu0 0
    %4119 = vmatmul.mubr.bf16.gmra.mrb[0].mxu0 %v3112
    %v4120 = vpop.f32.mrb[0].mxu0
    %v4121 = vadd.f32 %v3960, %v4120
    %v4122 = vpop.f32.mrb[0].mxu0
    %v4123 = vpop.f32.mrb[0].mxu0
    %v4124 = vadd.f32 %v3963, %v4123
    %v4125 = vpop.f32.mrb[0].mxu0
    %4126 = vmatprep.mubr.bf16.mxu0 0
    %4127 = vmatmul.mubr.bf16.gmra.mrb[0].mxu0 %v3115
    %v4128 = vpop.f32.mrb[0].mxu0
    %v4129 = vadd.f32 %v3968, %v4128
    %v4130 = vpop.f32.mrb[0].mxu0
    %v4131 = vpop.f32.mrb[0].mxu0
    %v4132 = vadd.f32 %v3971, %v4131
    %v4133 = vpop.f32.mrb[0].mxu0
    %4134 = vmatprep.mubr.bf16.mxu0 0
    %4135 = vmatmul.mubr.bf16.gmra.mrb[0].mxu0 %v3118
    %v4136 = vpop.f32.mrb[0].mxu0
    %v4137 = vadd.f32 %v3976, %v4136
    %v4138 = vpop.f32.mrb[0].mxu0
    %v4139 = vpop.f32.mrb[0].mxu0
    %v4140 = vadd.f32 %v3979, %v4139
    %v4141 = vpop.f32.mrb[0].mxu0
    %4142 = vmatprep.mubr.bf16.mxu0 0
    %4143 = vmatmul.mubr.bf16.gmra.mrb[0].mxu0 %v3121
    %v4144 = vpop.f32.mrb[0].mxu0
    %v4145 = vadd.f32 %v3984, %v4144
    %v4146 = vpop.f32.mrb[0].mxu0
    %v4147 = vpop.f32.mrb[0].mxu0
    %v4148 = vadd.f32 %v3987, %v4147
    %v4149 = vpop.f32.mrb[0].mxu0
    %4150 = vmatprep.mubr.bf16.mxu0 0
    %4151 = vmatmul.mubr.bf16.gmra.mrb[0].mxu0 %v3124
    %v4152 = vpop.f32.mrb[0].mxu0
    %v4153 = vadd.f32 %v3992, %v4152
    %v4154 = vpop.f32.mrb[0].mxu0
    %v4155 = vpop.f32.mrb[0].mxu0
    %v4156 = vadd.f32 %v3995, %v4155
    %v4157 = vpop.f32.mrb[0].mxu0
    %4158 = vmatprep.mubr.bf16.mxu0 0
    %4159 = vmatmul.mubr.bf16.gmra.mrb[0].mxu0 %v3127
    %v4160 = vpop.f32.mrb[0].mxu0
    %v4161 = vadd.f32 %v4000, %v4160
    %v4162 = vpop.f32.mrb[0].mxu0
    %v4163 = vpop.f32.mrb[0].mxu0
    %v4164 = vadd.f32 %v4003, %v4163
    %v4165 = vpop.f32.mrb[0].mxu0
    %4166 = vmatprep.mubr.bf16.mxu0 0
    %4167 = vmatmul.mubr.bf16.gmra.mrb[0].mxu0 %v3130
    %v4168 = vpop.f32.mrb[0].mxu0
    %v4169 = vadd.f32 %v4008, %v4168
    %v4170 = vpop.f32.mrb[0].mxu0
    %v4171 = vpop.f32.mrb[0].mxu0
    %v4172 = vadd.f32 %v4011, %v4171
    %v4173 = vpop.f32.mrb[0].mxu0
    %4174 = vmatprep.mubr.bf16.mxu0 0
    %4175 = vmatmul.mubr.bf16.gmra.mrb[0].mxu0 %v3133
    %v4176 = vpop.f32.mrb[0].mxu0
    %v4177 = vadd.f32 %v4016, %v4176
    %v4178 = vpop.f32.mrb[0].mxu0
    %v4179 = vpop.f32.mrb[0].mxu0
    %v4180 = vadd.f32 %v4019, %v4179
    %v4181 = vpop.f32.mrb[0].mxu0
    %4182 = vmatprep.mubr.bf16.mxu0 0
    %4183 = vmatmul.mubr.bf16.gmra.mrb[0].mxu0 %v3136
    %v4184 = vpop.f32.mrb[0].mxu0
    %v4185 = vadd.f32 %v4024, %v4184
    %v4186 = vpop.f32.mrb[0].mxu0
    %v4187 = vpop.f32.mrb[0].mxu0
    %v4188 = vadd.f32 %v4027, %v4187
    %v4189 = vpop.f32.mrb[0].mxu0
    %4190 = vmatprep.mubr.bf16.mxu0 0
    %4191 = vmatmul.mubr.bf16.gmra.mrb[0].mxu0 %v3139
    %v4192 = vpop.f32.mrb[0].mxu0
    %v4193 = vadd.f32 %v4032, %v4192
    %v4194 = vpop.f32.mrb[0].mxu0
    %v4195 = vpop.f32.mrb[0].mxu0
    %v4196 = vadd.f32 %v4035, %v4195
    %v4197 = vpop.f32.mrb[0].mxu0
    %4198 = vmatprep.mubr.bf16.mxu0 0
    %4199 = vmatmul.mubr.bf16.gmra.mrb[0].mxu0 %v3142
    %v4200 = vpop.f32.mrb[0].mxu0
    %v4201 = vadd.f32 %v4040, %v4200
    %v4202 = vpop.f32.mrb[0].mxu0
    %v4203 = vpop.f32.mrb[0].mxu0
    %v4204 = vadd.f32 %v4043, %v4203
    %v4205 = vpop.f32.mrb[0].mxu0
    %4206 = vmatprep.mubr.bf16.mxu0 0
    %4207 = vmatmul.mubr.bf16.gmra.mrb[0].mxu0 %v3145
    %v4208 = vpop.f32.mrb[0].mxu0
    %v4209 = vadd.f32 %v4048, %v4208
    %v4210 = vpop.f32.mrb[0].mxu0
    %v4211 = vpop.f32.mrb[0].mxu0
    %v4212 = vadd.f32 %v4051, %v4211
    %v4213 = vpop.f32.mrb[0].mxu0
    %4214 = vmatprep.mubr.bf16.mxu0 0
    %4215 = vmatmul.mubr.bf16.gmra.mrb[0].mxu0 %v3148
    %v4216 = vpop.f32.mrb[0].mxu0
    %v4217 = vadd.f32 %v4056, %v4216
    %v4218 = vpop.f32.mrb[0].mxu0
    %v4219 = vpop.f32.mrb[0].mxu0
    %v4220 = vadd.f32 %v4059, %v4219
    %v4221 = vpop.f32.mrb[0].mxu0
    %4222 = vmatprep.mubr.bf16.mxu0 0
    %4223 = vmatmul.mubr.bf16.gmra.mrb[0].mxu0 %v3151
    %v4224 = vpop.f32.mrb[0].mxu0
    %v4225 = vadd.f32 %v4064, %v4224
    %v4226 = vpop.f32.mrb[0].mxu0
    %v4227 = vpop.f32.mrb[0].mxu0
    %v4228 = vadd.f32 %v4067, %v4227
    %v4229 = vpop.f32.mrb[0].mxu0
    %4230 = vdwg.mxu0
    %s4231 = scalar_lea.vmem [#allocation3], 48
    %v4232 = vld [vmem:[%s4231] sm:$0xff]
    %v4233 = vld [vmem:[%s4231 + $0x8] sm:$0xff]
    %v4234 = vld [vmem:[%s4231 + $0x10] sm:$0xff]
    %v4235 = vld [vmem:[%s4231 + $0x18] sm:$0xff]
    %v4236 = vld [vmem:[%s4231 + $0x20] sm:$0xff]
    %v4237 = vld [vmem:[%s4231 + $0x28] sm:$0xff]
    %v4238 = vld [vmem:[%s4231 + $0x30] sm:$0xff]
    %v4239 = vld [vmem:[%s4231 + $0x38] sm:$0xff]
    %v4240 = vld [vmem:[%s4231 + $0x40] sm:$0xff]
    %v4241 = vld [vmem:[%s4231 + $0x48] sm:$0xff]
    %v4242 = vld [vmem:[%s4231 + $0x50] sm:$0xff]
    %v4243 = vld [vmem:[%s4231 + $0x58] sm:$0xff]
    %v4244 = vld [vmem:[%s4231 + $0x60] sm:$0xff]
    %v4245 = vld [vmem:[%s4231 + $0x68] sm:$0xff]
    %v4246 = vld [vmem:[%s4231 + $0x70] sm:$0xff]
    %v4247 = vld [vmem:[%s4231 + $0x78] sm:$0xff]
    %v4248 = vld [vmem:[%s4231 + $0x80] sm:$0xff]
    %v4249 = vld [vmem:[%s4231 + $0x88] sm:$0xff]
    %v4250 = vld [vmem:[%s4231 + $0x90] sm:$0xff]
    %v4251 = vld [vmem:[%s4231 + $0x98] sm:$0xff]
    %v4252 = vld [vmem:[%s4231 + $0xa0] sm:$0xff]
    %v4253 = vld [vmem:[%s4231 + $0xa8] sm:$0xff]
    %v4254 = vld [vmem:[%s4231 + $0xb0] sm:$0xff]
    %v4255 = vld [vmem:[%s4231 + $0xb8] sm:$0xff]
    %v4256 = vld [vmem:[%s4231 + $0xc0] sm:$0xff]
    %v4257 = vld [vmem:[%s4231 + $0xc8] sm:$0xff]
    %v4258 = vld [vmem:[%s4231 + $0xd0] sm:$0xff]
    %v4259 = vld [vmem:[%s4231 + $0xd8] sm:$0xff]
    %v4260 = vld [vmem:[%s4231 + $0xe0] sm:$0xff]
    %v4261 = vld [vmem:[%s4231 + $0xe8] sm:$0xff]
    %v4262 = vld [vmem:[%s4231 + $0xf0] sm:$0xff]
    %v4263 = vld [vmem:[%s4231 + $0xf8] sm:$0xff]
    %v4264 = vld [vmem:[%s4231 + $0x100] sm:$0xff]
    %v4265 = vld [vmem:[%s4231 + $0x108] sm:$0xff]
    %v4266 = vld [vmem:[%s4231 + $0x110] sm:$0xff]
    %v4267 = vld [vmem:[%s4231 + $0x118] sm:$0xff]
    %v4268 = vld [vmem:[%s4231 + $0x120] sm:$0xff]
    %v4269 = vld [vmem:[%s4231 + $0x128] sm:$0xff]
    %v4270 = vld [vmem:[%s4231 + $0x130] sm:$0xff]
    %v4271 = vld [vmem:[%s4231 + $0x138] sm:$0xff]
    %v4272 = vld [vmem:[%s4231 + $0x140] sm:$0xff]
    %v4273 = vld [vmem:[%s4231 + $0x148] sm:$0xff]
    %v4274 = vld [vmem:[%s4231 + $0x150] sm:$0xff]
    %v4275 = vld [vmem:[%s4231 + $0x158] sm:$0xff]
    %v4276 = vld [vmem:[%s4231 + $0x160] sm:$0xff]
    %v4277 = vld [vmem:[%s4231 + $0x168] sm:$0xff]
    %v4278 = vld [vmem:[%s4231 + $0x170] sm:$0xff]
    %v4279 = vld [vmem:[%s4231 + $0x178] sm:$0xff]
    %s4280 = scalar_lea.vmem [#allocation4], 9600
    %v4281 = vld [vmem:[%s4280] sm:$0xf]
    %v4282 = vld [vmem:[%s4280 + $0x4] sm:$0xf]
    %v4283 = vld [vmem:[%s4280 + $0x8] sm:$0xf]
    %v4284 = vld [vmem:[%s4280 + $0xc] sm:$0xf]
    %v4285 = vld [vmem:[%s4280 + $0x10] sm:$0xf]
    %v4286 = vld [vmem:[%s4280 + $0x14] sm:$0xf]
    %v4287 = vld [vmem:[%s4280 + $0x18] sm:$0xf]
    %v4288 = vld [vmem:[%s4280 + $0x1c] sm:$0xf]
    %v4289 = vld [vmem:[%s4280 + $0x20] sm:$0xf]
    %v4290 = vld [vmem:[%s4280 + $0x24] sm:$0xf]
    %v4291 = vld [vmem:[%s4280 + $0x28] sm:$0xf]
    %v4292 = vld [vmem:[%s4280 + $0x2c] sm:$0xf]
    %v4293 = vld [vmem:[%s4280 + $0x30] sm:$0xf]
    %v4294 = vld [vmem:[%s4280 + $0x34] sm:$0xf]
    %v4295 = vld [vmem:[%s4280 + $0x38] sm:$0xf]
    %v4296 = vld [vmem:[%s4280 + $0x3c] sm:$0xf]
    %v4297 = vld [vmem:[%s4280 + $0x40] sm:$0xf]
    %v4298 = vld [vmem:[%s4280 + $0x44] sm:$0xf]
    %v4299 = vld [vmem:[%s4280 + $0x48] sm:$0xf]
    %v4300 = vld [vmem:[%s4280 + $0x4c] sm:$0xf]
    %v4301 = vld [vmem:[%s4280 + $0x50] sm:$0xf]
    %v4302 = vld [vmem:[%s4280 + $0x54] sm:$0xf]
    %v4303 = vld [vmem:[%s4280 + $0x58] sm:$0xf]
    %v4304 = vld [vmem:[%s4280 + $0x5c] sm:$0xf]
    %v4305 = vld [vmem:[%s4280 + $0x60] sm:$0xf]
    %v4306 = vld [vmem:[%s4280 + $0x64] sm:$0xf]
    %v4307 = vld [vmem:[%s4280 + $0x68] sm:$0xf]
    %v4308 = vld [vmem:[%s4280 + $0x6c] sm:$0xf]
    %v4309 = vld [vmem:[%s4280 + $0x70] sm:$0xf]
    %v4310 = vld [vmem:[%s4280 + $0x74] sm:$0xf]
    %v4311 = vld [vmem:[%s4280 + $0x78] sm:$0xf]
    %v4312 = vld [vmem:[%s4280 + $0x7c] sm:$0xf]
    %v4313 = vld [vmem:[%s4280 + $0x80] sm:$0xf]
    %v4314 = vld [vmem:[%s4280 + $0x84] sm:$0xf]
    %v4315 = vld [vmem:[%s4280 + $0x88] sm:$0xf]
    %v4316 = vld [vmem:[%s4280 + $0x8c] sm:$0xf]
    %v4317 = vld [vmem:[%s4280 + $0x90] sm:$0xf]
    %v4318 = vld [vmem:[%s4280 + $0x94] sm:$0xf]
    %v4319 = vld [vmem:[%s4280 + $0x98] sm:$0xf]
    %v4320 = vld [vmem:[%s4280 + $0x9c] sm:$0xf]
    %v4321 = vld [vmem:[%s4280 + $0xa0] sm:$0xf]
    %v4322 = vld [vmem:[%s4280 + $0xa4] sm:$0xf]
    %v4323 = vld [vmem:[%s4280 + $0xa8] sm:$0xf]
    %v4324 = vld [vmem:[%s4280 + $0xac] sm:$0xf]
    %v4325 = vld [vmem:[%s4280 + $0xb0] sm:$0xf]
    %v4326 = vld [vmem:[%s4280 + $0xb4] sm:$0xf]
    %v4327 = vld [vmem:[%s4280 + $0xb8] sm:$0xf]
    %v4328 = vld [vmem:[%s4280 + $0xbc] sm:$0xf]
    %v4377 = vunpack.c.l.b16 %v4281
    %v4378 = vunpack.c.l.b16 %v4282
    %v4379 = vunpack.c.l.b16 %v4283
    %v4380 = vunpack.c.l.b16 %v4284
    %v4381 = vunpack.c.l.b16 %v4285
    %v4382 = vunpack.c.l.b16 %v4286
    %v4383 = vunpack.c.l.b16 %v4287
    %v4384 = vunpack.c.l.b16 %v4288
    %v4385 = vunpack.c.l.b16 %v4289
    %v4386 = vunpack.c.l.b16 %v4290
    %v4387 = vunpack.c.l.b16 %v4291
    %v4388 = vunpack.c.l.b16 %v4292
    %v4389 = vunpack.c.l.b16 %v4293
    %v4390 = vunpack.c.l.b16 %v4294
    %v4391 = vunpack.c.l.b16 %v4295
    %v4392 = vunpack.c.l.b16 %v4296
    %v4393 = vunpack.c.l.b16 %v4297
    %v4394 = vunpack.c.l.b16 %v4298
    %v4395 = vunpack.c.l.b16 %v4299
    %v4396 = vunpack.c.l.b16 %v4300
    %v4397 = vunpack.c.l.b16 %v4301
    %v4398 = vunpack.c.l.b16 %v4302
    %v4399 = vunpack.c.l.b16 %v4303
    %v4400 = vunpack.c.l.b16 %v4304
    %v4401 = vunpack.c.l.b16 %v4305
    %v4402 = vunpack.c.l.b16 %v4306
    %v4403 = vunpack.c.l.b16 %v4307
    %v4404 = vunpack.c.l.b16 %v4308
    %v4405 = vunpack.c.l.b16 %v4309
    %v4406 = vunpack.c.l.b16 %v4310
    %v4407 = vunpack.c.l.b16 %v4311
    %v4408 = vunpack.c.l.b16 %v4312
    %v4409 = vunpack.c.l.b16 %v4313
    %v4410 = vunpack.c.l.b16 %v4314
    %v4411 = vunpack.c.l.b16 %v4315
    %v4412 = vunpack.c.l.b16 %v4316
    %v4413 = vunpack.c.l.b16 %v4317
    %v4414 = vunpack.c.l.b16 %v4318
    %v4415 = vunpack.c.l.b16 %v4319
    %v4416 = vunpack.c.l.b16 %v4320
    %v4417 = vunpack.c.l.b16 %v4321
    %v4418 = vunpack.c.l.b16 %v4322
    %v4419 = vunpack.c.l.b16 %v4323
    %v4420 = vunpack.c.l.b16 %v4324
    %v4421 = vunpack.c.l.b16 %v4325
    %v4422 = vunpack.c.l.b16 %v4326
    %v4423 = vunpack.c.l.b16 %v4327
    %v4424 = vunpack.c.l.b16 %v4328
    %v4425 = vpack.c.b16 %v4378, %v4377
    %v4426 = vpack.c.b16 %v4380, %v4379
    %v4427 = vpack.c.b16 %v4382, %v4381
    %v4428 = vpack.c.b16 %v4384, %v4383
    %v4429 = vpack.c.b16 %v4386, %v4385
    %v4430 = vpack.c.b16 %v4388, %v4387
    %v4431 = vpack.c.b16 %v4390, %v4389
    %v4432 = vpack.c.b16 %v4392, %v4391
    %v4433 = vpack.c.b16 %v4394, %v4393
    %v4434 = vpack.c.b16 %v4396, %v4395
    %v4435 = vpack.c.b16 %v4398, %v4397
    %v4436 = vpack.c.b16 %v4400, %v4399
    %v4437 = vpack.c.b16 %v4402, %v4401
    %v4438 = vpack.c.b16 %v4404, %v4403
    %v4439 = vpack.c.b16 %v4406, %v4405
    %v4440 = vpack.c.b16 %v4408, %v4407
    %v4441 = vpack.c.b16 %v4410, %v4409
    %v4442 = vpack.c.b16 %v4412, %v4411
    %v4443 = vpack.c.b16 %v4414, %v4413
    %v4444 = vpack.c.b16 %v4416, %v4415
    %v4445 = vpack.c.b16 %v4418, %v4417
    %v4446 = vpack.c.b16 %v4420, %v4419
    %v4447 = vpack.c.b16 %v4422, %v4421
    %v4448 = vpack.c.b16 %v4424, %v4423
    %4473 = vmatprep.subr.bf16.mxu0 0
    %4474 = vmatpush1.bf16.msra.mxu0 %v4425
    %4475 = vmatprep.subr.bf16.mxu0 0
    %4476 = vmatpush1.bf16.msra.mxu0 %v4426
    %4477 = vmatprep.subr.bf16.mxu0 0
    %4478 = vmatpush1.bf16.msra.mxu0 %v4427
    %4479 = vmatprep.subr.bf16.mxu0 0
    %4480 = vmatpush1.bf16.msra.mxu0 %v4428
    %4481 = vmatprep.subr.bf16.mxu0 0
    %4482 = vmatpush1.bf16.msra.mxu0 %v4429
    %4483 = vmatprep.subr.bf16.mxu0 0
    %4484 = vmatpush1.bf16.msra.mxu0 %v4430
    %4485 = vmatprep.subr.bf16.mxu0 0
    %4486 = vmatpush1.bf16.msra.mxu0 %v4431
    %4487 = vmatprep.subr.bf16.mxu0 0
    %4488 = vmatpush1.bf16.msra.mxu0 %v4432
    %4489 = vmatprep.subr.bf16.mxu0 0
    %4490 = vmatpush1.bf16.msra.mxu0 %v4433
    %4491 = vmatprep.subr.bf16.mxu0 0
    %4492 = vmatpush1.bf16.msra.mxu0 %v4434
    %4493 = vmatprep.subr.bf16.mxu0 0
    %4494 = vmatpush1.bf16.msra.mxu0 %v4435
    %4495 = vmatprep.subr.bf16.mxu0 0
    %4496 = vmatpush1.bf16.msra.mxu0 %v4436
    %4497 = vmatprep.subr.bf16.mxu0 0
    %4498 = vmatpush1.bf16.msra.mxu0 %v4437
    %4499 = vmatprep.subr.bf16.mxu0 0
    %4500 = vmatpush1.bf16.msra.mxu0 %v4438
    %4501 = vmatprep.subr.bf16.mxu0 0
    %4502 = vmatpush1.bf16.msra.mxu0 %v4439
    %4503 = vmatprep.subr.bf16.mxu0 0
    %4504 = vmatpush1.bf16.msra.mxu0 %v4440
    %4505 = vmatprep.mubr.bf16.mxu0 %v4233
    %4506 = vmatmul.mubr.bf16.gmra.mrb[0].mxu0 %v4232
    %v4507 = vpop.f32.mrb[0].mxu0
    %v4508 = vadd.f32 0.0, %v4507
    %v4509 = vpop.f32.mrb[0].mxu0
    %v4510 = vpop.f32.mrb[0].mxu0
    %v4511 = vadd.f32 0.0, %v4510
    %v4512 = vpop.f32.mrb[0].mxu0
    %4513 = vmatprep.mubr.bf16.mxu0 %v4236
    %4514 = vmatmul.mubr.bf16.gmra.mrb[0].mxu0 %v4235
    %v4515 = vpop.f32.mrb[0].mxu0
    %v4516 = vadd.f32 0.0, %v4515
    %v4517 = vpop.f32.mrb[0].mxu0
    %v4518 = vpop.f32.mrb[0].mxu0
    %v4519 = vadd.f32 0.0, %v4518
    %v4520 = vpop.f32.mrb[0].mxu0
    %4521 = vmatprep.mubr.bf16.mxu0 %v4239
    %4522 = vmatmul.mubr.bf16.gmra.mrb[0].mxu0 %v4238
    %v4523 = vpop.f32.mrb[0].mxu0
    %v4524 = vadd.f32 0.0, %v4523
    %v4525 = vpop.f32.mrb[0].mxu0
    %v4526 = vpop.f32.mrb[0].mxu0
    %v4527 = vadd.f32 0.0, %v4526
    %v4528 = vpop.f32.mrb[0].mxu0
    %4529 = vmatprep.mubr.bf16.mxu0 %v4242
    %4530 = vmatmul.mubr.bf16.gmra.mrb[0].mxu0 %v4241
    %v4531 = vpop.f32.mrb[0].mxu0
    %v4532 = vadd.f32 0.0, %v4531
    %v4533 = vpop.f32.mrb[0].mxu0
    %v4534 = vpop.f32.mrb[0].mxu0
    %v4535 = vadd.f32 0.0, %v4534
    %v4536 = vpop.f32.mrb[0].mxu0
    %4537 = vmatprep.mubr.bf16.mxu0 %v4245
    %4538 = vmatmul.mubr.bf16.gmra.mrb[0].mxu0 %v4244
    %v4539 = vpop.f32.mrb[0].mxu0
    %v4540 = vadd.f32 0.0, %v4539
    %v4541 = vpop.f32.mrb[0].mxu0
    %v4542 = vpop.f32.mrb[0].mxu0
    %v4543 = vadd.f32 0.0, %v4542
    %v4544 = vpop.f32.mrb[0].mxu0
    %4545 = vmatprep.mubr.bf16.mxu0 %v4248
    %4546 = vmatmul.mubr.bf16.gmra.mrb[0].mxu0 %v4247
    %v4547 = vpop.f32.mrb[0].mxu0
    %v4548 = vadd.f32 0.0, %v4547
    %v4549 = vpop.f32.mrb[0].mxu0
    %v4550 = vpop.f32.mrb[0].mxu0
    %v4551 = vadd.f32 0.0, %v4550
    %v4552 = vpop.f32.mrb[0].mxu0
    %4553 = vmatprep.mubr.bf16.mxu0 %v4251
    %4554 = vmatmul.mubr.bf16.gmra.mrb[0].mxu0 %v4250
    %v4555 = vpop.f32.mrb[0].mxu0
    %v4556 = vadd.f32 0.0, %v4555
    %v4557 = vpop.f32.mrb[0].mxu0
    %v4558 = vpop.f32.mrb[0].mxu0
    %v4559 = vadd.f32 0.0, %v4558
    %v4560 = vpop.f32.mrb[0].mxu0
    %4561 = vmatprep.mubr.bf16.mxu0 %v4254
    %4562 = vmatmul.mubr.bf16.gmra.mrb[0].mxu0 %v4253
    %v4563 = vpop.f32.mrb[0].mxu0
    %v4564 = vadd.f32 0.0, %v4563
    %v4565 = vpop.f32.mrb[0].mxu0
    %v4566 = vpop.f32.mrb[0].mxu0
    %v4567 = vadd.f32 0.0, %v4566
    %v4568 = vpop.f32.mrb[0].mxu0
    %4569 = vmatprep.mubr.bf16.mxu0 %v4257
    %4570 = vmatmul.mubr.bf16.gmra.mrb[0].mxu0 %v4256
    %v4571 = vpop.f32.mrb[0].mxu0
    %v4572 = vadd.f32 0.0, %v4571
    %v4573 = vpop.f32.mrb[0].mxu0
    %v4574 = vpop.f32.mrb[0].mxu0
    %v4575 = vadd.f32 0.0, %v4574
    %v4576 = vpop.f32.mrb[0].mxu0
    %4577 = vmatprep.mubr.bf16.mxu0 %v4260
    %4578 = vmatmul.mubr.bf16.gmra.mrb[0].mxu0 %v4259
    %v4579 = vpop.f32.mrb[0].mxu0
    %v4580 = vadd.f32 0.0, %v4579
    %v4581 = vpop.f32.mrb[0].mxu0
    %v4582 = vpop.f32.mrb[0].mxu0
    %v4583 = vadd.f32 0.0, %v4582
    %v4584 = vpop.f32.mrb[0].mxu0
    %4585 = vmatprep.mubr.bf16.mxu0 %v4263
    %4586 = vmatmul.mubr.bf16.gmra.mrb[0].mxu0 %v4262
    %v4587 = vpop.f32.mrb[0].mxu0
    %v4588 = vadd.f32 0.0, %v4587
    %v4589 = vpop.f32.mrb[0].mxu0
    %v4590 = vpop.f32.mrb[0].mxu0
    %v4591 = vadd.f32 0.0, %v4590
    %v4592 = vpop.f32.mrb[0].mxu0
    %4593 = vmatprep.mubr.bf16.mxu0 %v4266
    %4594 = vmatmul.mubr.bf16.gmra.mrb[0].mxu0 %v4265
    %v4595 = vpop.f32.mrb[0].mxu0
    %v4596 = vadd.f32 0.0, %v4595
    %v4597 = vpop.f32.mrb[0].mxu0
    %v4598 = vpop.f32.mrb[0].mxu0
    %v4599 = vadd.f32 0.0, %v4598
    %v4600 = vpop.f32.mrb[0].mxu0
    %4601 = vmatprep.mubr.bf16.mxu0 %v4269
    %4602 = vmatmul.mubr.bf16.gmra.mrb[0].mxu0 %v4268
    %v4603 = vpop.f32.mrb[0].mxu0
    %v4604 = vadd.f32 0.0, %v4603
    %v4605 = vpop.f32.mrb[0].mxu0
    %v4606 = vpop.f32.mrb[0].mxu0
    %v4607 = vadd.f32 0.0, %v4606
    %v4608 = vpop.f32.mrb[0].mxu0
    %4609 = vmatprep.mubr.bf16.mxu0 %v4272
    %4610 = vmatmul.mubr.bf16.gmra.mrb[0].mxu0 %v4271
    %v4611 = vpop.f32.mrb[0].mxu0
    %v4612 = vadd.f32 0.0, %v4611
    %v4613 = vpop.f32.mrb[0].mxu0
    %v4614 = vpop.f32.mrb[0].mxu0
    %v4615 = vadd.f32 0.0, %v4614
    %v4616 = vpop.f32.mrb[0].mxu0
    %4617 = vmatprep.mubr.bf16.mxu0 %v4275
    %4618 = vmatmul.mubr.bf16.gmra.mrb[0].mxu0 %v4274
    %v4619 = vpop.f32.mrb[0].mxu0
    %v4620 = vadd.f32 0.0, %v4619
    %v4621 = vpop.f32.mrb[0].mxu0
    %v4622 = vpop.f32.mrb[0].mxu0
    %v4623 = vadd.f32 0.0, %v4622
    %v4624 = vpop.f32.mrb[0].mxu0
    %4625 = vmatprep.mubr.bf16.mxu0 %v4278
    %4626 = vmatmul.mubr.bf16.gmra.mrb[0].mxu0 %v4277
    %v4627 = vpop.f32.mrb[0].mxu0
    %v4628 = vadd.f32 0.0, %v4627
    %v4629 = vpop.f32.mrb[0].mxu0
    %v4630 = vpop.f32.mrb[0].mxu0
    %v4631 = vadd.f32 0.0, %v4630
    %v4632 = vpop.f32.mrb[0].mxu0
    %4633 = vdwg.mxu0
    %4634 = vmatprep.subr.bf16.mxu0 0
    %4635 = vmatpush1.bf16.msra.mxu0 %v4441
    %4636 = vmatprep.subr.bf16.mxu0 0
    %4637 = vmatpush1.bf16.msra.mxu0 %v4442
    %4638 = vmatprep.subr.bf16.mxu0 0
    %4639 = vmatpush1.bf16.msra.mxu0 %v4443
    %4640 = vmatprep.subr.bf16.mxu0 0
    %4641 = vmatpush1.bf16.msra.mxu0 %v4444
    %4642 = vmatprep.subr.bf16.mxu0 0
    %4643 = vmatpush1.bf16.msra.mxu0 %v4445
    %4644 = vmatprep.subr.bf16.mxu0 0
    %4645 = vmatpush1.bf16.msra.mxu0 %v4446
    %4646 = vmatprep.subr.bf16.mxu0 0
    %4647 = vmatpush1.bf16.msra.mxu0 %v4447
    %4648 = vmatprep.subr.bf16.mxu0 0
    %4649 = vmatpush1.bf16.msra.mxu0 %v4448
    %4650 = vmatprep.subr.bf16.mxu0 0
    %4651 = vmatpush1.bf16.msra.mxu0 0
    %4652 = vmatprep.subr.bf16.mxu0 0
    %4653 = vmatpush1.bf16.msra.mxu0 0
    %4654 = vmatprep.subr.bf16.mxu0 0
    %4655 = vmatpush1.bf16.msra.mxu0 0
    %4656 = vmatprep.subr.bf16.mxu0 0
    %4657 = vmatpush1.bf16.msra.mxu0 0
    %4658 = vmatprep.subr.bf16.mxu0 0
    %4659 = vmatpush1.bf16.msra.mxu0 0
    %4660 = vmatprep.subr.bf16.mxu0 0
    %4661 = vmatpush1.bf16.msra.mxu0 0
    %4662 = vmatprep.subr.bf16.mxu0 0
    %4663 = vmatpush1.bf16.msra.mxu0 0
    %4664 = vmatprep.subr.bf16.mxu0 0
    %4665 = vmatpush1.bf16.msra.mxu0 0
    %4666 = vmatprep.mubr.bf16.mxu0 0
    %4667 = vmatmul.mubr.bf16.gmra.mrb[0].mxu0 %v4234
    %v4668 = vpop.f32.mrb[0].mxu0
    %v4669 = vadd.f32 %v4508, %v4668
    %v4670 = vpop.f32.mrb[0].mxu0
    %v4671 = vpop.f32.mrb[0].mxu0
    %v4672 = vadd.f32 %v4511, %v4671
    %v4673 = vpop.f32.mrb[0].mxu0
    %4674 = vmatprep.mubr.bf16.mxu0 0
    %4675 = vmatmul.mubr.bf16.gmra.mrb[0].mxu0 %v4237
    %v4676 = vpop.f32.mrb[0].mxu0
    %v4677 = vadd.f32 %v4516, %v4676
    %v4678 = vpop.f32.mrb[0].mxu0
    %v4679 = vpop.f32.mrb[0].mxu0
    %v4680 = vadd.f32 %v4519, %v4679
    %v4681 = vpop.f32.mrb[0].mxu0
    %4682 = vmatprep.mubr.bf16.mxu0 0
    %4683 = vmatmul.mubr.bf16.gmra.mrb[0].mxu0 %v4240
    %v4684 = vpop.f32.mrb[0].mxu0
    %v4685 = vadd.f32 %v4524, %v4684
    %v4686 = vpop.f32.mrb[0].mxu0
    %v4687 = vpop.f32.mrb[0].mxu0
    %v4688 = vadd.f32 %v4527, %v4687
    %v4689 = vpop.f32.mrb[0].mxu0
    %4690 = vmatprep.mubr.bf16.mxu0 0
    %4691 = vmatmul.mubr.bf16.gmra.mrb[0].mxu0 %v4243
    %v4692 = vpop.f32.mrb[0].mxu0
    %v4693 = vadd.f32 %v4532, %v4692
    %v4694 = vpop.f32.mrb[0].mxu0
    %v4695 = vpop.f32.mrb[0].mxu0
    %v4696 = vadd.f32 %v4535, %v4695
    %v4697 = vpop.f32.mrb[0].mxu0
    %4698 = vmatprep.mubr.bf16.mxu0 0
    %4699 = vmatmul.mubr.bf16.gmra.mrb[0].mxu0 %v4246
    %v4700 = vpop.f32.mrb[0].mxu0
    %v4701 = vadd.f32 %v4540, %v4700
    %v4702 = vpop.f32.mrb[0].mxu0
    %v4703 = vpop.f32.mrb[0].mxu0
    %v4704 = vadd.f32 %v4543, %v4703
    %v4705 = vpop.f32.mrb[0].mxu0
    %4706 = vmatprep.mubr.bf16.mxu0 0
    %4707 = vmatmul.mubr.bf16.gmra.mrb[0].mxu0 %v4249
    %v4708 = vpop.f32.mrb[0].mxu0
    %v4709 = vadd.f32 %v4548, %v4708
    %v4710 = vpop.f32.mrb[0].mxu0
    %v4711 = vpop.f32.mrb[0].mxu0
    %v4712 = vadd.f32 %v4551, %v4711
    %v4713 = vpop.f32.mrb[0].mxu0
    %4714 = vmatprep.mubr.bf16.mxu0 0
    %4715 = vmatmul.mubr.bf16.gmra.mrb[0].mxu0 %v4252
    %v4716 = vpop.f32.mrb[0].mxu0
    %v4717 = vadd.f32 %v4556, %v4716
    %v4718 = vpop.f32.mrb[0].mxu0
    %v4719 = vpop.f32.mrb[0].mxu0
    %v4720 = vadd.f32 %v4559, %v4719
    %v4721 = vpop.f32.mrb[0].mxu0
    %4722 = vmatprep.mubr.bf16.mxu0 0
    %4723 = vmatmul.mubr.bf16.gmra.mrb[0].mxu0 %v4255
    %v4724 = vpop.f32.mrb[0].mxu0
    %v4725 = vadd.f32 %v4564, %v4724
    %v4726 = vpop.f32.mrb[0].mxu0
    %v4727 = vpop.f32.mrb[0].mxu0
    %v4728 = vadd.f32 %v4567, %v4727
    %v4729 = vpop.f32.mrb[0].mxu0
    %4730 = vmatprep.mubr.bf16.mxu0 0
    %4731 = vmatmul.mubr.bf16.gmra.mrb[0].mxu0 %v4258
    %v4732 = vpop.f32.mrb[0].mxu0
    %v4733 = vadd.f32 %v4572, %v4732
    %v4734 = vpop.f32.mrb[0].mxu0
    %v4735 = vpop.f32.mrb[0].mxu0
    %v4736 = vadd.f32 %v4575, %v4735
    %v4737 = vpop.f32.mrb[0].mxu0
    %4738 = vmatprep.mubr.bf16.mxu0 0
    %4739 = vmatmul.mubr.bf16.gmra.mrb[0].mxu0 %v4261
    %v4740 = vpop.f32.mrb[0].mxu0
    %v4741 = vadd.f32 %v4580, %v4740
    %v4742 = vpop.f32.mrb[0].mxu0
    %v4743 = vpop.f32.mrb[0].mxu0
    %v4744 = vadd.f32 %v4583, %v4743
    %v4745 = vpop.f32.mrb[0].mxu0
    %4746 = vmatprep.mubr.bf16.mxu0 0
    %4747 = vmatmul.mubr.bf16.gmra.mrb[0].mxu0 %v4264
    %v4748 = vpop.f32.mrb[0].mxu0
    %v4749 = vadd.f32 %v4588, %v4748
    %v4750 = vpop.f32.mrb[0].mxu0
    %v4751 = vpop.f32.mrb[0].mxu0
    %v4752 = vadd.f32 %v4591, %v4751
    %v4753 = vpop.f32.mrb[0].mxu0
    %4754 = vmatprep.mubr.bf16.mxu0 0
    %4755 = vmatmul.mubr.bf16.gmra.mrb[0].mxu0 %v4267
    %v4756 = vpop.f32.mrb[0].mxu0
    %v4757 = vadd.f32 %v4596, %v4756
    %v4758 = vpop.f32.mrb[0].mxu0
    %v4759 = vpop.f32.mrb[0].mxu0
    %v4760 = vadd.f32 %v4599, %v4759
    %v4761 = vpop.f32.mrb[0].mxu0
    %4762 = vmatprep.mubr.bf16.mxu0 0
    %4763 = vmatmul.mubr.bf16.gmra.mrb[0].mxu0 %v4270
    %v4764 = vpop.f32.mrb[0].mxu0
    %v4765 = vadd.f32 %v4604, %v4764
    %v4766 = vpop.f32.mrb[0].mxu0
    %v4767 = vpop.f32.mrb[0].mxu0
    %v4768 = vadd.f32 %v4607, %v4767
    %v4769 = vpop.f32.mrb[0].mxu0
    %4770 = vmatprep.mubr.bf16.mxu0 0
    %4771 = vmatmul.mubr.bf16.gmra.mrb[0].mxu0 %v4273
    %v4772 = vpop.f32.mrb[0].mxu0
    %v4773 = vadd.f32 %v4612, %v4772
    %v4774 = vpop.f32.mrb[0].mxu0
    %v4775 = vpop.f32.mrb[0].mxu0
    %v4776 = vadd.f32 %v4615, %v4775
    %v4777 = vpop.f32.mrb[0].mxu0
    %4778 = vmatprep.mubr.bf16.mxu0 0
    %4779 = vmatmul.mubr.bf16.gmra.mrb[0].mxu0 %v4276
    %v4780 = vpop.f32.mrb[0].mxu0
    %v4781 = vadd.f32 %v4620, %v4780
    %v4782 = vpop.f32.mrb[0].mxu0
    %v4783 = vpop.f32.mrb[0].mxu0
    %v4784 = vadd.f32 %v4623, %v4783
    %v4785 = vpop.f32.mrb[0].mxu0
    %4786 = vmatprep.mubr.bf16.mxu0 0
    %4787 = vmatmul.mubr.bf16.gmra.mrb[0].mxu0 %v4279
    %v4788 = vpop.f32.mrb[0].mxu0
    %v4789 = vadd.f32 %v4628, %v4788
    %v4790 = vpop.f32.mrb[0].mxu0
    %v4791 = vpop.f32.mrb[0].mxu0
    %v4792 = vadd.f32 %v4631, %v4791
    %v4793 = vpop.f32.mrb[0].mxu0
    %4794 = vdwg.mxu0
    %v4795 = vadd.f32 %v4105, %v4669
    %v4796 = vadd.f32 %v4108, %v4672
    %v4797 = vadd.f32 %v4113, %v4677
    %v4798 = vadd.f32 %v4116, %v4680
    %v4799 = vadd.f32 %v4121, %v4685
    %v4800 = vadd.f32 %v4124, %v4688
    %v4801 = vadd.f32 %v4129, %v4693
    %v4802 = vadd.f32 %v4132, %v4696
    %v4803 = vadd.f32 %v4137, %v4701
    %v4804 = vadd.f32 %v4140, %v4704
    %v4805 = vadd.f32 %v4145, %v4709
    %v4806 = vadd.f32 %v4148, %v4712
    %v4807 = vadd.f32 %v4153, %v4717
    %v4808 = vadd.f32 %v4156, %v4720
    %v4809 = vadd.f32 %v4161, %v4725
    %v4810 = vadd.f32 %v4164, %v4728
    %v4811 = vadd.f32 %v4169, %v4733
    %v4812 = vadd.f32 %v4172, %v4736
    %v4813 = vadd.f32 %v4177, %v4741
    %v4814 = vadd.f32 %v4180, %v4744
    %v4815 = vadd.f32 %v4185, %v4749
    %v4816 = vadd.f32 %v4188, %v4752
    %v4817 = vadd.f32 %v4193, %v4757
    %v4818 = vadd.f32 %v4196, %v4760
    %v4819 = vadd.f32 %v4201, %v4765
    %v4820 = vadd.f32 %v4204, %v4768
    %v4821 = vadd.f32 %v4209, %v4773
    %v4822 = vadd.f32 %v4212, %v4776
    %v4823 = vadd.f32 %v4217, %v4781
    %v4824 = vadd.f32 %v4220, %v4784
    %v4825 = vadd.f32 %v4225, %v4789
    %v4826 = vadd.f32 %v4228, %v4792
    %s4827 = scalar_lea.vmem [#allocation6], 16
    %v4828 = vld [vmem:[%s4827] sm:$0x1]
    %v4830 = vlaneseq
    %v4831 = vshrl.u32 %v4830, 7
    %v4832 = vsub.s32 0, %v4831
    %v4833 = vrot.slane %v4828, %v4832
    %v4835 = vmul.f32 %v4795, %v4833
    %v4836 = vmul.f32 %v4796, %v4833
    %v4837 = vmul.f32 %v4797, %v4833
    %v4838 = vmul.f32 %v4798, %v4833
    %v4839 = vmul.f32 %v4799, %v4833
    %v4840 = vmul.f32 %v4800, %v4833
    %v4841 = vmul.f32 %v4801, %v4833
    %v4842 = vmul.f32 %v4802, %v4833
    %v4843 = vmul.f32 %v4803, %v4833
    %v4844 = vmul.f32 %v4804, %v4833
    %v4845 = vmul.f32 %v4805, %v4833
    %v4846 = vmul.f32 %v4806, %v4833
    %v4847 = vmul.f32 %v4807, %v4833
    %v4848 = vmul.f32 %v4808, %v4833
    %v4849 = vmul.f32 %v4809, %v4833
    %v4850 = vmul.f32 %v4810, %v4833
    %v4851 = vmul.f32 %v4811, %v4833
    %v4852 = vmul.f32 %v4812, %v4833
    %v4853 = vmul.f32 %v4813, %v4833
    %v4854 = vmul.f32 %v4814, %v4833
    %v4855 = vmul.f32 %v4815, %v4833
    %v4856 = vmul.f32 %v4816, %v4833
    %v4857 = vmul.f32 %v4817, %v4833
    %v4858 = vmul.f32 %v4818, %v4833
    %v4859 = vmul.f32 %v4819, %v4833
    %v4860 = vmul.f32 %v4820, %v4833
    %v4861 = vmul.f32 %v4821, %v4833
    %v4862 = vmul.f32 %v4822, %v4833
    %v4863 = vmul.f32 %v4823, %v4833
    %v4864 = vmul.f32 %v4824, %v4833
    %v4865 = vmul.f32 %v4825, %v4833
    %v4866 = vmul.f32 %v4826, %v4833
    %s4867 = scalar_lea.vmem [#allocation8], 16
    %v4868 = vld [vmem:[%s4867] sm:$0x1]
    %v4870 = vlaneseq
    %v4871 = vshrl.u32 %v4870, 7
    %v4872 = vsub.s32 0, %v4871
    %v4873 = vrot.slane %v4868, %v4872
    %v4875 = vadd.f32 %v4835, %v4873
    %v4876 = vadd.f32 %v4836, %v4873
    %v4877 = vadd.f32 %v4837, %v4873
    %v4878 = vadd.f32 %v4838, %v4873
    %v4879 = vadd.f32 %v4839, %v4873
    %v4880 = vadd.f32 %v4840, %v4873
    %v4881 = vadd.f32 %v4841, %v4873
    %v4882 = vadd.f32 %v4842, %v4873
    %v4883 = vadd.f32 %v4843, %v4873
    %v4884 = vadd.f32 %v4844, %v4873
    %v4885 = vadd.f32 %v4845, %v4873
    %v4886 = vadd.f32 %v4846, %v4873
    %v4887 = vadd.f32 %v4847, %v4873
    %v4888 = vadd.f32 %v4848, %v4873
    %v4889 = vadd.f32 %v4849, %v4873
    %v4890 = vadd.f32 %v4850, %v4873
    %v4891 = vadd.f32 %v4851, %v4873
    %v4892 = vadd.f32 %v4852, %v4873
    %v4893 = vadd.f32 %v4853, %v4873
    %v4894 = vadd.f32 %v4854, %v4873
    %v4895 = vadd.f32 %v4855, %v4873
    %v4896 = vadd.f32 %v4856, %v4873
    %v4897 = vadd.f32 %v4857, %v4873
    %v4898 = vadd.f32 %v4858, %v4873
    %v4899 = vadd.f32 %v4859, %v4873
    %v4900 = vadd.f32 %v4860, %v4873
    %v4901 = vadd.f32 %v4861, %v4873
    %v4902 = vadd.f32 %v4862, %v4873
    %v4903 = vadd.f32 %v4863, %v4873
    %v4904 = vadd.f32 %v4864, %v4873
    %v4905 = vadd.f32 %v4865, %v4873
    %v4906 = vadd.f32 %v4866, %v4873
    %4907 = vst [vmem:[%s4] sm:$0xff] %v4875
    %4908 = vst [vmem:[%s4 + $0x8] sm:$0xff] %v4876
    %4909 = vst [vmem:[%s4 + $0x10] sm:$0xff] %v4877
    %4910 = vst [vmem:[%s4 + $0x18] sm:$0xff] %v4878
    %4911 = vst [vmem:[%s4 + $0x20] sm:$0xff] %v4879
    %4912 = vst [vmem:[%s4 + $0x28] sm:$0xff] %v4880
    %4913 = vst [vmem:[%s4 + $0x30] sm:$0xff] %v4881
    %4914 = vst [vmem:[%s4 + $0x38] sm:$0xff] %v4882
    %4915 = vst [vmem:[%s4 + $0x40] sm:$0xff] %v4883
    %4916 = vst [vmem:[%s4 + $0x48] sm:$0xff] %v4884
    %4917 = vst [vmem:[%s4 + $0x50] sm:$0xff] %v4885
    %4918 = vst [vmem:[%s4 + $0x58] sm:$0xff] %v4886
    %4919 = vst [vmem:[%s4 + $0x60] sm:$0xff] %v4887
    %4920 = vst [vmem:[%s4 + $0x68] sm:$0xff] %v4888
    %4921 = vst [vmem:[%s4 + $0x70] sm:$0xff] %v4889
    %4922 = vst [vmem:[%s4 + $0x78] sm:$0xff] %v4890
    %4923 = vst [vmem:[%s4 + $0x80] sm:$0xff] %v4891
    %4924 = vst [vmem:[%s4 + $0x88] sm:$0xff] %v4892
    %4925 = vst [vmem:[%s4 + $0x90] sm:$0xff] %v4893
    %4926 = vst [vmem:[%s4 + $0x98] sm:$0xff] %v4894
    %4927 = vst [vmem:[%s4 + $0xa0] sm:$0xff] %v4895
    %4928 = vst [vmem:[%s4 + $0xa8] sm:$0xff] %v4896
    %4929 = vst [vmem:[%s4 + $0xb0] sm:$0xff] %v4897
    %4930 = vst [vmem:[%s4 + $0xb8] sm:$0xff] %v4898
    %4931 = vst [vmem:[%s4 + $0xc0] sm:$0xff] %v4899
    %4932 = vst [vmem:[%s4 + $0xc8] sm:$0xff] %v4900
    %4933 = vst [vmem:[%s4 + $0xd0] sm:$0xff] %v4901
    %4934 = vst [vmem:[%s4 + $0xd8] sm:$0xff] %v4902
    %4935 = vst [vmem:[%s4 + $0xe0] sm:$0xff] %v4903
    %4936 = vst [vmem:[%s4 + $0xe8] sm:$0xff] %v4904
    %4937 = vst [vmem:[%s4 + $0xf0] sm:$0xff] %v4905
    %4938 = vst [vmem:[%s4 + $0xf8] sm:$0xff] %v4906
    // Predicated region
    $region37: #{_lambda_.1} parent=1 // pred_check
      _
    $region38: #{_lambda_.1} parent=1 // pred_check_branch
      %4940 = sbr.rel (0) target = $region40
    $region39: #{_lambda_.1} parent=1 // pred_region
      _
    $region40: #{_lambda_.1} parent=1 // pred_fallthru
      _
    // Predicated region
    $region41: #{_lambda_.1} parent=1 // pred_check
      _
    $region42: #{_lambda_.1} parent=1 // pred_check_branch
      %4942 = sbr.rel (0) target = $region44
    $region43: #{_lambda_.1} parent=1 // pred_region
      _
    $region44: #{_lambda_.1} parent=1 // pred_fallthru
      _
    %4943 = vsyncpa [#allocation5], 1
    %4944 = vsyncpa [#allocation7], 1

</llo_original>
